<compile_context>
chip_gen: v7x
topology: tpu7x:2x2x1
jax: 0.10.0
libtpu: 0.0.40
codegen_flags: <defaults>
</compile_context>

<pallas_src>
import functools

import jax
import jax.numpy as jnp
from jax import lax
from jax.experimental import pallas as pl
from jax.experimental.pallas import tpu as pltpu


def _round_up(x, m):
    return (x + m - 1) // m * m


def _split_bf16(x_f32):
    """Split f32 into bf16 (hi, lo) with hi + lo ~= x to ~16 mantissa bits."""
    hi = x_f32.astype(jnp.bfloat16)
    lo = (x_f32 - hi.astype(jnp.float32)).astype(jnp.bfloat16)
    return hi, lo


# ----------------------------------------------------------------------------
# Fused Pallas kernel: block-diagonal grouped-conv matmul (MXU, f32-accurate
# 3-pass bf16) + dynamic routing (VPU/EUP), one lane-dense P tile per grid
# step.  pred never leaves VMEM.
# ----------------------------------------------------------------------------
def _caps_conv_routing_kernel(p_hi_ref, p_lo_ref, w_hi_ref, w_lo_ref, bias_ref,
                              out_ref, *, nin, nout, dout, num_iter):
    tp = p_hi_ref.shape[-1]
    npair = nin * nout

    # ---- grouped conv: one block-diagonal MXU matmul, f32-accurate --------
    x_hi = p_hi_ref[...]                    # (nin*K, tp) bf16
    x_lo = p_lo_ref[...]
    w_hi = w_hi_ref[...]                    # (nin*nout*dout, nin*K) bf16 block-diag
    w_lo = w_lo_ref[...]
    pred = jnp.dot(w_hi, x_hi, preferred_element_type=jnp.float32)
    pred = pred + jnp.dot(w_hi, x_lo, preferred_element_type=jnp.float32)
    pred = pred + jnp.dot(w_lo, x_hi, preferred_element_type=jnp.float32)
    # pred rows are ordered ((g*nout + j)*dout + d); slice one (dout, tp) slab
    # per (in_caps, out_caps) pair -- slices are 8-sublane aligned (dout = 8).
    preds = [pred[p * dout:(p + 1) * dout, :] for p in range(npair)]

    def squash(v):                          # v: (dout, tp) f32
        s = jnp.sum(v * v, axis=0, keepdims=True)           # (1, tp)
        scale = s * lax.rsqrt(s + 1e-16) * pl.reciprocal(1.0 + s)
        return v * scale

    def coupled_out(logits):
        # Softmax over the out-caps axis within each in-group, computed on
        # sublane-dense (npair, tp) tiles; per-pair coupling rows are only
        # broadcast over dout at the multiply with pred.
        m = jnp.concatenate(
            [jnp.broadcast_to(
                jnp.max(logits[g * nout:(g + 1) * nout], axis=0, keepdims=True),
                (nout, tp)) for g in range(nin)], axis=0)    # (npair, tp)
        e = jnp.exp(logits - m)                              # dense exp (EUP)
        d = jnp.concatenate(
            [jnp.broadcast_to(
                jnp.sum(e[g * nout:(g + 1) * nout], axis=0, keepdims=True),
                (nout, tp)) for g in range(nin)], axis=0)
        c = e * pl.reciprocal(d)                             # (npair, tp)
        o = []
        for j in range(nout):
            acc = c[j:j + 1, :] * preds[j]                   # g = 0 term
            for g in range(1, nin):
                p = g * nout + j
                acc = acc + c[p:p + 1, :] * preds[p]         # (dout, tp)
            o.append(squash(acc))
        return o

    if num_iter > 0:
        # Routing logits carry no dout copies (they are constant over it).
        logits = jnp.broadcast_to(bias_ref[...].astype(jnp.float32),
                                  (npair, tp))               # dense (npair, tp)
        for _ in range(num_iter):
            o = coupled_out(logits)
            agr = jnp.concatenate(
                [jnp.sum(o[p % nout] * preds[p], axis=0, keepdims=True)
                 for p in range(npair)], axis=0)             # (npair, tp) dense
            logits = logits + agr
        o = coupled_out(logits)
    else:
        o = []
        for j in range(nout):
            acc = preds[j]
            for g in range(1, nin):
                acc = acc + preds[g * nout + j]
            o.append(squash(acc))

    # TODO(synk): optional bf16-pred routing variant for v6e/v7x (kept f32 here
    # to preserve the 2e-3 accuracy budget vs the f32 reference).
    for j in range(nout):
        out_ref[j * dout:(j + 1) * dout, :] = o[j].astype(out_ref.dtype)


def caps_conv_routing(p_hi, p_lo, w_hi, w_lo, bias, nin, nout, dout, num_iter,
                      tile_p):
    # p_hi/p_lo: (nin*K, P_pad) bf16; w_hi/w_lo: (nin*nout*dout, nin*K) bf16
    # block-diagonal; bias: (nin*nout, 1) f32  ->  out: (nout*dout, P_pad) f32
    nk, p_pad = p_hi.shape
    mrows = w_hi.shape[0]
    orows = nout * dout
    assert p_pad % tile_p == 0
    grid = (p_pad // tile_p,)

    kernel = functools.partial(_caps_conv_routing_kernel, nin=nin, nout=nout,
                               dout=dout, num_iter=num_iter)

    return pl.pallas_call(
        kernel,
        out_shape=jax.ShapeDtypeStruct((orows, p_pad), jnp.float32),
        grid_spec=pltpu.PrefetchScalarGridSpec(
            num_scalar_prefetch=0,
            grid=grid,
            in_specs=[
                # Patch hi/lo halves: one lane-dense P tile per grid step.
                pl.BlockSpec((nk, tile_p), lambda i: (0, i)),
                pl.BlockSpec((nk, tile_p), lambda i: (0, i)),
                # Block-diagonal weights: tiny, constant block -> VMEM resident.
                pl.BlockSpec((mrows, nk), lambda i: (0, 0)),
                pl.BlockSpec((mrows, nk), lambda i: (0, 0)),
                # Routing bias (nin*nout scalars), constant block.
                pl.BlockSpec((nin * nout, 1), lambda i: (0, 0)),
            ],
            out_specs=pl.BlockSpec((orows, tile_p), lambda i: (0, i)),
        ),
        # P-tile axis is the long independent axis -> megacore on v7x.
        compiler_params=pltpu.CompilerParams(dimension_semantics=("parallel",)),
    )(p_hi, p_lo, w_hi, w_lo, bias)


# ----------------------------------------------------------------------------
# CapsConv2D module (JAX glue around the fused Pallas kernel).
# ----------------------------------------------------------------------------
class CapsConv2D:
    def __init__(self, in_caps_num, in_caps_dim, out_caps_num, out_caps_dim,
                 kernel_size, stride=1, padding=0, num_iter=3, tile_p=1024,
                 key=None):
        self.in_caps_num = in_caps_num
        self.in_caps_dim = in_caps_dim
        self.out_caps_num = out_caps_num
        self.out_caps_dim = out_caps_dim
        self.kernel_size = kernel_size
        self.stride = stride
        self.padding = padding
        self.num_iter = num_iter
        self.tile_p = tile_p

        # Conv2d(groups=in_caps_num, bias=False) weight:
        # (in_caps_num*out_caps_num*out_caps_dim, in_caps_dim, k, k)
        fan_in = in_caps_dim * kernel_size * kernel_size
        bound = 1.0 / float(fan_in) ** 0.5
        self.weight = jax.random.uniform(
            key,
            (in_caps_num * out_caps_num * out_caps_dim,
             in_caps_dim, kernel_size, kernel_size),
            jnp.float32, minval=-bound, maxval=bound)
        # Routing bias parameter, zero-initialized as in the PyTorch module.
        self.bias = jnp.zeros((1, in_caps_num, out_caps_num, 1, 1, 1),
                              jnp.float32)

    def __call__(self, in_caps):
        # in_caps: (B, in_caps_num, in_caps_dim, H, W)  (PyTorch convention)
        B, Nin, Din, H, W = in_caps.shape
        Nout, Dout = self.out_caps_num, self.out_caps_dim
        k, s, p = self.kernel_size, self.stride, self.padding
        Ho = (H + 2 * p - k) // s + 1
        Wo = (W + 2 * p - k) // s + 1
        P = B * Ho * Wo
        K = Din * k * k
        Cout = Nout * Dout

        # --- im2col (glue): group-major transpose FIRST (input-sized, 9x
        # cheaper than transposing expanded patches), then slice+stack so
        # patches land directly in (Nin*K, P) lane-dense order. ---
        # TODO(synk): replace with an in-kernel halo DMA gather (pl.ANY +
        # make_async_copy) to avoid the k*k patch expansion in HBM.
        xg = jnp.transpose(in_caps, (1, 2, 0, 3, 4))         # (Nin, Din, B, H, W)
        xg = jnp.pad(xg, ((0, 0), (0, 0), (0, 0), (p, p), (p, p)))
        cols = []
        for ky in range(k):
            for kx in range(k):
                cols.append(xg[:, :, :, ky:ky + s * Ho:s, kx:kx + s * Wo:s])
        patches = jnp.stack(cols, axis=2)                    # (Nin, Din, k*k, B, Ho, Wo)
        patches = patches.reshape(Nin * K, P)                # row = g*K + din*k*k + ky*k + kx

        # --- P tile: as large as tile_p, but keep >=4 grid steps when P
        # allows so the "parallel" axis splits evenly across v7x's 2 TCs. ---
        tp = min(self.tile_p, max(128, _round_up(pl.cdiv(P, 4), 128)))
        P_pad = _round_up(P, tp)
        patches = jnp.pad(patches, ((0, 0), (0, P_pad - P)))

        # f32-accurate bf16 hi/lo operand splits (done in glue so the kernel's
        # VALU stays free for the routing loop).
        p_hi, p_lo = _split_bf16(patches)

        # Grouped-conv weight folded into ONE block-diagonal matrix
        # (Nin*Cout, Nin*K) so the whole conv is a single full-M MXU matmul.
        w_g = self.weight.reshape(Nin, Cout, K)
        w_bd = jnp.zeros((Nin * Cout, Nin * K), jnp.float32)
        for g in range(Nin):
            w_bd = w_bd.at[g * Cout:(g + 1) * Cout,
                           g * K:(g + 1) * K].set(w_g[g])
        w_hi, w_lo = _split_bf16(w_bd)

        bias2 = self.bias.reshape(Nin * Nout, 1)

        # --- fused Pallas kernel: grouped conv matmul + dynamic routing ---
        out = caps_conv_routing(p_hi, p_lo, w_hi, w_lo, bias2, Nin, Nout, Dout,
                                self.num_iter, tp)           # (Nout*Dout, P_pad)

        # --- back to PyTorch convention (B, Nout, Dout, Ho, Wo) (glue) ---
        out = out[:, :P].reshape(Nout, Dout, B, Ho, Wo)
        return jnp.transpose(out, (2, 0, 1, 3, 4))


# ----------------------------------------------------------------------------
# Pure-JAX reference (mirrors the PyTorch forward, full f32) for verification.
# ----------------------------------------------------------------------------
def reference_forward(x, weight, bias6, Nin, Din, Nout, Dout, k, s, p, num_iter):
    B, _, _, H, W = x.shape
    x2 = x.reshape(B, Nin * Din, H, W)
    out = lax.conv_general_dilated(
        x2, weight, window_strides=(s, s), padding=[(p, p), (p, p)],
        dimension_numbers=("NCHW", "OIHW", "NCHW"),
        feature_group_count=Nin, precision=lax.Precision.HIGHEST)
    _, _, Ho, Wo = out.shape
    pred = out.reshape(B, Nin, Nout, Dout, Ho, Wo)

    def squash(v, axis):
        norm = jnp.sqrt(jnp.sum(v * v, axis=axis, keepdims=True))
        ns = norm * norm
        return v / (norm + 1e-8) * (ns / (1.0 + ns))

    if num_iter > 0:
        logits = jnp.broadcast_to(bias6, pred.shape)
        for _ in range(num_iter):
            c = jax.nn.softmax(logits, axis=2)
            o = jnp.sum(c * pred, axis=1, keepdims=True)
            o = squash(o, axis=3)
            a = jnp.sum(o * pred, axis=3, keepdims=True)
            logits = logits + a
        c = jax.nn.softmax(logits, axis=2)
        o = jnp.sum(c * pred, axis=1)
        o = squash(o, axis=2)
    else:
        o = jnp.sum(pred, axis=1)
        o = squash(o, axis=2)
    return o


if __name__ == "__main__":
    key = jax.random.PRNGKey(0)
    kx, kw = jax.random.split(key)

    # Small but representative shapes; P = 2*20*20 = 800 exercises the padded
    # multi-tile path (tp = 256 -> P_pad = 1024, 4 "parallel" grid steps).
    B, Nin, Din, Nout, Dout = 2, 4, 8, 4, 8
    H = W = 20
    k, s, p, num_iter = 3, 1, 1, 3

    x = jax.random.normal(kx, (B, Nin, Din, H, W), jnp.float32)

    module = CapsConv2D(Nin, Din, Nout, Dout, kernel_size=k, stride=s,
                        padding=p, num_iter=num_iter, key=kw)

    out = jax.block_until_ready(module(x))
    assert out.shape == (B, Nout, Dout, H, W), out.shape

    ref = jax.block_until_ready(
        reference_forward(x, module.weight, module.bias,
                          Nin, Din, Nout, Dout, k, s, p, num_iter))
    max_err = float(jnp.max(jnp.abs(out - ref)))
    # 3-pass bf16 hi/lo MXU matmul (f32-accurate) + exact EUP reciprocals:
    # expected deviation vs the full-f32 reference is ~1e-5; 2e-3 is generous.
    assert max_err < 2e-3, f"mismatch vs reference, max_err={max_err}"

    print("KERNEL_OK")
</pallas_src>

<mosaic_0001>
module attributes {stable_mosaic.version = 11 : i64} {
  func.func @_caps_conv_routing_kernel(%arg0: i32, %arg1: memref<288x256xbf16, #tpu.memory_space<vmem>>, %arg2: memref<288x256xbf16, #tpu.memory_space<vmem>>, %arg3: memref<128x288xbf16, #tpu.memory_space<vmem>>, %arg4: memref<128x288xbf16, #tpu.memory_space<vmem>>, %arg5: memref<16x1xf32, #tpu.memory_space<vmem>>, %arg6: memref<32x256xf32, #tpu.memory_space<vmem>>) attributes {dimension_semantics = [#tpu.dimension_semantics<parallel>], iteration_bounds = array<i64: 4>, scalar_prefetch = 0 : i64, scratch_operands = 0 : i64, tpu.core_type = #tpu.core_type<tc>, window_params = [{transform_indices = @transform_0, window_bounds = array<i64: 288, 256>}, {transform_indices = @transform_1, window_bounds = array<i64: 288, 256>}, {pipeline_mode = #tpu.pipeline_mode<synchronous>, transform_indices = @transform_2, window_bounds = array<i64: 128, 288>}, {pipeline_mode = #tpu.pipeline_mode<synchronous>, transform_indices = @transform_3, window_bounds = array<i64: 128, 288>}, {pipeline_mode = #tpu.pipeline_mode<synchronous>, transform_indices = @transform_4, window_bounds = array<i64: 16, 1>}, {transform_indices = @transform_5, window_bounds = array<i64: 32, 256>}]} {
    %c0 = arith.constant 0 : index
    %c0_0 = arith.constant 0 : index
    %0 = vector.load %arg1[%c0, %c0_0] : memref<288x256xbf16, #tpu.memory_space<vmem>>, vector<288x256xbf16>
    %c0_1 = arith.constant 0 : index
    %c0_2 = arith.constant 0 : index
    %1 = vector.load %arg2[%c0_1, %c0_2] : memref<288x256xbf16, #tpu.memory_space<vmem>>, vector<288x256xbf16>
    %c0_3 = arith.constant 0 : index
    %c0_4 = arith.constant 0 : index
    %2 = vector.load %arg3[%c0_3, %c0_4] : memref<128x288xbf16, #tpu.memory_space<vmem>>, vector<128x288xbf16>
    %c0_5 = arith.constant 0 : index
    %c0_6 = arith.constant 0 : index
    %3 = vector.load %arg4[%c0_5, %c0_6] : memref<128x288xbf16, #tpu.memory_space<vmem>>, vector<128x288xbf16>
    %cst = arith.constant dense<0.000000e+00> : vector<128x256xf32>
    %4 = tpu.matmul %2, %0, %cst {dimension_numbers = #tpu.dot_dimension_numbers<[1], [0], [0], [1], [0, 0, 1, 1], [], []>} : vector<128x288xbf16>, vector<288x256xbf16>, vector<128x256xf32> -> vector<128x256xf32>
    %cst_7 = arith.constant dense<0.000000e+00> : vector<128x256xf32>
    %5 = tpu.matmul %2, %1, %cst_7 {dimension_numbers = #tpu.dot_dimension_numbers<[1], [0], [0], [1], [0, 0, 1, 1], [], []>} : vector<128x288xbf16>, vector<288x256xbf16>, vector<128x256xf32> -> vector<128x256xf32>
    %6 = arith.addf %4, %5 : vector<128x256xf32>
    %cst_8 = arith.constant dense<0.000000e+00> : vector<128x256xf32>
    %7 = tpu.matmul %3, %0, %cst_8 {dimension_numbers = #tpu.dot_dimension_numbers<[1], [0], [0], [1], [0, 0, 1, 1], [], []>} : vector<128x288xbf16>, vector<288x256xbf16>, vector<128x256xf32> -> vector<128x256xf32>
    %8 = arith.addf %6, %7 : vector<128x256xf32>
    %9 = vector.extract_strided_slice %8 {offsets = [0, 0], sizes = [8, 256], strides = [1, 1]} : vector<128x256xf32> to vector<8x256xf32>
    %10 = vector.extract_strided_slice %8 {offsets = [8, 0], sizes = [8, 256], strides = [1, 1]} : vector<128x256xf32> to vector<8x256xf32>
    %11 = vector.extract_strided_slice %8 {offsets = [16, 0], sizes = [8, 256], strides = [1, 1]} : vector<128x256xf32> to vector<8x256xf32>
    %12 = vector.extract_strided_slice %8 {offsets = [24, 0], sizes = [8, 256], strides = [1, 1]} : vector<128x256xf32> to vector<8x256xf32>
    %13 = vector.extract_strided_slice %8 {offsets = [32, 0], sizes = [8, 256], strides = [1, 1]} : vector<128x256xf32> to vector<8x256xf32>
    %14 = vector.extract_strided_slice %8 {offsets = [40, 0], sizes = [8, 256], strides = [1, 1]} : vector<128x256xf32> to vector<8x256xf32>
    %15 = vector.extract_strided_slice %8 {offsets = [48, 0], sizes = [8, 256], strides = [1, 1]} : vector<128x256xf32> to vector<8x256xf32>
    %16 = vector.extract_strided_slice %8 {offsets = [56, 0], sizes = [8, 256], strides = [1, 1]} : vector<128x256xf32> to vector<8x256xf32>
    %17 = vector.extract_strided_slice %8 {offsets = [64, 0], sizes = [8, 256], strides = [1, 1]} : vector<128x256xf32> to vector<8x256xf32>
    %18 = vector.extract_strided_slice %8 {offsets = [72, 0], sizes = [8, 256], strides = [1, 1]} : vector<128x256xf32> to vector<8x256xf32>
    %19 = vector.extract_strided_slice %8 {offsets = [80, 0], sizes = [8, 256], strides = [1, 1]} : vector<128x256xf32> to vector<8x256xf32>
    %20 = vector.extract_strided_slice %8 {offsets = [88, 0], sizes = [8, 256], strides = [1, 1]} : vector<128x256xf32> to vector<8x256xf32>
    %21 = vector.extract_strided_slice %8 {offsets = [96, 0], sizes = [8, 256], strides = [1, 1]} : vector<128x256xf32> to vector<8x256xf32>
    %22 = vector.extract_strided_slice %8 {offsets = [104, 0], sizes = [8, 256], strides = [1, 1]} : vector<128x256xf32> to vector<8x256xf32>
    %23 = vector.extract_strided_slice %8 {offsets = [112, 0], sizes = [8, 256], strides = [1, 1]} : vector<128x256xf32> to vector<8x256xf32>
    %24 = vector.extract_strided_slice %8 {offsets = [120, 0], sizes = [8, 256], strides = [1, 1]} : vector<128x256xf32> to vector<8x256xf32>
    %c0_9 = arith.constant 0 : index
    %c0_10 = arith.constant 0 : index
    %25 = vector.load %arg5[%c0_9, %c0_10] : memref<16x1xf32, #tpu.memory_space<vmem>>, vector<16x1xf32>
    %26 = vector.shape_cast %25 : vector<16x1xf32> to vector<16x1xf32>
    %27 = vector.broadcast %26 : vector<16x1xf32> to vector<16x256xf32>
    %28 = vector.extract_strided_slice %27 {offsets = [0, 0], sizes = [4, 256], strides = [1, 1]} : vector<16x256xf32> to vector<4x256xf32>
    %cst_11 = arith.constant dense<0xFF800000> : vector<256xf32>
    %29 = vector.multi_reduction <maximumf>, %28, %cst_11 [0] : vector<4x256xf32> to vector<256xf32>
    %30 = vector.shape_cast %29 : vector<256xf32> to vector<1x256xf32>
    %31 = vector.shape_cast %30 : vector<1x256xf32> to vector<1x256xf32>
    %32 = vector.broadcast %31 : vector<1x256xf32> to vector<4x256xf32>
    %33 = vector.extract_strided_slice %27 {offsets = [4, 0], sizes = [4, 256], strides = [1, 1]} : vector<16x256xf32> to vector<4x256xf32>
    %cst_12 = arith.constant dense<0xFF800000> : vector<256xf32>
    %34 = vector.multi_reduction <maximumf>, %33, %cst_12 [0] : vector<4x256xf32> to vector<256xf32>
    %35 = vector.shape_cast %34 : vector<256xf32> to vector<1x256xf32>
    %36 = vector.shape_cast %35 : vector<1x256xf32> to vector<1x256xf32>
    %37 = vector.broadcast %36 : vector<1x256xf32> to vector<4x256xf32>
    %38 = vector.extract_strided_slice %27 {offsets = [8, 0], sizes = [4, 256], strides = [1, 1]} : vector<16x256xf32> to vector<4x256xf32>
    %cst_13 = arith.constant dense<0xFF800000> : vector<256xf32>
    %39 = vector.multi_reduction <maximumf>, %38, %cst_13 [0] : vector<4x256xf32> to vector<256xf32>
    %40 = vector.shape_cast %39 : vector<256xf32> to vector<1x256xf32>
    %41 = vector.shape_cast %40 : vector<1x256xf32> to vector<1x256xf32>
    %42 = vector.broadcast %41 : vector<1x256xf32> to vector<4x256xf32>
    %43 = vector.extract_strided_slice %27 {offsets = [12, 0], sizes = [4, 256], strides = [1, 1]} : vector<16x256xf32> to vector<4x256xf32>
    %cst_14 = arith.constant dense<0xFF800000> : vector<256xf32>
    %44 = vector.multi_reduction <maximumf>, %43, %cst_14 [0] : vector<4x256xf32> to vector<256xf32>
    %45 = vector.shape_cast %44 : vector<256xf32> to vector<1x256xf32>
    %46 = vector.shape_cast %45 : vector<1x256xf32> to vector<1x256xf32>
    %47 = vector.broadcast %46 : vector<1x256xf32> to vector<4x256xf32>
    %48 = tpu.concatenate %32, %37, %42, %47 in 0 : vector<4x256xf32>, vector<4x256xf32>, vector<4x256xf32>, vector<4x256xf32> -> vector<16x256xf32>
    %49 = arith.subf %27, %48 : vector<16x256xf32>
    %50 = math.exp %49 : vector<16x256xf32>
    %51 = vector.extract_strided_slice %50 {offsets = [0, 0], sizes = [4, 256], strides = [1, 1]} : vector<16x256xf32> to vector<4x256xf32>
    %cst_15 = arith.constant dense<0.000000e+00> : vector<256xf32>
    %52 = vector.multi_reduction <add>, %51, %cst_15 [0] : vector<4x256xf32> to vector<256xf32>
    %53 = vector.shape_cast %52 : vector<256xf32> to vector<1x256xf32>
    %54 = vector.shape_cast %53 : vector<1x256xf32> to vector<1x256xf32>
    %55 = vector.broadcast %54 : vector<1x256xf32> to vector<4x256xf32>
    %56 = vector.extract_strided_slice %50 {offsets = [4, 0], sizes = [4, 256], strides = [1, 1]} : vector<16x256xf32> to vector<4x256xf32>
    %cst_16 = arith.constant dense<0.000000e+00> : vector<256xf32>
    %57 = vector.multi_reduction <add>, %56, %cst_16 [0] : vector<4x256xf32> to vector<256xf32>
    %58 = vector.shape_cast %57 : vector<256xf32> to vector<1x256xf32>
    %59 = vector.shape_cast %58 : vector<1x256xf32> to vector<1x256xf32>
    %60 = vector.broadcast %59 : vector<1x256xf32> to vector<4x256xf32>
    %61 = vector.extract_strided_slice %50 {offsets = [8, 0], sizes = [4, 256], strides = [1, 1]} : vector<16x256xf32> to vector<4x256xf32>
    %cst_17 = arith.constant dense<0.000000e+00> : vector<256xf32>
    %62 = vector.multi_reduction <add>, %61, %cst_17 [0] : vector<4x256xf32> to vector<256xf32>
    %63 = vector.shape_cast %62 : vector<256xf32> to vector<1x256xf32>
    %64 = vector.shape_cast %63 : vector<1x256xf32> to vector<1x256xf32>
    %65 = vector.broadcast %64 : vector<1x256xf32> to vector<4x256xf32>
    %66 = vector.extract_strided_slice %50 {offsets = [12, 0], sizes = [4, 256], strides = [1, 1]} : vector<16x256xf32> to vector<4x256xf32>
    %cst_18 = arith.constant dense<0.000000e+00> : vector<256xf32>
    %67 = vector.multi_reduction <add>, %66, %cst_18 [0] : vector<4x256xf32> to vector<256xf32>
    %68 = vector.shape_cast %67 : vector<256xf32> to vector<1x256xf32>
    %69 = vector.shape_cast %68 : vector<1x256xf32> to vector<1x256xf32>
    %70 = vector.broadcast %69 : vector<1x256xf32> to vector<4x256xf32>
    %71 = tpu.concatenate %55, %60, %65, %70 in 0 : vector<4x256xf32>, vector<4x256xf32>, vector<4x256xf32>, vector<4x256xf32> -> vector<16x256xf32>
    %72 = tpu.reciprocal %71 : vector<16x256xf32> -> vector<16x256xf32>
    %73 = arith.mulf %50, %72 : vector<16x256xf32>
    %74 = vector.extract_strided_slice %73 {offsets = [0, 0], sizes = [1, 256], strides = [1, 1]} : vector<16x256xf32> to vector<1x256xf32>
    %75 = vector.broadcast %74 : vector<1x256xf32> to vector<8x256xf32>
    %76 = arith.mulf %75, %9 : vector<8x256xf32>
    %77 = vector.extract_strided_slice %73 {offsets = [4, 0], sizes = [1, 256], strides = [1, 1]} : vector<16x256xf32> to vector<1x256xf32>
    %78 = vector.broadcast %77 : vector<1x256xf32> to vector<8x256xf32>
    %79 = arith.mulf %78, %13 : vector<8x256xf32>
    %80 = arith.addf %76, %79 : vector<8x256xf32>
    %81 = vector.extract_strided_slice %73 {offsets = [8, 0], sizes = [1, 256], strides = [1, 1]} : vector<16x256xf32> to vector<1x256xf32>
    %82 = vector.broadcast %81 : vector<1x256xf32> to vector<8x256xf32>
    %83 = arith.mulf %82, %17 : vector<8x256xf32>
    %84 = arith.addf %80, %83 : vector<8x256xf32>
    %85 = vector.extract_strided_slice %73 {offsets = [12, 0], sizes = [1, 256], strides = [1, 1]} : vector<16x256xf32> to vector<1x256xf32>
    %86 = vector.broadcast %85 : vector<1x256xf32> to vector<8x256xf32>
    %87 = arith.mulf %86, %21 : vector<8x256xf32>
    %88 = arith.addf %84, %87 : vector<8x256xf32>
    %89 = arith.mulf %88, %88 : vector<8x256xf32>
    %cst_19 = arith.constant dense<0.000000e+00> : vector<256xf32>
    %90 = vector.multi_reduction <add>, %89, %cst_19 [0] : vector<8x256xf32> to vector<256xf32>
    %91 = vector.shape_cast %90 : vector<256xf32> to vector<1x256xf32>
    %cst_20 = arith.constant 1.000000e-16 : f32
    %92 = vector.broadcast %cst_20 : f32 to vector<1x256xf32>
    %93 = arith.addf %91, %92 : vector<1x256xf32>
    %94 = math.rsqrt %93 : vector<1x256xf32>
    %95 = arith.mulf %91, %94 : vector<1x256xf32>
    %cst_21 = arith.constant 1.000000e+00 : f32
    %96 = vector.broadcast %cst_21 : f32 to vector<1x256xf32>
    %97 = arith.addf %96, %91 : vector<1x256xf32>
    %98 = tpu.reciprocal %97 : vector<1x256xf32> -> vector<1x256xf32>
    %99 = arith.mulf %95, %98 : vector<1x256xf32>
    %100 = vector.broadcast %99 : vector<1x256xf32> to vector<8x256xf32>
    %101 = arith.mulf %88, %100 : vector<8x256xf32>
    %102 = vector.extract_strided_slice %73 {offsets = [1, 0], sizes = [1, 256], strides = [1, 1]} : vector<16x256xf32> to vector<1x256xf32>
    %103 = vector.broadcast %102 : vector<1x256xf32> to vector<8x256xf32>
    %104 = arith.mulf %103, %10 : vector<8x256xf32>
    %105 = vector.extract_strided_slice %73 {offsets = [5, 0], sizes = [1, 256], strides = [1, 1]} : vector<16x256xf32> to vector<1x256xf32>
    %106 = vector.broadcast %105 : vector<1x256xf32> to vector<8x256xf32>
    %107 = arith.mulf %106, %14 : vector<8x256xf32>
    %108 = arith.addf %104, %107 : vector<8x256xf32>
    %109 = vector.extract_strided_slice %73 {offsets = [9, 0], sizes = [1, 256], strides = [1, 1]} : vector<16x256xf32> to vector<1x256xf32>
    %110 = vector.broadcast %109 : vector<1x256xf32> to vector<8x256xf32>
    %111 = arith.mulf %110, %18 : vector<8x256xf32>
    %112 = arith.addf %108, %111 : vector<8x256xf32>
    %113 = vector.extract_strided_slice %73 {offsets = [13, 0], sizes = [1, 256], strides = [1, 1]} : vector<16x256xf32> to vector<1x256xf32>
    %114 = vector.broadcast %113 : vector<1x256xf32> to vector<8x256xf32>
    %115 = arith.mulf %114, %22 : vector<8x256xf32>
    %116 = arith.addf %112, %115 : vector<8x256xf32>
    %117 = arith.mulf %116, %116 : vector<8x256xf32>
    %cst_22 = arith.constant dense<0.000000e+00> : vector<256xf32>
    %118 = vector.multi_reduction <add>, %117, %cst_22 [0] : vector<8x256xf32> to vector<256xf32>
    %119 = vector.shape_cast %118 : vector<256xf32> to vector<1x256xf32>
    %cst_23 = arith.constant 1.000000e-16 : f32
    %120 = vector.broadcast %cst_23 : f32 to vector<1x256xf32>
    %121 = arith.addf %119, %120 : vector<1x256xf32>
    %122 = math.rsqrt %121 : vector<1x256xf32>
    %123 = arith.mulf %119, %122 : vector<1x256xf32>
    %cst_24 = arith.constant 1.000000e+00 : f32
    %124 = vector.broadcast %cst_24 : f32 to vector<1x256xf32>
    %125 = arith.addf %124, %119 : vector<1x256xf32>
    %126 = tpu.reciprocal %125 : vector<1x256xf32> -> vector<1x256xf32>
    %127 = arith.mulf %123, %126 : vector<1x256xf32>
    %128 = vector.broadcast %127 : vector<1x256xf32> to vector<8x256xf32>
    %129 = arith.mulf %116, %128 : vector<8x256xf32>
    %130 = vector.extract_strided_slice %73 {offsets = [2, 0], sizes = [1, 256], strides = [1, 1]} : vector<16x256xf32> to vector<1x256xf32>
    %131 = vector.broadcast %130 : vector<1x256xf32> to vector<8x256xf32>
    %132 = arith.mulf %131, %11 : vector<8x256xf32>
    %133 = vector.extract_strided_slice %73 {offsets = [6, 0], sizes = [1, 256], strides = [1, 1]} : vector<16x256xf32> to vector<1x256xf32>
    %134 = vector.broadcast %133 : vector<1x256xf32> to vector<8x256xf32>
    %135 = arith.mulf %134, %15 : vector<8x256xf32>
    %136 = arith.addf %132, %135 : vector<8x256xf32>
    %137 = vector.extract_strided_slice %73 {offsets = [10, 0], sizes = [1, 256], strides = [1, 1]} : vector<16x256xf32> to vector<1x256xf32>
    %138 = vector.broadcast %137 : vector<1x256xf32> to vector<8x256xf32>
    %139 = arith.mulf %138, %19 : vector<8x256xf32>
    %140 = arith.addf %136, %139 : vector<8x256xf32>
    %141 = vector.extract_strided_slice %73 {offsets = [14, 0], sizes = [1, 256], strides = [1, 1]} : vector<16x256xf32> to vector<1x256xf32>
    %142 = vector.broadcast %141 : vector<1x256xf32> to vector<8x256xf32>
    %143 = arith.mulf %142, %23 : vector<8x256xf32>
    %144 = arith.addf %140, %143 : vector<8x256xf32>
    %145 = arith.mulf %144, %144 : vector<8x256xf32>
    %cst_25 = arith.constant dense<0.000000e+00> : vector<256xf32>
    %146 = vector.multi_reduction <add>, %145, %cst_25 [0] : vector<8x256xf32> to vector<256xf32>
    %147 = vector.shape_cast %146 : vector<256xf32> to vector<1x256xf32>
    %cst_26 = arith.constant 1.000000e-16 : f32
    %148 = vector.broadcast %cst_26 : f32 to vector<1x256xf32>
    %149 = arith.addf %147, %148 : vector<1x256xf32>
    %150 = math.rsqrt %149 : vector<1x256xf32>
    %151 = arith.mulf %147, %150 : vector<1x256xf32>
    %cst_27 = arith.constant 1.000000e+00 : f32
    %152 = vector.broadcast %cst_27 : f32 to vector<1x256xf32>
    %153 = arith.addf %152, %147 : vector<1x256xf32>
    %154 = tpu.reciprocal %153 : vector<1x256xf32> -> vector<1x256xf32>
    %155 = arith.mulf %151, %154 : vector<1x256xf32>
    %156 = vector.broadcast %155 : vector<1x256xf32> to vector<8x256xf32>
    %157 = arith.mulf %144, %156 : vector<8x256xf32>
    %158 = vector.extract_strided_slice %73 {offsets = [3, 0], sizes = [1, 256], strides = [1, 1]} : vector<16x256xf32> to vector<1x256xf32>
    %159 = vector.broadcast %158 : vector<1x256xf32> to vector<8x256xf32>
    %160 = arith.mulf %159, %12 : vector<8x256xf32>
    %161 = vector.extract_strided_slice %73 {offsets = [7, 0], sizes = [1, 256], strides = [1, 1]} : vector<16x256xf32> to vector<1x256xf32>
    %162 = vector.broadcast %161 : vector<1x256xf32> to vector<8x256xf32>
    %163 = arith.mulf %162, %16 : vector<8x256xf32>
    %164 = arith.addf %160, %163 : vector<8x256xf32>
    %165 = vector.extract_strided_slice %73 {offsets = [11, 0], sizes = [1, 256], strides = [1, 1]} : vector<16x256xf32> to vector<1x256xf32>
    %166 = vector.broadcast %165 : vector<1x256xf32> to vector<8x256xf32>
    %167 = arith.mulf %166, %20 : vector<8x256xf32>
    %168 = arith.addf %164, %167 : vector<8x256xf32>
    %169 = vector.extract_strided_slice %73 {offsets = [15, 0], sizes = [1, 256], strides = [1, 1]} : vector<16x256xf32> to vector<1x256xf32>
    %170 = vector.broadcast %169 : vector<1x256xf32> to vector<8x256xf32>
    %171 = arith.mulf %170, %24 : vector<8x256xf32>
    %172 = arith.addf %168, %171 : vector<8x256xf32>
    %173 = arith.mulf %172, %172 : vector<8x256xf32>
    %cst_28 = arith.constant dense<0.000000e+00> : vector<256xf32>
    %174 = vector.multi_reduction <add>, %173, %cst_28 [0] : vector<8x256xf32> to vector<256xf32>
    %175 = vector.shape_cast %174 : vector<256xf32> to vector<1x256xf32>
    %cst_29 = arith.constant 1.000000e-16 : f32
    %176 = vector.broadcast %cst_29 : f32 to vector<1x256xf32>
    %177 = arith.addf %175, %176 : vector<1x256xf32>
    %178 = math.rsqrt %177 : vector<1x256xf32>
    %179 = arith.mulf %175, %178 : vector<1x256xf32>
    %cst_30 = arith.constant 1.000000e+00 : f32
    %180 = vector.broadcast %cst_30 : f32 to vector<1x256xf32>
    %181 = arith.addf %180, %175 : vector<1x256xf32>
    %182 = tpu.reciprocal %181 : vector<1x256xf32> -> vector<1x256xf32>
    %183 = arith.mulf %179, %182 : vector<1x256xf32>
    %184 = vector.broadcast %183 : vector<1x256xf32> to vector<8x256xf32>
    %185 = arith.mulf %172, %184 : vector<8x256xf32>
    %186 = arith.mulf %101, %9 : vector<8x256xf32>
    %cst_31 = arith.constant dense<0.000000e+00> : vector<256xf32>
    %187 = vector.multi_reduction <add>, %186, %cst_31 [0] : vector<8x256xf32> to vector<256xf32>
    %188 = vector.shape_cast %187 : vector<256xf32> to vector<1x256xf32>
    %189 = arith.mulf %129, %10 : vector<8x256xf32>
    %cst_32 = arith.constant dense<0.000000e+00> : vector<256xf32>
    %190 = vector.multi_reduction <add>, %189, %cst_32 [0] : vector<8x256xf32> to vector<256xf32>
    %191 = vector.shape_cast %190 : vector<256xf32> to vector<1x256xf32>
    %192 = arith.mulf %157, %11 : vector<8x256xf32>
    %cst_33 = arith.constant dense<0.000000e+00> : vector<256xf32>
    %193 = vector.multi_reduction <add>, %192, %cst_33 [0] : vector<8x256xf32> to vector<256xf32>
    %194 = vector.shape_cast %193 : vector<256xf32> to vector<1x256xf32>
    %195 = arith.mulf %185, %12 : vector<8x256xf32>
    %cst_34 = arith.constant dense<0.000000e+00> : vector<256xf32>
    %196 = vector.multi_reduction <add>, %195, %cst_34 [0] : vector<8x256xf32> to vector<256xf32>
    %197 = vector.shape_cast %196 : vector<256xf32> to vector<1x256xf32>
    %198 = arith.mulf %101, %13 : vector<8x256xf32>
    %cst_35 = arith.constant dense<0.000000e+00> : vector<256xf32>
    %199 = vector.multi_reduction <add>, %198, %cst_35 [0] : vector<8x256xf32> to vector<256xf32>
    %200 = vector.shape_cast %199 : vector<256xf32> to vector<1x256xf32>
    %201 = arith.mulf %129, %14 : vector<8x256xf32>
    %cst_36 = arith.constant dense<0.000000e+00> : vector<256xf32>
    %202 = vector.multi_reduction <add>, %201, %cst_36 [0] : vector<8x256xf32> to vector<256xf32>
    %203 = vector.shape_cast %202 : vector<256xf32> to vector<1x256xf32>
    %204 = arith.mulf %157, %15 : vector<8x256xf32>
    %cst_37 = arith.constant dense<0.000000e+00> : vector<256xf32>
    %205 = vector.multi_reduction <add>, %204, %cst_37 [0] : vector<8x256xf32> to vector<256xf32>
    %206 = vector.shape_cast %205 : vector<256xf32> to vector<1x256xf32>
    %207 = arith.mulf %185, %16 : vector<8x256xf32>
    %cst_38 = arith.constant dense<0.000000e+00> : vector<256xf32>
    %208 = vector.multi_reduction <add>, %207, %cst_38 [0] : vector<8x256xf32> to vector<256xf32>
    %209 = vector.shape_cast %208 : vector<256xf32> to vector<1x256xf32>
    %210 = arith.mulf %101, %17 : vector<8x256xf32>
    %cst_39 = arith.constant dense<0.000000e+00> : vector<256xf32>
    %211 = vector.multi_reduction <add>, %210, %cst_39 [0] : vector<8x256xf32> to vector<256xf32>
    %212 = vector.shape_cast %211 : vector<256xf32> to vector<1x256xf32>
    %213 = arith.mulf %129, %18 : vector<8x256xf32>
    %cst_40 = arith.constant dense<0.000000e+00> : vector<256xf32>
    %214 = vector.multi_reduction <add>, %213, %cst_40 [0] : vector<8x256xf32> to vector<256xf32>
    %215 = vector.shape_cast %214 : vector<256xf32> to vector<1x256xf32>
    %216 = arith.mulf %157, %19 : vector<8x256xf32>
    %cst_41 = arith.constant dense<0.000000e+00> : vector<256xf32>
    %217 = vector.multi_reduction <add>, %216, %cst_41 [0] : vector<8x256xf32> to vector<256xf32>
    %218 = vector.shape_cast %217 : vector<256xf32> to vector<1x256xf32>
    %219 = arith.mulf %185, %20 : vector<8x256xf32>
    %cst_42 = arith.constant dense<0.000000e+00> : vector<256xf32>
    %220 = vector.multi_reduction <add>, %219, %cst_42 [0] : vector<8x256xf32> to vector<256xf32>
    %221 = vector.shape_cast %220 : vector<256xf32> to vector<1x256xf32>
    %222 = arith.mulf %101, %21 : vector<8x256xf32>
    %cst_43 = arith.constant dense<0.000000e+00> : vector<256xf32>
    %223 = vector.multi_reduction <add>, %222, %cst_43 [0] : vector<8x256xf32> to vector<256xf32>
    %224 = vector.shape_cast %223 : vector<256xf32> to vector<1x256xf32>
    %225 = arith.mulf %129, %22 : vector<8x256xf32>
    %cst_44 = arith.constant dense<0.000000e+00> : vector<256xf32>
    %226 = vector.multi_reduction <add>, %225, %cst_44 [0] : vector<8x256xf32> to vector<256xf32>
    %227 = vector.shape_cast %226 : vector<256xf32> to vector<1x256xf32>
    %228 = arith.mulf %157, %23 : vector<8x256xf32>
    %cst_45 = arith.constant dense<0.000000e+00> : vector<256xf32>
    %229 = vector.multi_reduction <add>, %228, %cst_45 [0] : vector<8x256xf32> to vector<256xf32>
    %230 = vector.shape_cast %229 : vector<256xf32> to vector<1x256xf32>
    %231 = arith.mulf %185, %24 : vector<8x256xf32>
    %cst_46 = arith.constant dense<0.000000e+00> : vector<256xf32>
    %232 = vector.multi_reduction <add>, %231, %cst_46 [0] : vector<8x256xf32> to vector<256xf32>
    %233 = vector.shape_cast %232 : vector<256xf32> to vector<1x256xf32>
    %234 = tpu.concatenate %188, %191, %194, %197, %200, %203, %206, %209, %212, %215, %218, %221, %224, %227, %230, %233 in 0 : vector<1x256xf32>, vector<1x256xf32>, vector<1x256xf32>, vector<1x256xf32>, vector<1x256xf32>, vector<1x256xf32>, vector<1x256xf32>, vector<1x256xf32>, vector<1x256xf32>, vector<1x256xf32>, vector<1x256xf32>, vector<1x256xf32>, vector<1x256xf32>, vector<1x256xf32>, vector<1x256xf32>, vector<1x256xf32> -> vector<16x256xf32>
    %235 = arith.addf %27, %234 : vector<16x256xf32>
    %236 = vector.extract_strided_slice %235 {offsets = [0, 0], sizes = [4, 256], strides = [1, 1]} : vector<16x256xf32> to vector<4x256xf32>
    %cst_47 = arith.constant dense<0xFF800000> : vector<256xf32>
    %237 = vector.multi_reduction <maximumf>, %236, %cst_47 [0] : vector<4x256xf32> to vector<256xf32>
    %238 = vector.shape_cast %237 : vector<256xf32> to vector<1x256xf32>
    %239 = vector.shape_cast %238 : vector<1x256xf32> to vector<1x256xf32>
    %240 = vector.broadcast %239 : vector<1x256xf32> to vector<4x256xf32>
    %241 = vector.extract_strided_slice %235 {offsets = [4, 0], sizes = [4, 256], strides = [1, 1]} : vector<16x256xf32> to vector<4x256xf32>
    %cst_48 = arith.constant dense<0xFF800000> : vector<256xf32>
    %242 = vector.multi_reduction <maximumf>, %241, %cst_48 [0] : vector<4x256xf32> to vector<256xf32>
    %243 = vector.shape_cast %242 : vector<256xf32> to vector<1x256xf32>
    %244 = vector.shape_cast %243 : vector<1x256xf32> to vector<1x256xf32>
    %245 = vector.broadcast %244 : vector<1x256xf32> to vector<4x256xf32>
    %246 = vector.extract_strided_slice %235 {offsets = [8, 0], sizes = [4, 256], strides = [1, 1]} : vector<16x256xf32> to vector<4x256xf32>
    %cst_49 = arith.constant dense<0xFF800000> : vector<256xf32>
    %247 = vector.multi_reduction <maximumf>, %246, %cst_49 [0] : vector<4x256xf32> to vector<256xf32>
    %248 = vector.shape_cast %247 : vector<256xf32> to vector<1x256xf32>
    %249 = vector.shape_cast %248 : vector<1x256xf32> to vector<1x256xf32>
    %250 = vector.broadcast %249 : vector<1x256xf32> to vector<4x256xf32>
    %251 = vector.extract_strided_slice %235 {offsets = [12, 0], sizes = [4, 256], strides = [1, 1]} : vector<16x256xf32> to vector<4x256xf32>
    %cst_50 = arith.constant dense<0xFF800000> : vector<256xf32>
    %252 = vector.multi_reduction <maximumf>, %251, %cst_50 [0] : vector<4x256xf32> to vector<256xf32>
    %253 = vector.shape_cast %252 : vector<256xf32> to vector<1x256xf32>
    %254 = vector.shape_cast %253 : vector<1x256xf32> to vector<1x256xf32>
    %255 = vector.broadcast %254 : vector<1x256xf32> to vector<4x256xf32>
    %256 = tpu.concatenate %240, %245, %250, %255 in 0 : vector<4x256xf32>, vector<4x256xf32>, vector<4x256xf32>, vector<4x256xf32> -> vector<16x256xf32>
    %257 = arith.subf %235, %256 : vector<16x256xf32>
    %258 = math.exp %257 : vector<16x256xf32>
    %259 = vector.extract_strided_slice %258 {offsets = [0, 0], sizes = [4, 256], strides = [1, 1]} : vector<16x256xf32> to vector<4x256xf32>
    %cst_51 = arith.constant dense<0.000000e+00> : vector<256xf32>
    %260 = vector.multi_reduction <add>, %259, %cst_51 [0] : vector<4x256xf32> to vector<256xf32>
    %261 = vector.shape_cast %260 : vector<256xf32> to vector<1x256xf32>
    %262 = vector.shape_cast %261 : vector<1x256xf32> to vector<1x256xf32>
    %263 = vector.broadcast %262 : vector<1x256xf32> to vector<4x256xf32>
    %264 = vector.extract_strided_slice %258 {offsets = [4, 0], sizes = [4, 256], strides = [1, 1]} : vector<16x256xf32> to vector<4x256xf32>
    %cst_52 = arith.constant dense<0.000000e+00> : vector<256xf32>
    %265 = vector.multi_reduction <add>, %264, %cst_52 [0] : vector<4x256xf32> to vector<256xf32>
    %266 = vector.shape_cast %265 : vector<256xf32> to vector<1x256xf32>
    %267 = vector.shape_cast %266 : vector<1x256xf32> to vector<1x256xf32>
    %268 = vector.broadcast %267 : vector<1x256xf32> to vector<4x256xf32>
    %269 = vector.extract_strided_slice %258 {offsets = [8, 0], sizes = [4, 256], strides = [1, 1]} : vector<16x256xf32> to vector<4x256xf32>
    %cst_53 = arith.constant dense<0.000000e+00> : vector<256xf32>
    %270 = vector.multi_reduction <add>, %269, %cst_53 [0] : vector<4x256xf32> to vector<256xf32>
    %271 = vector.shape_cast %270 : vector<256xf32> to vector<1x256xf32>
    %272 = vector.shape_cast %271 : vector<1x256xf32> to vector<1x256xf32>
    %273 = vector.broadcast %272 : vector<1x256xf32> to vector<4x256xf32>
    %274 = vector.extract_strided_slice %258 {offsets = [12, 0], sizes = [4, 256], strides = [1, 1]} : vector<16x256xf32> to vector<4x256xf32>
    %cst_54 = arith.constant dense<0.000000e+00> : vector<256xf32>
    %275 = vector.multi_reduction <add>, %274, %cst_54 [0] : vector<4x256xf32> to vector<256xf32>
    %276 = vector.shape_cast %275 : vector<256xf32> to vector<1x256xf32>
    %277 = vector.shape_cast %276 : vector<1x256xf32> to vector<1x256xf32>
    %278 = vector.broadcast %277 : vector<1x256xf32> to vector<4x256xf32>
    %279 = tpu.concatenate %263, %268, %273, %278 in 0 : vector<4x256xf32>, vector<4x256xf32>, vector<4x256xf32>, vector<4x256xf32> -> vector<16x256xf32>
    %280 = tpu.reciprocal %279 : vector<16x256xf32> -> vector<16x256xf32>
    %281 = arith.mulf %258, %280 : vector<16x256xf32>
    %282 = vector.extract_strided_slice %281 {offsets = [0, 0], sizes = [1, 256], strides = [1, 1]} : vector<16x256xf32> to vector<1x256xf32>
    %283 = vector.broadcast %282 : vector<1x256xf32> to vector<8x256xf32>
    %284 = arith.mulf %283, %9 : vector<8x256xf32>
    %285 = vector.extract_strided_slice %281 {offsets = [4, 0], sizes = [1, 256], strides = [1, 1]} : vector<16x256xf32> to vector<1x256xf32>
    %286 = vector.broadcast %285 : vector<1x256xf32> to vector<8x256xf32>
    %287 = arith.mulf %286, %13 : vector<8x256xf32>
    %288 = arith.addf %284, %287 : vector<8x256xf32>
    %289 = vector.extract_strided_slice %281 {offsets = [8, 0], sizes = [1, 256], strides = [1, 1]} : vector<16x256xf32> to vector<1x256xf32>
    %290 = vector.broadcast %289 : vector<1x256xf32> to vector<8x256xf32>
    %291 = arith.mulf %290, %17 : vector<8x256xf32>
    %292 = arith.addf %288, %291 : vector<8x256xf32>
    %293 = vector.extract_strided_slice %281 {offsets = [12, 0], sizes = [1, 256], strides = [1, 1]} : vector<16x256xf32> to vector<1x256xf32>
    %294 = vector.broadcast %293 : vector<1x256xf32> to vector<8x256xf32>
    %295 = arith.mulf %294, %21 : vector<8x256xf32>
    %296 = arith.addf %292, %295 : vector<8x256xf32>
    %297 = arith.mulf %296, %296 : vector<8x256xf32>
    %cst_55 = arith.constant dense<0.000000e+00> : vector<256xf32>
    %298 = vector.multi_reduction <add>, %297, %cst_55 [0] : vector<8x256xf32> to vector<256xf32>
    %299 = vector.shape_cast %298 : vector<256xf32> to vector<1x256xf32>
    %cst_56 = arith.constant 1.000000e-16 : f32
    %300 = vector.broadcast %cst_56 : f32 to vector<1x256xf32>
    %301 = arith.addf %299, %300 : vector<1x256xf32>
    %302 = math.rsqrt %301 : vector<1x256xf32>
    %303 = arith.mulf %299, %302 : vector<1x256xf32>
    %cst_57 = arith.constant 1.000000e+00 : f32
    %304 = vector.broadcast %cst_57 : f32 to vector<1x256xf32>
    %305 = arith.addf %304, %299 : vector<1x256xf32>
    %306 = tpu.reciprocal %305 : vector<1x256xf32> -> vector<1x256xf32>
    %307 = arith.mulf %303, %306 : vector<1x256xf32>
    %308 = vector.broadcast %307 : vector<1x256xf32> to vector<8x256xf32>
    %309 = arith.mulf %296, %308 : vector<8x256xf32>
    %310 = vector.extract_strided_slice %281 {offsets = [1, 0], sizes = [1, 256], strides = [1, 1]} : vector<16x256xf32> to vector<1x256xf32>
    %311 = vector.broadcast %310 : vector<1x256xf32> to vector<8x256xf32>
    %312 = arith.mulf %311, %10 : vector<8x256xf32>
    %313 = vector.extract_strided_slice %281 {offsets = [5, 0], sizes = [1, 256], strides = [1, 1]} : vector<16x256xf32> to vector<1x256xf32>
    %314 = vector.broadcast %313 : vector<1x256xf32> to vector<8x256xf32>
    %315 = arith.mulf %314, %14 : vector<8x256xf32>
    %316 = arith.addf %312, %315 : vector<8x256xf32>
    %317 = vector.extract_strided_slice %281 {offsets = [9, 0], sizes = [1, 256], strides = [1, 1]} : vector<16x256xf32> to vector<1x256xf32>
    %318 = vector.broadcast %317 : vector<1x256xf32> to vector<8x256xf32>
    %319 = arith.mulf %318, %18 : vector<8x256xf32>
    %320 = arith.addf %316, %319 : vector<8x256xf32>
    %321 = vector.extract_strided_slice %281 {offsets = [13, 0], sizes = [1, 256], strides = [1, 1]} : vector<16x256xf32> to vector<1x256xf32>
    %322 = vector.broadcast %321 : vector<1x256xf32> to vector<8x256xf32>
    %323 = arith.mulf %322, %22 : vector<8x256xf32>
    %324 = arith.addf %320, %323 : vector<8x256xf32>
    %325 = arith.mulf %324, %324 : vector<8x256xf32>
    %cst_58 = arith.constant dense<0.000000e+00> : vector<256xf32>
    %326 = vector.multi_reduction <add>, %325, %cst_58 [0] : vector<8x256xf32> to vector<256xf32>
    %327 = vector.shape_cast %326 : vector<256xf32> to vector<1x256xf32>
    %cst_59 = arith.constant 1.000000e-16 : f32
    %328 = vector.broadcast %cst_59 : f32 to vector<1x256xf32>
    %329 = arith.addf %327, %328 : vector<1x256xf32>
    %330 = math.rsqrt %329 : vector<1x256xf32>
    %331 = arith.mulf %327, %330 : vector<1x256xf32>
    %cst_60 = arith.constant 1.000000e+00 : f32
    %332 = vector.broadcast %cst_60 : f32 to vector<1x256xf32>
    %333 = arith.addf %332, %327 : vector<1x256xf32>
    %334 = tpu.reciprocal %333 : vector<1x256xf32> -> vector<1x256xf32>
    %335 = arith.mulf %331, %334 : vector<1x256xf32>
    %336 = vector.broadcast %335 : vector<1x256xf32> to vector<8x256xf32>
    %337 = arith.mulf %324, %336 : vector<8x256xf32>
    %338 = vector.extract_strided_slice %281 {offsets = [2, 0], sizes = [1, 256], strides = [1, 1]} : vector<16x256xf32> to vector<1x256xf32>
    %339 = vector.broadcast %338 : vector<1x256xf32> to vector<8x256xf32>
    %340 = arith.mulf %339, %11 : vector<8x256xf32>
    %341 = vector.extract_strided_slice %281 {offsets = [6, 0], sizes = [1, 256], strides = [1, 1]} : vector<16x256xf32> to vector<1x256xf32>
    %342 = vector.broadcast %341 : vector<1x256xf32> to vector<8x256xf32>
    %343 = arith.mulf %342, %15 : vector<8x256xf32>
    %344 = arith.addf %340, %343 : vector<8x256xf32>
    %345 = vector.extract_strided_slice %281 {offsets = [10, 0], sizes = [1, 256], strides = [1, 1]} : vector<16x256xf32> to vector<1x256xf32>
    %346 = vector.broadcast %345 : vector<1x256xf32> to vector<8x256xf32>
    %347 = arith.mulf %346, %19 : vector<8x256xf32>
    %348 = arith.addf %344, %347 : vector<8x256xf32>
    %349 = vector.extract_strided_slice %281 {offsets = [14, 0], sizes = [1, 256], strides = [1, 1]} : vector<16x256xf32> to vector<1x256xf32>
    %350 = vector.broadcast %349 : vector<1x256xf32> to vector<8x256xf32>
    %351 = arith.mulf %350, %23 : vector<8x256xf32>
    %352 = arith.addf %348, %351 : vector<8x256xf32>
    %353 = arith.mulf %352, %352 : vector<8x256xf32>
    %cst_61 = arith.constant dense<0.000000e+00> : vector<256xf32>
    %354 = vector.multi_reduction <add>, %353, %cst_61 [0] : vector<8x256xf32> to vector<256xf32>
    %355 = vector.shape_cast %354 : vector<256xf32> to vector<1x256xf32>
    %cst_62 = arith.constant 1.000000e-16 : f32
    %356 = vector.broadcast %cst_62 : f32 to vector<1x256xf32>
    %357 = arith.addf %355, %356 : vector<1x256xf32>
    %358 = math.rsqrt %357 : vector<1x256xf32>
    %359 = arith.mulf %355, %358 : vector<1x256xf32>
    %cst_63 = arith.constant 1.000000e+00 : f32
    %360 = vector.broadcast %cst_63 : f32 to vector<1x256xf32>
    %361 = arith.addf %360, %355 : vector<1x256xf32>
    %362 = tpu.reciprocal %361 : vector<1x256xf32> -> vector<1x256xf32>
    %363 = arith.mulf %359, %362 : vector<1x256xf32>
    %364 = vector.broadcast %363 : vector<1x256xf32> to vector<8x256xf32>
    %365 = arith.mulf %352, %364 : vector<8x256xf32>
    %366 = vector.extract_strided_slice %281 {offsets = [3, 0], sizes = [1, 256], strides = [1, 1]} : vector<16x256xf32> to vector<1x256xf32>
    %367 = vector.broadcast %366 : vector<1x256xf32> to vector<8x256xf32>
    %368 = arith.mulf %367, %12 : vector<8x256xf32>
    %369 = vector.extract_strided_slice %281 {offsets = [7, 0], sizes = [1, 256], strides = [1, 1]} : vector<16x256xf32> to vector<1x256xf32>
    %370 = vector.broadcast %369 : vector<1x256xf32> to vector<8x256xf32>
    %371 = arith.mulf %370, %16 : vector<8x256xf32>
    %372 = arith.addf %368, %371 : vector<8x256xf32>
    %373 = vector.extract_strided_slice %281 {offsets = [11, 0], sizes = [1, 256], strides = [1, 1]} : vector<16x256xf32> to vector<1x256xf32>
    %374 = vector.broadcast %373 : vector<1x256xf32> to vector<8x256xf32>
    %375 = arith.mulf %374, %20 : vector<8x256xf32>
    %376 = arith.addf %372, %375 : vector<8x256xf32>
    %377 = vector.extract_strided_slice %281 {offsets = [15, 0], sizes = [1, 256], strides = [1, 1]} : vector<16x256xf32> to vector<1x256xf32>
    %378 = vector.broadcast %377 : vector<1x256xf32> to vector<8x256xf32>
    %379 = arith.mulf %378, %24 : vector<8x256xf32>
    %380 = arith.addf %376, %379 : vector<8x256xf32>
    %381 = arith.mulf %380, %380 : vector<8x256xf32>
    %cst_64 = arith.constant dense<0.000000e+00> : vector<256xf32>
    %382 = vector.multi_reduction <add>, %381, %cst_64 [0] : vector<8x256xf32> to vector<256xf32>
    %383 = vector.shape_cast %382 : vector<256xf32> to vector<1x256xf32>
    %cst_65 = arith.constant 1.000000e-16 : f32
    %384 = vector.broadcast %cst_65 : f32 to vector<1x256xf32>
    %385 = arith.addf %383, %384 : vector<1x256xf32>
    %386 = math.rsqrt %385 : vector<1x256xf32>
    %387 = arith.mulf %383, %386 : vector<1x256xf32>
    %cst_66 = arith.constant 1.000000e+00 : f32
    %388 = vector.broadcast %cst_66 : f32 to vector<1x256xf32>
    %389 = arith.addf %388, %383 : vector<1x256xf32>
    %390 = tpu.reciprocal %389 : vector<1x256xf32> -> vector<1x256xf32>
    %391 = arith.mulf %387, %390 : vector<1x256xf32>
    %392 = vector.broadcast %391 : vector<1x256xf32> to vector<8x256xf32>
    %393 = arith.mulf %380, %392 : vector<8x256xf32>
    %394 = arith.mulf %309, %9 : vector<8x256xf32>
    %cst_67 = arith.constant dense<0.000000e+00> : vector<256xf32>
    %395 = vector.multi_reduction <add>, %394, %cst_67 [0] : vector<8x256xf32> to vector<256xf32>
    %396 = vector.shape_cast %395 : vector<256xf32> to vector<1x256xf32>
    %397 = arith.mulf %337, %10 : vector<8x256xf32>
    %cst_68 = arith.constant dense<0.000000e+00> : vector<256xf32>
    %398 = vector.multi_reduction <add>, %397, %cst_68 [0] : vector<8x256xf32> to vector<256xf32>
    %399 = vector.shape_cast %398 : vector<256xf32> to vector<1x256xf32>
    %400 = arith.mulf %365, %11 : vector<8x256xf32>
    %cst_69 = arith.constant dense<0.000000e+00> : vector<256xf32>
    %401 = vector.multi_reduction <add>, %400, %cst_69 [0] : vector<8x256xf32> to vector<256xf32>
    %402 = vector.shape_cast %401 : vector<256xf32> to vector<1x256xf32>
    %403 = arith.mulf %393, %12 : vector<8x256xf32>
    %cst_70 = arith.constant dense<0.000000e+00> : vector<256xf32>
    %404 = vector.multi_reduction <add>, %403, %cst_70 [0] : vector<8x256xf32> to vector<256xf32>
    %405 = vector.shape_cast %404 : vector<256xf32> to vector<1x256xf32>
    %406 = arith.mulf %309, %13 : vector<8x256xf32>
    %cst_71 = arith.constant dense<0.000000e+00> : vector<256xf32>
    %407 = vector.multi_reduction <add>, %406, %cst_71 [0] : vector<8x256xf32> to vector<256xf32>
    %408 = vector.shape_cast %407 : vector<256xf32> to vector<1x256xf32>
    %409 = arith.mulf %337, %14 : vector<8x256xf32>
    %cst_72 = arith.constant dense<0.000000e+00> : vector<256xf32>
    %410 = vector.multi_reduction <add>, %409, %cst_72 [0] : vector<8x256xf32> to vector<256xf32>
    %411 = vector.shape_cast %410 : vector<256xf32> to vector<1x256xf32>
    %412 = arith.mulf %365, %15 : vector<8x256xf32>
    %cst_73 = arith.constant dense<0.000000e+00> : vector<256xf32>
    %413 = vector.multi_reduction <add>, %412, %cst_73 [0] : vector<8x256xf32> to vector<256xf32>
    %414 = vector.shape_cast %413 : vector<256xf32> to vector<1x256xf32>
    %415 = arith.mulf %393, %16 : vector<8x256xf32>
    %cst_74 = arith.constant dense<0.000000e+00> : vector<256xf32>
    %416 = vector.multi_reduction <add>, %415, %cst_74 [0] : vector<8x256xf32> to vector<256xf32>
    %417 = vector.shape_cast %416 : vector<256xf32> to vector<1x256xf32>
    %418 = arith.mulf %309, %17 : vector<8x256xf32>
    %cst_75 = arith.constant dense<0.000000e+00> : vector<256xf32>
    %419 = vector.multi_reduction <add>, %418, %cst_75 [0] : vector<8x256xf32> to vector<256xf32>
    %420 = vector.shape_cast %419 : vector<256xf32> to vector<1x256xf32>
    %421 = arith.mulf %337, %18 : vector<8x256xf32>
    %cst_76 = arith.constant dense<0.000000e+00> : vector<256xf32>
    %422 = vector.multi_reduction <add>, %421, %cst_76 [0] : vector<8x256xf32> to vector<256xf32>
    %423 = vector.shape_cast %422 : vector<256xf32> to vector<1x256xf32>
    %424 = arith.mulf %365, %19 : vector<8x256xf32>
    %cst_77 = arith.constant dense<0.000000e+00> : vector<256xf32>
    %425 = vector.multi_reduction <add>, %424, %cst_77 [0] : vector<8x256xf32> to vector<256xf32>
    %426 = vector.shape_cast %425 : vector<256xf32> to vector<1x256xf32>
    %427 = arith.mulf %393, %20 : vector<8x256xf32>
    %cst_78 = arith.constant dense<0.000000e+00> : vector<256xf32>
    %428 = vector.multi_reduction <add>, %427, %cst_78 [0] : vector<8x256xf32> to vector<256xf32>
    %429 = vector.shape_cast %428 : vector<256xf32> to vector<1x256xf32>
    %430 = arith.mulf %309, %21 : vector<8x256xf32>
    %cst_79 = arith.constant dense<0.000000e+00> : vector<256xf32>
    %431 = vector.multi_reduction <add>, %430, %cst_79 [0] : vector<8x256xf32> to vector<256xf32>
    %432 = vector.shape_cast %431 : vector<256xf32> to vector<1x256xf32>
    %433 = arith.mulf %337, %22 : vector<8x256xf32>
    %cst_80 = arith.constant dense<0.000000e+00> : vector<256xf32>
    %434 = vector.multi_reduction <add>, %433, %cst_80 [0] : vector<8x256xf32> to vector<256xf32>
    %435 = vector.shape_cast %434 : vector<256xf32> to vector<1x256xf32>
    %436 = arith.mulf %365, %23 : vector<8x256xf32>
    %cst_81 = arith.constant dense<0.000000e+00> : vector<256xf32>
    %437 = vector.multi_reduction <add>, %436, %cst_81 [0] : vector<8x256xf32> to vector<256xf32>
    %438 = vector.shape_cast %437 : vector<256xf32> to vector<1x256xf32>
    %439 = arith.mulf %393, %24 : vector<8x256xf32>
    %cst_82 = arith.constant dense<0.000000e+00> : vector<256xf32>
    %440 = vector.multi_reduction <add>, %439, %cst_82 [0] : vector<8x256xf32> to vector<256xf32>
    %441 = vector.shape_cast %440 : vector<256xf32> to vector<1x256xf32>
    %442 = tpu.concatenate %396, %399, %402, %405, %408, %411, %414, %417, %420, %423, %426, %429, %432, %435, %438, %441 in 0 : vector<1x256xf32>, vector<1x256xf32>, vector<1x256xf32>, vector<1x256xf32>, vector<1x256xf32>, vector<1x256xf32>, vector<1x256xf32>, vector<1x256xf32>, vector<1x256xf32>, vector<1x256xf32>, vector<1x256xf32>, vector<1x256xf32>, vector<1x256xf32>, vector<1x256xf32>, vector<1x256xf32>, vector<1x256xf32> -> vector<16x256xf32>
    %443 = arith.addf %235, %442 : vector<16x256xf32>
    %444 = vector.extract_strided_slice %443 {offsets = [0, 0], sizes = [4, 256], strides = [1, 1]} : vector<16x256xf32> to vector<4x256xf32>
    %cst_83 = arith.constant dense<0xFF800000> : vector<256xf32>
    %445 = vector.multi_reduction <maximumf>, %444, %cst_83 [0] : vector<4x256xf32> to vector<256xf32>
    %446 = vector.shape_cast %445 : vector<256xf32> to vector<1x256xf32>
    %447 = vector.shape_cast %446 : vector<1x256xf32> to vector<1x256xf32>
    %448 = vector.broadcast %447 : vector<1x256xf32> to vector<4x256xf32>
    %449 = vector.extract_strided_slice %443 {offsets = [4, 0], sizes = [4, 256], strides = [1, 1]} : vector<16x256xf32> to vector<4x256xf32>
    %cst_84 = arith.constant dense<0xFF800000> : vector<256xf32>
    %450 = vector.multi_reduction <maximumf>, %449, %cst_84 [0] : vector<4x256xf32> to vector<256xf32>
    %451 = vector.shape_cast %450 : vector<256xf32> to vector<1x256xf32>
    %452 = vector.shape_cast %451 : vector<1x256xf32> to vector<1x256xf32>
    %453 = vector.broadcast %452 : vector<1x256xf32> to vector<4x256xf32>
    %454 = vector.extract_strided_slice %443 {offsets = [8, 0], sizes = [4, 256], strides = [1, 1]} : vector<16x256xf32> to vector<4x256xf32>
    %cst_85 = arith.constant dense<0xFF800000> : vector<256xf32>
    %455 = vector.multi_reduction <maximumf>, %454, %cst_85 [0] : vector<4x256xf32> to vector<256xf32>
    %456 = vector.shape_cast %455 : vector<256xf32> to vector<1x256xf32>
    %457 = vector.shape_cast %456 : vector<1x256xf32> to vector<1x256xf32>
    %458 = vector.broadcast %457 : vector<1x256xf32> to vector<4x256xf32>
    %459 = vector.extract_strided_slice %443 {offsets = [12, 0], sizes = [4, 256], strides = [1, 1]} : vector<16x256xf32> to vector<4x256xf32>
    %cst_86 = arith.constant dense<0xFF800000> : vector<256xf32>
    %460 = vector.multi_reduction <maximumf>, %459, %cst_86 [0] : vector<4x256xf32> to vector<256xf32>
    %461 = vector.shape_cast %460 : vector<256xf32> to vector<1x256xf32>
    %462 = vector.shape_cast %461 : vector<1x256xf32> to vector<1x256xf32>
    %463 = vector.broadcast %462 : vector<1x256xf32> to vector<4x256xf32>
    %464 = tpu.concatenate %448, %453, %458, %463 in 0 : vector<4x256xf32>, vector<4x256xf32>, vector<4x256xf32>, vector<4x256xf32> -> vector<16x256xf32>
    %465 = arith.subf %443, %464 : vector<16x256xf32>
    %466 = math.exp %465 : vector<16x256xf32>
    %467 = vector.extract_strided_slice %466 {offsets = [0, 0], sizes = [4, 256], strides = [1, 1]} : vector<16x256xf32> to vector<4x256xf32>
    %cst_87 = arith.constant dense<0.000000e+00> : vector<256xf32>
    %468 = vector.multi_reduction <add>, %467, %cst_87 [0] : vector<4x256xf32> to vector<256xf32>
    %469 = vector.shape_cast %468 : vector<256xf32> to vector<1x256xf32>
    %470 = vector.shape_cast %469 : vector<1x256xf32> to vector<1x256xf32>
    %471 = vector.broadcast %470 : vector<1x256xf32> to vector<4x256xf32>
    %472 = vector.extract_strided_slice %466 {offsets = [4, 0], sizes = [4, 256], strides = [1, 1]} : vector<16x256xf32> to vector<4x256xf32>
    %cst_88 = arith.constant dense<0.000000e+00> : vector<256xf32>
    %473 = vector.multi_reduction <add>, %472, %cst_88 [0] : vector<4x256xf32> to vector<256xf32>
    %474 = vector.shape_cast %473 : vector<256xf32> to vector<1x256xf32>
    %475 = vector.shape_cast %474 : vector<1x256xf32> to vector<1x256xf32>
    %476 = vector.broadcast %475 : vector<1x256xf32> to vector<4x256xf32>
    %477 = vector.extract_strided_slice %466 {offsets = [8, 0], sizes = [4, 256], strides = [1, 1]} : vector<16x256xf32> to vector<4x256xf32>
    %cst_89 = arith.constant dense<0.000000e+00> : vector<256xf32>
    %478 = vector.multi_reduction <add>, %477, %cst_89 [0] : vector<4x256xf32> to vector<256xf32>
    %479 = vector.shape_cast %478 : vector<256xf32> to vector<1x256xf32>
    %480 = vector.shape_cast %479 : vector<1x256xf32> to vector<1x256xf32>
    %481 = vector.broadcast %480 : vector<1x256xf32> to vector<4x256xf32>
    %482 = vector.extract_strided_slice %466 {offsets = [12, 0], sizes = [4, 256], strides = [1, 1]} : vector<16x256xf32> to vector<4x256xf32>
    %cst_90 = arith.constant dense<0.000000e+00> : vector<256xf32>
    %483 = vector.multi_reduction <add>, %482, %cst_90 [0] : vector<4x256xf32> to vector<256xf32>
    %484 = vector.shape_cast %483 : vector<256xf32> to vector<1x256xf32>
    %485 = vector.shape_cast %484 : vector<1x256xf32> to vector<1x256xf32>
    %486 = vector.broadcast %485 : vector<1x256xf32> to vector<4x256xf32>
    %487 = tpu.concatenate %471, %476, %481, %486 in 0 : vector<4x256xf32>, vector<4x256xf32>, vector<4x256xf32>, vector<4x256xf32> -> vector<16x256xf32>
    %488 = tpu.reciprocal %487 : vector<16x256xf32> -> vector<16x256xf32>
    %489 = arith.mulf %466, %488 : vector<16x256xf32>
    %490 = vector.extract_strided_slice %489 {offsets = [0, 0], sizes = [1, 256], strides = [1, 1]} : vector<16x256xf32> to vector<1x256xf32>
    %491 = vector.broadcast %490 : vector<1x256xf32> to vector<8x256xf32>
    %492 = arith.mulf %491, %9 : vector<8x256xf32>
    %493 = vector.extract_strided_slice %489 {offsets = [4, 0], sizes = [1, 256], strides = [1, 1]} : vector<16x256xf32> to vector<1x256xf32>
    %494 = vector.broadcast %493 : vector<1x256xf32> to vector<8x256xf32>
    %495 = arith.mulf %494, %13 : vector<8x256xf32>
    %496 = arith.addf %492, %495 : vector<8x256xf32>
    %497 = vector.extract_strided_slice %489 {offsets = [8, 0], sizes = [1, 256], strides = [1, 1]} : vector<16x256xf32> to vector<1x256xf32>
    %498 = vector.broadcast %497 : vector<1x256xf32> to vector<8x256xf32>
    %499 = arith.mulf %498, %17 : vector<8x256xf32>
    %500 = arith.addf %496, %499 : vector<8x256xf32>
    %501 = vector.extract_strided_slice %489 {offsets = [12, 0], sizes = [1, 256], strides = [1, 1]} : vector<16x256xf32> to vector<1x256xf32>
    %502 = vector.broadcast %501 : vector<1x256xf32> to vector<8x256xf32>
    %503 = arith.mulf %502, %21 : vector<8x256xf32>
    %504 = arith.addf %500, %503 : vector<8x256xf32>
    %505 = arith.mulf %504, %504 : vector<8x256xf32>
    %cst_91 = arith.constant dense<0.000000e+00> : vector<256xf32>
    %506 = vector.multi_reduction <add>, %505, %cst_91 [0] : vector<8x256xf32> to vector<256xf32>
    %507 = vector.shape_cast %506 : vector<256xf32> to vector<1x256xf32>
    %cst_92 = arith.constant 1.000000e-16 : f32
    %508 = vector.broadcast %cst_92 : f32 to vector<1x256xf32>
    %509 = arith.addf %507, %508 : vector<1x256xf32>
    %510 = math.rsqrt %509 : vector<1x256xf32>
    %511 = arith.mulf %507, %510 : vector<1x256xf32>
    %cst_93 = arith.constant 1.000000e+00 : f32
    %512 = vector.broadcast %cst_93 : f32 to vector<1x256xf32>
    %513 = arith.addf %512, %507 : vector<1x256xf32>
    %514 = tpu.reciprocal %513 : vector<1x256xf32> -> vector<1x256xf32>
    %515 = arith.mulf %511, %514 : vector<1x256xf32>
    %516 = vector.broadcast %515 : vector<1x256xf32> to vector<8x256xf32>
    %517 = arith.mulf %504, %516 : vector<8x256xf32>
    %518 = vector.extract_strided_slice %489 {offsets = [1, 0], sizes = [1, 256], strides = [1, 1]} : vector<16x256xf32> to vector<1x256xf32>
    %519 = vector.broadcast %518 : vector<1x256xf32> to vector<8x256xf32>
    %520 = arith.mulf %519, %10 : vector<8x256xf32>
    %521 = vector.extract_strided_slice %489 {offsets = [5, 0], sizes = [1, 256], strides = [1, 1]} : vector<16x256xf32> to vector<1x256xf32>
    %522 = vector.broadcast %521 : vector<1x256xf32> to vector<8x256xf32>
    %523 = arith.mulf %522, %14 : vector<8x256xf32>
    %524 = arith.addf %520, %523 : vector<8x256xf32>
    %525 = vector.extract_strided_slice %489 {offsets = [9, 0], sizes = [1, 256], strides = [1, 1]} : vector<16x256xf32> to vector<1x256xf32>
    %526 = vector.broadcast %525 : vector<1x256xf32> to vector<8x256xf32>
    %527 = arith.mulf %526, %18 : vector<8x256xf32>
    %528 = arith.addf %524, %527 : vector<8x256xf32>
    %529 = vector.extract_strided_slice %489 {offsets = [13, 0], sizes = [1, 256], strides = [1, 1]} : vector<16x256xf32> to vector<1x256xf32>
    %530 = vector.broadcast %529 : vector<1x256xf32> to vector<8x256xf32>
    %531 = arith.mulf %530, %22 : vector<8x256xf32>
    %532 = arith.addf %528, %531 : vector<8x256xf32>
    %533 = arith.mulf %532, %532 : vector<8x256xf32>
    %cst_94 = arith.constant dense<0.000000e+00> : vector<256xf32>
    %534 = vector.multi_reduction <add>, %533, %cst_94 [0] : vector<8x256xf32> to vector<256xf32>
    %535 = vector.shape_cast %534 : vector<256xf32> to vector<1x256xf32>
    %cst_95 = arith.constant 1.000000e-16 : f32
    %536 = vector.broadcast %cst_95 : f32 to vector<1x256xf32>
    %537 = arith.addf %535, %536 : vector<1x256xf32>
    %538 = math.rsqrt %537 : vector<1x256xf32>
    %539 = arith.mulf %535, %538 : vector<1x256xf32>
    %cst_96 = arith.constant 1.000000e+00 : f32
    %540 = vector.broadcast %cst_96 : f32 to vector<1x256xf32>
    %541 = arith.addf %540, %535 : vector<1x256xf32>
    %542 = tpu.reciprocal %541 : vector<1x256xf32> -> vector<1x256xf32>
    %543 = arith.mulf %539, %542 : vector<1x256xf32>
    %544 = vector.broadcast %543 : vector<1x256xf32> to vector<8x256xf32>
    %545 = arith.mulf %532, %544 : vector<8x256xf32>
    %546 = vector.extract_strided_slice %489 {offsets = [2, 0], sizes = [1, 256], strides = [1, 1]} : vector<16x256xf32> to vector<1x256xf32>
    %547 = vector.broadcast %546 : vector<1x256xf32> to vector<8x256xf32>
    %548 = arith.mulf %547, %11 : vector<8x256xf32>
    %549 = vector.extract_strided_slice %489 {offsets = [6, 0], sizes = [1, 256], strides = [1, 1]} : vector<16x256xf32> to vector<1x256xf32>
    %550 = vector.broadcast %549 : vector<1x256xf32> to vector<8x256xf32>
    %551 = arith.mulf %550, %15 : vector<8x256xf32>
    %552 = arith.addf %548, %551 : vector<8x256xf32>
    %553 = vector.extract_strided_slice %489 {offsets = [10, 0], sizes = [1, 256], strides = [1, 1]} : vector<16x256xf32> to vector<1x256xf32>
    %554 = vector.broadcast %553 : vector<1x256xf32> to vector<8x256xf32>
    %555 = arith.mulf %554, %19 : vector<8x256xf32>
    %556 = arith.addf %552, %555 : vector<8x256xf32>
    %557 = vector.extract_strided_slice %489 {offsets = [14, 0], sizes = [1, 256], strides = [1, 1]} : vector<16x256xf32> to vector<1x256xf32>
    %558 = vector.broadcast %557 : vector<1x256xf32> to vector<8x256xf32>
    %559 = arith.mulf %558, %23 : vector<8x256xf32>
    %560 = arith.addf %556, %559 : vector<8x256xf32>
    %561 = arith.mulf %560, %560 : vector<8x256xf32>
    %cst_97 = arith.constant dense<0.000000e+00> : vector<256xf32>
    %562 = vector.multi_reduction <add>, %561, %cst_97 [0] : vector<8x256xf32> to vector<256xf32>
    %563 = vector.shape_cast %562 : vector<256xf32> to vector<1x256xf32>
    %cst_98 = arith.constant 1.000000e-16 : f32
    %564 = vector.broadcast %cst_98 : f32 to vector<1x256xf32>
    %565 = arith.addf %563, %564 : vector<1x256xf32>
    %566 = math.rsqrt %565 : vector<1x256xf32>
    %567 = arith.mulf %563, %566 : vector<1x256xf32>
    %cst_99 = arith.constant 1.000000e+00 : f32
    %568 = vector.broadcast %cst_99 : f32 to vector<1x256xf32>
    %569 = arith.addf %568, %563 : vector<1x256xf32>
    %570 = tpu.reciprocal %569 : vector<1x256xf32> -> vector<1x256xf32>
    %571 = arith.mulf %567, %570 : vector<1x256xf32>
    %572 = vector.broadcast %571 : vector<1x256xf32> to vector<8x256xf32>
    %573 = arith.mulf %560, %572 : vector<8x256xf32>
    %574 = vector.extract_strided_slice %489 {offsets = [3, 0], sizes = [1, 256], strides = [1, 1]} : vector<16x256xf32> to vector<1x256xf32>
    %575 = vector.broadcast %574 : vector<1x256xf32> to vector<8x256xf32>
    %576 = arith.mulf %575, %12 : vector<8x256xf32>
    %577 = vector.extract_strided_slice %489 {offsets = [7, 0], sizes = [1, 256], strides = [1, 1]} : vector<16x256xf32> to vector<1x256xf32>
    %578 = vector.broadcast %577 : vector<1x256xf32> to vector<8x256xf32>
    %579 = arith.mulf %578, %16 : vector<8x256xf32>
    %580 = arith.addf %576, %579 : vector<8x256xf32>
    %581 = vector.extract_strided_slice %489 {offsets = [11, 0], sizes = [1, 256], strides = [1, 1]} : vector<16x256xf32> to vector<1x256xf32>
    %582 = vector.broadcast %581 : vector<1x256xf32> to vector<8x256xf32>
    %583 = arith.mulf %582, %20 : vector<8x256xf32>
    %584 = arith.addf %580, %583 : vector<8x256xf32>
    %585 = vector.extract_strided_slice %489 {offsets = [15, 0], sizes = [1, 256], strides = [1, 1]} : vector<16x256xf32> to vector<1x256xf32>
    %586 = vector.broadcast %585 : vector<1x256xf32> to vector<8x256xf32>
    %587 = arith.mulf %586, %24 : vector<8x256xf32>
    %588 = arith.addf %584, %587 : vector<8x256xf32>
    %589 = arith.mulf %588, %588 : vector<8x256xf32>
    %cst_100 = arith.constant dense<0.000000e+00> : vector<256xf32>
    %590 = vector.multi_reduction <add>, %589, %cst_100 [0] : vector<8x256xf32> to vector<256xf32>
    %591 = vector.shape_cast %590 : vector<256xf32> to vector<1x256xf32>
    %cst_101 = arith.constant 1.000000e-16 : f32
    %592 = vector.broadcast %cst_101 : f32 to vector<1x256xf32>
    %593 = arith.addf %591, %592 : vector<1x256xf32>
    %594 = math.rsqrt %593 : vector<1x256xf32>
    %595 = arith.mulf %591, %594 : vector<1x256xf32>
    %cst_102 = arith.constant 1.000000e+00 : f32
    %596 = vector.broadcast %cst_102 : f32 to vector<1x256xf32>
    %597 = arith.addf %596, %591 : vector<1x256xf32>
    %598 = tpu.reciprocal %597 : vector<1x256xf32> -> vector<1x256xf32>
    %599 = arith.mulf %595, %598 : vector<1x256xf32>
    %600 = vector.broadcast %599 : vector<1x256xf32> to vector<8x256xf32>
    %601 = arith.mulf %588, %600 : vector<8x256xf32>
    %602 = arith.mulf %517, %9 : vector<8x256xf32>
    %cst_103 = arith.constant dense<0.000000e+00> : vector<256xf32>
    %603 = vector.multi_reduction <add>, %602, %cst_103 [0] : vector<8x256xf32> to vector<256xf32>
    %604 = vector.shape_cast %603 : vector<256xf32> to vector<1x256xf32>
    %605 = arith.mulf %545, %10 : vector<8x256xf32>
    %cst_104 = arith.constant dense<0.000000e+00> : vector<256xf32>
    %606 = vector.multi_reduction <add>, %605, %cst_104 [0] : vector<8x256xf32> to vector<256xf32>
    %607 = vector.shape_cast %606 : vector<256xf32> to vector<1x256xf32>
    %608 = arith.mulf %573, %11 : vector<8x256xf32>
    %cst_105 = arith.constant dense<0.000000e+00> : vector<256xf32>
    %609 = vector.multi_reduction <add>, %608, %cst_105 [0] : vector<8x256xf32> to vector<256xf32>
    %610 = vector.shape_cast %609 : vector<256xf32> to vector<1x256xf32>
    %611 = arith.mulf %601, %12 : vector<8x256xf32>
    %cst_106 = arith.constant dense<0.000000e+00> : vector<256xf32>
    %612 = vector.multi_reduction <add>, %611, %cst_106 [0] : vector<8x256xf32> to vector<256xf32>
    %613 = vector.shape_cast %612 : vector<256xf32> to vector<1x256xf32>
    %614 = arith.mulf %517, %13 : vector<8x256xf32>
    %cst_107 = arith.constant dense<0.000000e+00> : vector<256xf32>
    %615 = vector.multi_reduction <add>, %614, %cst_107 [0] : vector<8x256xf32> to vector<256xf32>
    %616 = vector.shape_cast %615 : vector<256xf32> to vector<1x256xf32>
    %617 = arith.mulf %545, %14 : vector<8x256xf32>
    %cst_108 = arith.constant dense<0.000000e+00> : vector<256xf32>
    %618 = vector.multi_reduction <add>, %617, %cst_108 [0] : vector<8x256xf32> to vector<256xf32>
    %619 = vector.shape_cast %618 : vector<256xf32> to vector<1x256xf32>
    %620 = arith.mulf %573, %15 : vector<8x256xf32>
    %cst_109 = arith.constant dense<0.000000e+00> : vector<256xf32>
    %621 = vector.multi_reduction <add>, %620, %cst_109 [0] : vector<8x256xf32> to vector<256xf32>
    %622 = vector.shape_cast %621 : vector<256xf32> to vector<1x256xf32>
    %623 = arith.mulf %601, %16 : vector<8x256xf32>
    %cst_110 = arith.constant dense<0.000000e+00> : vector<256xf32>
    %624 = vector.multi_reduction <add>, %623, %cst_110 [0] : vector<8x256xf32> to vector<256xf32>
    %625 = vector.shape_cast %624 : vector<256xf32> to vector<1x256xf32>
    %626 = arith.mulf %517, %17 : vector<8x256xf32>
    %cst_111 = arith.constant dense<0.000000e+00> : vector<256xf32>
    %627 = vector.multi_reduction <add>, %626, %cst_111 [0] : vector<8x256xf32> to vector<256xf32>
    %628 = vector.shape_cast %627 : vector<256xf32> to vector<1x256xf32>
    %629 = arith.mulf %545, %18 : vector<8x256xf32>
    %cst_112 = arith.constant dense<0.000000e+00> : vector<256xf32>
    %630 = vector.multi_reduction <add>, %629, %cst_112 [0] : vector<8x256xf32> to vector<256xf32>
    %631 = vector.shape_cast %630 : vector<256xf32> to vector<1x256xf32>
    %632 = arith.mulf %573, %19 : vector<8x256xf32>
    %cst_113 = arith.constant dense<0.000000e+00> : vector<256xf32>
    %633 = vector.multi_reduction <add>, %632, %cst_113 [0] : vector<8x256xf32> to vector<256xf32>
    %634 = vector.shape_cast %633 : vector<256xf32> to vector<1x256xf32>
    %635 = arith.mulf %601, %20 : vector<8x256xf32>
    %cst_114 = arith.constant dense<0.000000e+00> : vector<256xf32>
    %636 = vector.multi_reduction <add>, %635, %cst_114 [0] : vector<8x256xf32> to vector<256xf32>
    %637 = vector.shape_cast %636 : vector<256xf32> to vector<1x256xf32>
    %638 = arith.mulf %517, %21 : vector<8x256xf32>
    %cst_115 = arith.constant dense<0.000000e+00> : vector<256xf32>
    %639 = vector.multi_reduction <add>, %638, %cst_115 [0] : vector<8x256xf32> to vector<256xf32>
    %640 = vector.shape_cast %639 : vector<256xf32> to vector<1x256xf32>
    %641 = arith.mulf %545, %22 : vector<8x256xf32>
    %cst_116 = arith.constant dense<0.000000e+00> : vector<256xf32>
    %642 = vector.multi_reduction <add>, %641, %cst_116 [0] : vector<8x256xf32> to vector<256xf32>
    %643 = vector.shape_cast %642 : vector<256xf32> to vector<1x256xf32>
    %644 = arith.mulf %573, %23 : vector<8x256xf32>
    %cst_117 = arith.constant dense<0.000000e+00> : vector<256xf32>
    %645 = vector.multi_reduction <add>, %644, %cst_117 [0] : vector<8x256xf32> to vector<256xf32>
    %646 = vector.shape_cast %645 : vector<256xf32> to vector<1x256xf32>
    %647 = arith.mulf %601, %24 : vector<8x256xf32>
    %cst_118 = arith.constant dense<0.000000e+00> : vector<256xf32>
    %648 = vector.multi_reduction <add>, %647, %cst_118 [0] : vector<8x256xf32> to vector<256xf32>
    %649 = vector.shape_cast %648 : vector<256xf32> to vector<1x256xf32>
    %650 = tpu.concatenate %604, %607, %610, %613, %616, %619, %622, %625, %628, %631, %634, %637, %640, %643, %646, %649 in 0 : vector<1x256xf32>, vector<1x256xf32>, vector<1x256xf32>, vector<1x256xf32>, vector<1x256xf32>, vector<1x256xf32>, vector<1x256xf32>, vector<1x256xf32>, vector<1x256xf32>, vector<1x256xf32>, vector<1x256xf32>, vector<1x256xf32>, vector<1x256xf32>, vector<1x256xf32>, vector<1x256xf32>, vector<1x256xf32> -> vector<16x256xf32>
    %651 = arith.addf %443, %650 : vector<16x256xf32>
    %652 = vector.extract_strided_slice %651 {offsets = [0, 0], sizes = [4, 256], strides = [1, 1]} : vector<16x256xf32> to vector<4x256xf32>
    %cst_119 = arith.constant dense<0xFF800000> : vector<256xf32>
    %653 = vector.multi_reduction <maximumf>, %652, %cst_119 [0] : vector<4x256xf32> to vector<256xf32>
    %654 = vector.shape_cast %653 : vector<256xf32> to vector<1x256xf32>
    %655 = vector.shape_cast %654 : vector<1x256xf32> to vector<1x256xf32>
    %656 = vector.broadcast %655 : vector<1x256xf32> to vector<4x256xf32>
    %657 = vector.extract_strided_slice %651 {offsets = [4, 0], sizes = [4, 256], strides = [1, 1]} : vector<16x256xf32> to vector<4x256xf32>
    %cst_120 = arith.constant dense<0xFF800000> : vector<256xf32>
    %658 = vector.multi_reduction <maximumf>, %657, %cst_120 [0] : vector<4x256xf32> to vector<256xf32>
    %659 = vector.shape_cast %658 : vector<256xf32> to vector<1x256xf32>
    %660 = vector.shape_cast %659 : vector<1x256xf32> to vector<1x256xf32>
    %661 = vector.broadcast %660 : vector<1x256xf32> to vector<4x256xf32>
    %662 = vector.extract_strided_slice %651 {offsets = [8, 0], sizes = [4, 256], strides = [1, 1]} : vector<16x256xf32> to vector<4x256xf32>
    %cst_121 = arith.constant dense<0xFF800000> : vector<256xf32>
    %663 = vector.multi_reduction <maximumf>, %662, %cst_121 [0] : vector<4x256xf32> to vector<256xf32>
    %664 = vector.shape_cast %663 : vector<256xf32> to vector<1x256xf32>
    %665 = vector.shape_cast %664 : vector<1x256xf32> to vector<1x256xf32>
    %666 = vector.broadcast %665 : vector<1x256xf32> to vector<4x256xf32>
    %667 = vector.extract_strided_slice %651 {offsets = [12, 0], sizes = [4, 256], strides = [1, 1]} : vector<16x256xf32> to vector<4x256xf32>
    %cst_122 = arith.constant dense<0xFF800000> : vector<256xf32>
    %668 = vector.multi_reduction <maximumf>, %667, %cst_122 [0] : vector<4x256xf32> to vector<256xf32>
    %669 = vector.shape_cast %668 : vector<256xf32> to vector<1x256xf32>
    %670 = vector.shape_cast %669 : vector<1x256xf32> to vector<1x256xf32>
    %671 = vector.broadcast %670 : vector<1x256xf32> to vector<4x256xf32>
    %672 = tpu.concatenate %656, %661, %666, %671 in 0 : vector<4x256xf32>, vector<4x256xf32>, vector<4x256xf32>, vector<4x256xf32> -> vector<16x256xf32>
    %673 = arith.subf %651, %672 : vector<16x256xf32>
    %674 = math.exp %673 : vector<16x256xf32>
    %675 = vector.extract_strided_slice %674 {offsets = [0, 0], sizes = [4, 256], strides = [1, 1]} : vector<16x256xf32> to vector<4x256xf32>
    %cst_123 = arith.constant dense<0.000000e+00> : vector<256xf32>
    %676 = vector.multi_reduction <add>, %675, %cst_123 [0] : vector<4x256xf32> to vector<256xf32>
    %677 = vector.shape_cast %676 : vector<256xf32> to vector<1x256xf32>
    %678 = vector.shape_cast %677 : vector<1x256xf32> to vector<1x256xf32>
    %679 = vector.broadcast %678 : vector<1x256xf32> to vector<4x256xf32>
    %680 = vector.extract_strided_slice %674 {offsets = [4, 0], sizes = [4, 256], strides = [1, 1]} : vector<16x256xf32> to vector<4x256xf32>
    %cst_124 = arith.constant dense<0.000000e+00> : vector<256xf32>
    %681 = vector.multi_reduction <add>, %680, %cst_124 [0] : vector<4x256xf32> to vector<256xf32>
    %682 = vector.shape_cast %681 : vector<256xf32> to vector<1x256xf32>
    %683 = vector.shape_cast %682 : vector<1x256xf32> to vector<1x256xf32>
    %684 = vector.broadcast %683 : vector<1x256xf32> to vector<4x256xf32>
    %685 = vector.extract_strided_slice %674 {offsets = [8, 0], sizes = [4, 256], strides = [1, 1]} : vector<16x256xf32> to vector<4x256xf32>
    %cst_125 = arith.constant dense<0.000000e+00> : vector<256xf32>
    %686 = vector.multi_reduction <add>, %685, %cst_125 [0] : vector<4x256xf32> to vector<256xf32>
    %687 = vector.shape_cast %686 : vector<256xf32> to vector<1x256xf32>
    %688 = vector.shape_cast %687 : vector<1x256xf32> to vector<1x256xf32>
    %689 = vector.broadcast %688 : vector<1x256xf32> to vector<4x256xf32>
    %690 = vector.extract_strided_slice %674 {offsets = [12, 0], sizes = [4, 256], strides = [1, 1]} : vector<16x256xf32> to vector<4x256xf32>
    %cst_126 = arith.constant dense<0.000000e+00> : vector<256xf32>
    %691 = vector.multi_reduction <add>, %690, %cst_126 [0] : vector<4x256xf32> to vector<256xf32>
    %692 = vector.shape_cast %691 : vector<256xf32> to vector<1x256xf32>
    %693 = vector.shape_cast %692 : vector<1x256xf32> to vector<1x256xf32>
    %694 = vector.broadcast %693 : vector<1x256xf32> to vector<4x256xf32>
    %695 = tpu.concatenate %679, %684, %689, %694 in 0 : vector<4x256xf32>, vector<4x256xf32>, vector<4x256xf32>, vector<4x256xf32> -> vector<16x256xf32>
    %696 = tpu.reciprocal %695 : vector<16x256xf32> -> vector<16x256xf32>
    %697 = arith.mulf %674, %696 : vector<16x256xf32>
    %698 = vector.extract_strided_slice %697 {offsets = [0, 0], sizes = [1, 256], strides = [1, 1]} : vector<16x256xf32> to vector<1x256xf32>
    %699 = vector.broadcast %698 : vector<1x256xf32> to vector<8x256xf32>
    %700 = arith.mulf %699, %9 : vector<8x256xf32>
    %701 = vector.extract_strided_slice %697 {offsets = [4, 0], sizes = [1, 256], strides = [1, 1]} : vector<16x256xf32> to vector<1x256xf32>
    %702 = vector.broadcast %701 : vector<1x256xf32> to vector<8x256xf32>
    %703 = arith.mulf %702, %13 : vector<8x256xf32>
    %704 = arith.addf %700, %703 : vector<8x256xf32>
    %705 = vector.extract_strided_slice %697 {offsets = [8, 0], sizes = [1, 256], strides = [1, 1]} : vector<16x256xf32> to vector<1x256xf32>
    %706 = vector.broadcast %705 : vector<1x256xf32> to vector<8x256xf32>
    %707 = arith.mulf %706, %17 : vector<8x256xf32>
    %708 = arith.addf %704, %707 : vector<8x256xf32>
    %709 = vector.extract_strided_slice %697 {offsets = [12, 0], sizes = [1, 256], strides = [1, 1]} : vector<16x256xf32> to vector<1x256xf32>
    %710 = vector.broadcast %709 : vector<1x256xf32> to vector<8x256xf32>
    %711 = arith.mulf %710, %21 : vector<8x256xf32>
    %712 = arith.addf %708, %711 : vector<8x256xf32>
    %713 = arith.mulf %712, %712 : vector<8x256xf32>
    %cst_127 = arith.constant dense<0.000000e+00> : vector<256xf32>
    %714 = vector.multi_reduction <add>, %713, %cst_127 [0] : vector<8x256xf32> to vector<256xf32>
    %715 = vector.shape_cast %714 : vector<256xf32> to vector<1x256xf32>
    %cst_128 = arith.constant 1.000000e-16 : f32
    %716 = vector.broadcast %cst_128 : f32 to vector<1x256xf32>
    %717 = arith.addf %715, %716 : vector<1x256xf32>
    %718 = math.rsqrt %717 : vector<1x256xf32>
    %719 = arith.mulf %715, %718 : vector<1x256xf32>
    %cst_129 = arith.constant 1.000000e+00 : f32
    %720 = vector.broadcast %cst_129 : f32 to vector<1x256xf32>
    %721 = arith.addf %720, %715 : vector<1x256xf32>
    %722 = tpu.reciprocal %721 : vector<1x256xf32> -> vector<1x256xf32>
    %723 = arith.mulf %719, %722 : vector<1x256xf32>
    %724 = vector.broadcast %723 : vector<1x256xf32> to vector<8x256xf32>
    %725 = arith.mulf %712, %724 : vector<8x256xf32>
    %726 = vector.extract_strided_slice %697 {offsets = [1, 0], sizes = [1, 256], strides = [1, 1]} : vector<16x256xf32> to vector<1x256xf32>
    %727 = vector.broadcast %726 : vector<1x256xf32> to vector<8x256xf32>
    %728 = arith.mulf %727, %10 : vector<8x256xf32>
    %729 = vector.extract_strided_slice %697 {offsets = [5, 0], sizes = [1, 256], strides = [1, 1]} : vector<16x256xf32> to vector<1x256xf32>
    %730 = vector.broadcast %729 : vector<1x256xf32> to vector<8x256xf32>
    %731 = arith.mulf %730, %14 : vector<8x256xf32>
    %732 = arith.addf %728, %731 : vector<8x256xf32>
    %733 = vector.extract_strided_slice %697 {offsets = [9, 0], sizes = [1, 256], strides = [1, 1]} : vector<16x256xf32> to vector<1x256xf32>
    %734 = vector.broadcast %733 : vector<1x256xf32> to vector<8x256xf32>
    %735 = arith.mulf %734, %18 : vector<8x256xf32>
    %736 = arith.addf %732, %735 : vector<8x256xf32>
    %737 = vector.extract_strided_slice %697 {offsets = [13, 0], sizes = [1, 256], strides = [1, 1]} : vector<16x256xf32> to vector<1x256xf32>
    %738 = vector.broadcast %737 : vector<1x256xf32> to vector<8x256xf32>
    %739 = arith.mulf %738, %22 : vector<8x256xf32>
    %740 = arith.addf %736, %739 : vector<8x256xf32>
    %741 = arith.mulf %740, %740 : vector<8x256xf32>
    %cst_130 = arith.constant dense<0.000000e+00> : vector<256xf32>
    %742 = vector.multi_reduction <add>, %741, %cst_130 [0] : vector<8x256xf32> to vector<256xf32>
    %743 = vector.shape_cast %742 : vector<256xf32> to vector<1x256xf32>
    %cst_131 = arith.constant 1.000000e-16 : f32
    %744 = vector.broadcast %cst_131 : f32 to vector<1x256xf32>
    %745 = arith.addf %743, %744 : vector<1x256xf32>
    %746 = math.rsqrt %745 : vector<1x256xf32>
    %747 = arith.mulf %743, %746 : vector<1x256xf32>
    %cst_132 = arith.constant 1.000000e+00 : f32
    %748 = vector.broadcast %cst_132 : f32 to vector<1x256xf32>
    %749 = arith.addf %748, %743 : vector<1x256xf32>
    %750 = tpu.reciprocal %749 : vector<1x256xf32> -> vector<1x256xf32>
    %751 = arith.mulf %747, %750 : vector<1x256xf32>
    %752 = vector.broadcast %751 : vector<1x256xf32> to vector<8x256xf32>
    %753 = arith.mulf %740, %752 : vector<8x256xf32>
    %754 = vector.extract_strided_slice %697 {offsets = [2, 0], sizes = [1, 256], strides = [1, 1]} : vector<16x256xf32> to vector<1x256xf32>
    %755 = vector.broadcast %754 : vector<1x256xf32> to vector<8x256xf32>
    %756 = arith.mulf %755, %11 : vector<8x256xf32>
    %757 = vector.extract_strided_slice %697 {offsets = [6, 0], sizes = [1, 256], strides = [1, 1]} : vector<16x256xf32> to vector<1x256xf32>
    %758 = vector.broadcast %757 : vector<1x256xf32> to vector<8x256xf32>
    %759 = arith.mulf %758, %15 : vector<8x256xf32>
    %760 = arith.addf %756, %759 : vector<8x256xf32>
    %761 = vector.extract_strided_slice %697 {offsets = [10, 0], sizes = [1, 256], strides = [1, 1]} : vector<16x256xf32> to vector<1x256xf32>
    %762 = vector.broadcast %761 : vector<1x256xf32> to vector<8x256xf32>
    %763 = arith.mulf %762, %19 : vector<8x256xf32>
    %764 = arith.addf %760, %763 : vector<8x256xf32>
    %765 = vector.extract_strided_slice %697 {offsets = [14, 0], sizes = [1, 256], strides = [1, 1]} : vector<16x256xf32> to vector<1x256xf32>
    %766 = vector.broadcast %765 : vector<1x256xf32> to vector<8x256xf32>
    %767 = arith.mulf %766, %23 : vector<8x256xf32>
    %768 = arith.addf %764, %767 : vector<8x256xf32>
    %769 = arith.mulf %768, %768 : vector<8x256xf32>
    %cst_133 = arith.constant dense<0.000000e+00> : vector<256xf32>
    %770 = vector.multi_reduction <add>, %769, %cst_133 [0] : vector<8x256xf32> to vector<256xf32>
    %771 = vector.shape_cast %770 : vector<256xf32> to vector<1x256xf32>
    %cst_134 = arith.constant 1.000000e-16 : f32
    %772 = vector.broadcast %cst_134 : f32 to vector<1x256xf32>
    %773 = arith.addf %771, %772 : vector<1x256xf32>
    %774 = math.rsqrt %773 : vector<1x256xf32>
    %775 = arith.mulf %771, %774 : vector<1x256xf32>
    %cst_135 = arith.constant 1.000000e+00 : f32
    %776 = vector.broadcast %cst_135 : f32 to vector<1x256xf32>
    %777 = arith.addf %776, %771 : vector<1x256xf32>
    %778 = tpu.reciprocal %777 : vector<1x256xf32> -> vector<1x256xf32>
    %779 = arith.mulf %775, %778 : vector<1x256xf32>
    %780 = vector.broadcast %779 : vector<1x256xf32> to vector<8x256xf32>
    %781 = arith.mulf %768, %780 : vector<8x256xf32>
    %782 = vector.extract_strided_slice %697 {offsets = [3, 0], sizes = [1, 256], strides = [1, 1]} : vector<16x256xf32> to vector<1x256xf32>
    %783 = vector.broadcast %782 : vector<1x256xf32> to vector<8x256xf32>
    %784 = arith.mulf %783, %12 : vector<8x256xf32>
    %785 = vector.extract_strided_slice %697 {offsets = [7, 0], sizes = [1, 256], strides = [1, 1]} : vector<16x256xf32> to vector<1x256xf32>
    %786 = vector.broadcast %785 : vector<1x256xf32> to vector<8x256xf32>
    %787 = arith.mulf %786, %16 : vector<8x256xf32>
    %788 = arith.addf %784, %787 : vector<8x256xf32>
    %789 = vector.extract_strided_slice %697 {offsets = [11, 0], sizes = [1, 256], strides = [1, 1]} : vector<16x256xf32> to vector<1x256xf32>
    %790 = vector.broadcast %789 : vector<1x256xf32> to vector<8x256xf32>
    %791 = arith.mulf %790, %20 : vector<8x256xf32>
    %792 = arith.addf %788, %791 : vector<8x256xf32>
    %793 = vector.extract_strided_slice %697 {offsets = [15, 0], sizes = [1, 256], strides = [1, 1]} : vector<16x256xf32> to vector<1x256xf32>
    %794 = vector.broadcast %793 : vector<1x256xf32> to vector<8x256xf32>
    %795 = arith.mulf %794, %24 : vector<8x256xf32>
    %796 = arith.addf %792, %795 : vector<8x256xf32>
    %797 = arith.mulf %796, %796 : vector<8x256xf32>
    %cst_136 = arith.constant dense<0.000000e+00> : vector<256xf32>
    %798 = vector.multi_reduction <add>, %797, %cst_136 [0] : vector<8x256xf32> to vector<256xf32>
    %799 = vector.shape_cast %798 : vector<256xf32> to vector<1x256xf32>
    %cst_137 = arith.constant 1.000000e-16 : f32
    %800 = vector.broadcast %cst_137 : f32 to vector<1x256xf32>
    %801 = arith.addf %799, %800 : vector<1x256xf32>
    %802 = math.rsqrt %801 : vector<1x256xf32>
    %803 = arith.mulf %799, %802 : vector<1x256xf32>
    %cst_138 = arith.constant 1.000000e+00 : f32
    %804 = vector.broadcast %cst_138 : f32 to vector<1x256xf32>
    %805 = arith.addf %804, %799 : vector<1x256xf32>
    %806 = tpu.reciprocal %805 : vector<1x256xf32> -> vector<1x256xf32>
    %807 = arith.mulf %803, %806 : vector<1x256xf32>
    %808 = vector.broadcast %807 : vector<1x256xf32> to vector<8x256xf32>
    %809 = arith.mulf %796, %808 : vector<8x256xf32>
    %c0_139 = arith.constant 0 : index
    %c0_140 = arith.constant 0 : index
    %810 = vector.load %arg6[%c0_139, %c0_140] : memref<32x256xf32, #tpu.memory_space<vmem>>, vector<8x256xf32>
    tpu.vector_store %arg6[%c0_139, %c0_140], %725 {strides = array<i32>} : memref<32x256xf32, #tpu.memory_space<vmem>>, vector<8x256xf32>,
    %c8 = arith.constant 8 : index
    %c0_141 = arith.constant 0 : index
    %811 = vector.load %arg6[%c8, %c0_141] : memref<32x256xf32, #tpu.memory_space<vmem>>, vector<8x256xf32>
    tpu.vector_store %arg6[%c8, %c0_141], %753 {strides = array<i32>} : memref<32x256xf32, #tpu.memory_space<vmem>>, vector<8x256xf32>,
    %c16 = arith.constant 16 : index
    %c0_142 = arith.constant 0 : index
    %812 = vector.load %arg6[%c16, %c0_142] : memref<32x256xf32, #tpu.memory_space<vmem>>, vector<8x256xf32>
    tpu.vector_store %arg6[%c16, %c0_142], %781 {strides = array<i32>} : memref<32x256xf32, #tpu.memory_space<vmem>>, vector<8x256xf32>,
    %c24 = arith.constant 24 : index
    %c0_143 = arith.constant 0 : index
    %813 = vector.load %arg6[%c24, %c0_143] : memref<32x256xf32, #tpu.memory_space<vmem>>, vector<8x256xf32>
    tpu.vector_store %arg6[%c24, %c0_143], %809 {strides = array<i32>} : memref<32x256xf32, #tpu.memory_space<vmem>>, vector<8x256xf32>,
    return
  }
  func.func @transform_0(%arg0: i32) -> (i32, i32) {
    %c0_i32 = arith.constant 0 : i32
    %c0_i32_0 = arith.constant 0 : i32
    return %c0_i32, %arg0 : i32, i32
  }
  func.func @transform_1(%arg0: i32) -> (i32, i32) {
    %c0_i32 = arith.constant 0 : i32
    %c0_i32_0 = arith.constant 0 : i32
    return %c0_i32, %arg0 : i32, i32
  }
  func.func @transform_2(%arg0: i32) -> (i32, i32) {
    %c0_i32 = arith.constant 0 : i32
    %c0_i32_0 = arith.constant 0 : i32
    %c0_i32_1 = arith.constant 0 : i32
    return %c0_i32, %c0_i32_0 : i32, i32
  }
  func.func @transform_3(%arg0: i32) -> (i32, i32) {
    %c0_i32 = arith.constant 0 : i32
    %c0_i32_0 = arith.constant 0 : i32
    %c0_i32_1 = arith.constant 0 : i32
    return %c0_i32, %c0_i32_0 : i32, i32
  }
  func.func @transform_4(%arg0: i32) -> (i32, i32) {
    %c0_i32 = arith.constant 0 : i32
    %c0_i32_0 = arith.constant 0 : i32
    %c0_i32_1 = arith.constant 0 : i32
    return %c0_i32, %c0_i32_0 : i32, i32
  }
  func.func @transform_5(%arg0: i32) -> (i32, i32) {
    %c0_i32 = arith.constant 0 : i32
    %c0_i32_0 = arith.constant 0 : i32
    return %c0_i32, %arg0 : i32, i32
  }
}

</mosaic_0001>

<llo_original>
// kernel: tpu_custom_call.1
$region0: #{tpu_custom_call.1}
  #allocation0 [shape = 'u32[]', space=smem, size = 0x4, offset = 0x4, fixed_abs, tag = 'smem constant byte address 0x4 - core index']
  #allocation1 [shape = 'u32[144,128]{1,0:T(1,128)}', space=vmem, size = 0x12000, scoped, tag = 'internal scratch']
  %s0 = inlined_call_operand.hbm [shape: bf16[288,1024], index: 0, kind: input, shape index: {}]
  %s1 = inlined_call_operand.hbm [shape: bf16[288,1024], index: 1, kind: input, shape index: {}]
  %s2 = inlined_call_operand.vmem [shape: bf16[128,288], index: 2, kind: input, shape index: {}]
  %s3 = inlined_call_operand.vmem [shape: bf16[128,288], index: 3, kind: input, shape index: {}]
  %s4 = inlined_call_operand.vmem [shape: f32[16,1], index: 4, kind: input, shape index: {}]
  %s5 = inlined_call_operand.hbm [shape: f32[32,1024], index: 5, kind: output, shape index: {}]
  %s6 = sld [smem:[#allocation0]]
  $region61: #{tpu_custom_call.1} parent=0
    _
  %s8 = ssub.s32 1, %s6
  %s9 = scalar_select 0, %s8, %s6
  $region1: #{tpu_custom_call.1} parent=0
    #allocation2 [shape = 'u8[294912]{0}', space=vmem, size = 0x48000, scoped, tag = 'input window, operand 0']
    #allocation3 [shape = 's32[2]{0}', space=sflag, size = 0x8, scoped, tag = 'scoped memory for tpu_custom_call.1']
    #allocation4 [shape = 's32[2]{0}', space=sflag, size = 0x8, scoped, tag = 'scoped memory for tpu_custom_call.1']
    #allocation5 [shape = 'u8[294912]{0}', space=vmem, size = 0x48000, scoped, tag = 'input window, operand 1']
    #allocation6 [shape = 's32[2]{0}', space=sflag, size = 0x8, scoped, tag = 'scoped memory for tpu_custom_call.1']
    #allocation7 [shape = 'u8[65536]{0}', space=vmem, size = 0x10000, scoped, tag = 'output window, operand 0']
    %10 = vsyncpa [#allocation3], 0
    %s11 = scalar_lea.sflag [#allocation3], 1
    %12 = vsyncpa %s11, 0
    %13 = vsyncpa [#allocation6], 0
    %s14 = scalar_lea.sflag [#allocation6], 1
    %15 = vsyncpa %s14, 0
    %16 = vsyncpa [#allocation4], 0
    %s17 = scalar_lea.sflag [#allocation4], 1
    %18 = vsyncpa %s17, 0
    loop: start=0, step=1, limit=6
    $region2: #{tpu_custom_call.1} parent=1 // loop_pre_header
      _
    $region3: #{tpu_custom_call.1} parent=1 // loop_header
      %s20 = sphi 0, %s24
      %p21 = scmp.ge.s32.totalorder %s20, 6
      %s30 = sphi 0, %s32
      %s33 = sphi 0, %s30
      %s34 = sphi 0, %s33
      %s50 = sphi 0, %s34
      %s56 = sphi 0, %s58
      %s59 = sphi 0, %s56
      %s60 = sphi 0, %s59
      %s76 = sphi 0, %s60
      %s80 = sphi 0, %s80
      %s82 = sphi 0, %s80
      %s83 = sphi 0, %s82
      %s97 = sphi 0, %s83
      %s101 = sphi 0, %s101
      %s103 = sphi 0, %s101
      %s104 = sphi 0, %s103
      %s118 = sphi 0, %s104
      %s122 = sphi 0, %s122
      %s124 = sphi 0, %s122
      %s125 = sphi 0, %s124
      %s139 = sphi 0, %s125
      %s145 = sphi 0, %s147
      %s148 = sphi 0, %s145
      %s149 = sphi 0, %s148
      %s165 = sphi 0, %s149
    $region4: #{tpu_custom_call.1} parent=1 // loop_header_branch
      %23 = sbr.rel (%p21) target = $region8
    $region5: #{tpu_custom_call.1} parent=1 // loop_body
      %s25 = ssub.s32 %s20, 1
      %s26 = ssub.s32 %s20, 2
      %s27 = sadd.s32 %s20, 1
      %s28 = ssub.s32 %s20, %s27
      %p29 = scmp.eq.s32.totalorder %s28, 0
      %s31 = sadd.s32 %s30, 1
      %s32 = scalar_select %p29, %s30, %s31
      %p35 = pneg %p29
      %p36 = scmp.eq.s32.totalorder %s20, 3
      %p37 = por %p35, %p36
      %p38 = scmp.ne.s32.totalorder %s30, %s33
      %p39 = scmp.eq.s32.totalorder %s20, 0
      %p40 = por %p38, %p39
      %p41 = scmp.ne.s32.totalorder %s30, %s33
      %p42 = scmp.eq.s32.totalorder %s25, 3
      %p43 = por %p41, %p42
      %p44 = scmp.ne.s32.totalorder %s33, %s34
      %p45 = scmp.eq.s32.totalorder %s25, 0
      %p46 = por %p44, %p45
      %p47 = scmp.ne.s32.totalorder %s33, %s34
      %p48 = scmp.eq.s32.totalorder %s26, 3
      %p49 = por %p47, %p48
      %p51 = scmp.ne.s32.totalorder %s34, %s50
      %p52 = scmp.eq.s32.totalorder %s26, 0
      %p53 = por %p51, %p52
      %s54 = ssub.s32 %s20, %s27
      %p55 = scmp.eq.s32.totalorder %s54, 0
      %s57 = sadd.s32 %s56, 1
      %s58 = scalar_select %p55, %s56, %s57
      %p61 = pneg %p55
      %p62 = scmp.eq.s32.totalorder %s20, 3
      %p63 = por %p61, %p62
      %p64 = scmp.ne.s32.totalorder %s56, %s59
      %p65 = scmp.eq.s32.totalorder %s20, 0
      %p66 = por %p64, %p65
      %p67 = scmp.ne.s32.totalorder %s56, %s59
      %p68 = scmp.eq.s32.totalorder %s25, 3
      %p69 = por %p67, %p68
      %p70 = scmp.ne.s32.totalorder %s59, %s60
      %p71 = scmp.eq.s32.totalorder %s25, 0
      %p72 = por %p70, %p71
      %p73 = scmp.ne.s32.totalorder %s59, %s60
      %p74 = scmp.eq.s32.totalorder %s26, 3
      %p75 = por %p73, %p74
      %p77 = scmp.ne.s32.totalorder %s60, %s76
      %p78 = scmp.eq.s32.totalorder %s26, 0
      %p79 = por %p77, %p78
      %s81 = sadd.s32 %s80, 1
      %p84 = scmp.eq.s32.totalorder %s20, 3
      %p85 = scmp.ne.s32.totalorder %s80, %s82
      %p86 = scmp.eq.s32.totalorder %s20, 0
      %p87 = por %p85, %p86
      %p88 = scmp.ne.s32.totalorder %s80, %s82
      %p89 = scmp.eq.s32.totalorder %s25, 3
      %p90 = por %p88, %p89
      %p91 = scmp.ne.s32.totalorder %s82, %s83
      %p92 = scmp.eq.s32.totalorder %s25, 0
      %p93 = por %p91, %p92
      %p94 = scmp.ne.s32.totalorder %s82, %s83
      %p95 = scmp.eq.s32.totalorder %s26, 3
      %p96 = por %p94, %p95
      %p98 = scmp.ne.s32.totalorder %s83, %s97
      %p99 = scmp.eq.s32.totalorder %s26, 0
      %p100 = por %p98, %p99
      %s102 = sadd.s32 %s101, 1
      %p105 = scmp.eq.s32.totalorder %s20, 3
      %p106 = scmp.ne.s32.totalorder %s101, %s103
      %p107 = scmp.eq.s32.totalorder %s20, 0
      %p108 = por %p106, %p107
      %p109 = scmp.ne.s32.totalorder %s101, %s103
      %p110 = scmp.eq.s32.totalorder %s25, 3
      %p111 = por %p109, %p110
      %p112 = scmp.ne.s32.totalorder %s103, %s104
      %p113 = scmp.eq.s32.totalorder %s25, 0
      %p114 = por %p112, %p113
      %p115 = scmp.ne.s32.totalorder %s103, %s104
      %p116 = scmp.eq.s32.totalorder %s26, 3
      %p117 = por %p115, %p116
      %p119 = scmp.ne.s32.totalorder %s104, %s118
      %p120 = scmp.eq.s32.totalorder %s26, 0
      %p121 = por %p119, %p120
      %s123 = sadd.s32 %s122, 1
      %p126 = scmp.eq.s32.totalorder %s20, 3
      %p127 = scmp.ne.s32.totalorder %s122, %s124
      %p128 = scmp.eq.s32.totalorder %s20, 0
      %p129 = por %p127, %p128
      %p130 = scmp.ne.s32.totalorder %s122, %s124
      %p131 = scmp.eq.s32.totalorder %s25, 3
      %p132 = por %p130, %p131
      %p133 = scmp.ne.s32.totalorder %s124, %s125
      %p134 = scmp.eq.s32.totalorder %s25, 0
      %p135 = por %p133, %p134
      %p136 = scmp.ne.s32.totalorder %s124, %s125
      %p137 = scmp.eq.s32.totalorder %s26, 3
      %p138 = por %p136, %p137
      %p140 = scmp.ne.s32.totalorder %s125, %s139
      %p141 = scmp.eq.s32.totalorder %s26, 0
      %p142 = por %p140, %p141
      %s143 = ssub.s32 %s20, %s27
      %p144 = scmp.eq.s32.totalorder %s143, 0
      %s146 = sadd.s32 %s145, 1
      %s147 = scalar_select %p144, %s145, %s146
      %p150 = pneg %p144
      %p151 = scmp.eq.s32.totalorder %s20, 3
      %p152 = por %p150, %p151
      %p153 = scmp.ne.s32.totalorder %s145, %s148
      %p154 = scmp.eq.s32.totalorder %s20, 0
      %p155 = por %p153, %p154
      %p156 = scmp.ne.s32.totalorder %s145, %s148
      %p157 = scmp.eq.s32.totalorder %s25, 3
      %p158 = por %p156, %p157
      %p159 = scmp.ne.s32.totalorder %s148, %s149
      %p160 = scmp.eq.s32.totalorder %s25, 0
      %p161 = por %p159, %p160
      %p162 = scmp.ne.s32.totalorder %s148, %s149
      %p163 = scmp.eq.s32.totalorder %s26, 3
      %p164 = por %p162, %p163
      %p166 = scmp.ne.s32.totalorder %s149, %s165
      %p167 = scmp.eq.s32.totalorder %s26, 0
      %p168 = por %p166, %p167
      %p169 = scmp.le.s32.totalorder 1, %s20
      %p170 = scmp.lt.s32.totalorder %s20, 5
      %p171 = pnand %p169, %p170
      %p172 = pneg %p171
      // Predicated region
      $region9: #{tpu_custom_call.1} parent=5 // pred_check
        _
      $region10: #{tpu_custom_call.1} parent=5 // pred_check_branch
        %174 = sbr.rel (%p171) target = $region12
      $region11: #{tpu_custom_call.1} parent=5 // pred_region
        %s175 = ssub.s32 %s20, 1
        // Predicated region
        $region13: #{tpu_custom_call.1} parent=11 // pred_check
          %p176 = pneg %p93
        $region14: #{tpu_custom_call.1} parent=11 // pred_check_branch
          %178 = sbr.rel (%p176) target = $region16
        $region15: #{tpu_custom_call.1} parent=11 // pred_region
          _
        $region16: #{tpu_custom_call.1} parent=11 // pred_fallthru
          _
        // Predicated region
        $region17: #{tpu_custom_call.1} parent=11 // pred_check
          %p179 = pneg %p114
        $region18: #{tpu_custom_call.1} parent=11 // pred_check_branch
          %181 = sbr.rel (%p179) target = $region20
        $region19: #{tpu_custom_call.1} parent=11 // pred_region
          _
        $region20: #{tpu_custom_call.1} parent=11 // pred_fallthru
          _
        // Predicated region
        $region21: #{tpu_custom_call.1} parent=11 // pred_check
          %p182 = pneg %p135
        $region22: #{tpu_custom_call.1} parent=11 // pred_check_branch
          %184 = sbr.rel (%p182) target = $region24
        $region23: #{tpu_custom_call.1} parent=11 // pred_region
          _
        $region24: #{tpu_custom_call.1} parent=11 // pred_fallthru
          _
      $region12: #{tpu_custom_call.1} parent=5 // pred_fallthru
        _
      %p185 = scmp.lt.s32.totalorder %s20, 4
      // Predicated region
      $region25: #{tpu_custom_call.1} parent=5 // pred_check
        %p186 = pneg %p185
      $region26: #{tpu_custom_call.1} parent=5 // pred_check_branch
        %188 = sbr.rel (%p186) target = $region28
      $region27: #{tpu_custom_call.1} parent=5 // pred_region
        // Predicated region
        $region29: #{tpu_custom_call.1} parent=27 // pred_check
          %p189 = pneg %p40
        $region30: #{tpu_custom_call.1} parent=27 // pred_check_branch
          %191 = sbr.rel (%p189) target = $region32
        $region31: #{tpu_custom_call.1} parent=27 // pred_region
          %s192 = sand.u32 %s30, 1
          %s193 = scalar_lea.sflag [#allocation3], %s192
          %s194 = sand.u32 %s30, 1
          %s195 = smul.addr %s194, 288
          %s196 = scalar_lea.vmem [#allocation2], %s195
          %s197 = smul.u32 2, %s20
          %s199 = ssub.s32 4608, 4608
          %200 = vsyncadd %s193, %s199
          %s201 = smul.addr %s197, 64
          %s202 = scalar_lea.hbm %s0, %s201
          %s203 = sshll.u32 %s196, 4
          %s204 = int_to_ptr.vmem [resolvable:$true] %s203
          %209 = dma.hbm_to_vmem [thread:$0]  %s202, 4608, %s204, %s193, 512, 128, 8
        $region32: #{tpu_custom_call.1} parent=27 // pred_fallthru
          _
        // Predicated region
        $region33: #{tpu_custom_call.1} parent=27 // pred_check
          %p210 = pneg %p66
        $region34: #{tpu_custom_call.1} parent=27 // pred_check_branch
          %212 = sbr.rel (%p210) target = $region36
        $region35: #{tpu_custom_call.1} parent=27 // pred_region
          %s213 = sand.u32 %s56, 1
          %s214 = scalar_lea.sflag [#allocation6], %s213
          %s215 = sand.u32 %s56, 1
          %s216 = smul.addr %s215, 288
          %s217 = scalar_lea.vmem [#allocation5], %s216
          %s218 = smul.u32 2, %s20
          %s220 = ssub.s32 4608, 4608
          %221 = vsyncadd %s214, %s220
          %s222 = smul.addr %s218, 64
          %s223 = scalar_lea.hbm %s1, %s222
          %s224 = sshll.u32 %s217, 4
          %s225 = int_to_ptr.vmem [resolvable:$true] %s224
          %230 = dma.hbm_to_vmem [thread:$0]  %s223, 4608, %s225, %s214, 512, 128, 8
        $region36: #{tpu_custom_call.1} parent=27 // pred_fallthru
          _
      $region28: #{tpu_custom_call.1} parent=5 // pred_fallthru
        _
      %p231 = scmp.le.s32.totalorder 1, %s20
      %p232 = scmp.lt.s32.totalorder %s20, 5
      %p233 = pnand %p231, %p232
      %p234 = pneg %p233
      // Predicated region
      $region37: #{tpu_custom_call.1} parent=5 // pred_check
        _
      $region38: #{tpu_custom_call.1} parent=5 // pred_check_branch
        %236 = sbr.rel (%p233) target = $region40
      $region39: #{tpu_custom_call.1} parent=5 // pred_region
        %s237 = ssub.s32 %s20, 1
        %s238 = sand.u32 %s33, 1
        %s239 = scalar_lea.sflag [#allocation3], %s238
        %s240 = sand.u32 %s33, 1
        %s241 = smul.addr %s240, 288
        %s242 = scalar_lea.vmem [#allocation2], %s241
        // Predicated region
        $region41: #{tpu_custom_call.1} parent=39 // pred_check
          %p243 = pneg %p46
        $region42: #{tpu_custom_call.1} parent=39 // pred_check_branch
          %245 = sbr.rel (%p243) target = $region44
        $region43: #{tpu_custom_call.1} parent=39 // pred_region
          %246 = dma.done %s239, 4608
        $region44: #{tpu_custom_call.1} parent=39 // pred_fallthru
          _
        %s247 = sand.u32 %s59, 1
        %s248 = scalar_lea.sflag [#allocation6], %s247
        %s249 = sand.u32 %s59, 1
        %s250 = smul.addr %s249, 288
        %s251 = scalar_lea.vmem [#allocation5], %s250
        // Predicated region
        $region45: #{tpu_custom_call.1} parent=39 // pred_check
          %p252 = pneg %p72
        $region46: #{tpu_custom_call.1} parent=39 // pred_check_branch
          %254 = sbr.rel (%p252) target = $region48
        $region47: #{tpu_custom_call.1} parent=39 // pred_region
          %255 = dma.done %s248, 4608
        $region48: #{tpu_custom_call.1} parent=39 // pred_fallthru
          _
        %s256 = sand.u32 %s33, 1
        %s257 = scalar_lea.sflag [#allocation3], %s256
        %s258 = sand.u32 %s33, 1
        %s259 = smul.addr %s258, 288
        %s260 = scalar_lea.vmem [#allocation2], %s259
        %p261 = pneg %p46
        %p262 = pneg %p43
        %s263 = sand.u32 %s59, 1
        %s264 = scalar_lea.sflag [#allocation6], %s263
        %s265 = sand.u32 %s59, 1
        %s266 = smul.addr %s265, 288
        %s267 = scalar_lea.vmem [#allocation5], %s266
        %p268 = pneg %p72
        %p269 = pneg %p69
        %p270 = pneg %p93
        %p271 = pneg %p90
        %p272 = pneg %p114
        %p273 = pneg %p111
        %p274 = pneg %p135
        %p275 = pneg %p132
        %p276 = pneg %p161
        %p277 = pneg %p158
        %s278 = sand.u32 %s148, 1
        %s279 = scalar_lea.sflag [#allocation4], %s278
        %s280 = sand.u32 %s148, 1
        %s281 = smul.addr %s280, 64
        %s282 = scalar_lea.vmem [#allocation7], %s281
        %s283 = smul.u32 2, %s25
        %s284 = smul.u32 2, %s25
        %s285 = smul.u32 2, %s25
        %v287 = vld [vmem:[%s242] sm:$0xff]
        %v288 = vld [vmem:[%s242 + $0x8] sm:$0xff]
        %v289 = vld [vmem:[%s242 + $0x10] sm:$0xff]
        %v290 = vld [vmem:[%s242 + $0x18] sm:$0xff]
        %v291 = vld [vmem:[%s242 + $0x20] sm:$0xff]
        %v292 = vld [vmem:[%s242 + $0x28] sm:$0xff]
        %v293 = vld [vmem:[%s242 + $0x30] sm:$0xff]
        %v294 = vld [vmem:[%s242 + $0x38] sm:$0xff]
        %v295 = vld [vmem:[%s242 + $0x40] sm:$0xff]
        %v296 = vld [vmem:[%s242 + $0x48] sm:$0xff]
        %v297 = vld [vmem:[%s242 + $0x50] sm:$0xff]
        %v298 = vld [vmem:[%s242 + $0x58] sm:$0xff]
        %v299 = vld [vmem:[%s242 + $0x60] sm:$0xff]
        %v300 = vld [vmem:[%s242 + $0x68] sm:$0xff]
        %v301 = vld [vmem:[%s242 + $0x70] sm:$0xff]
        %v302 = vld [vmem:[%s242 + $0x78] sm:$0xff]
        %v303 = vld [vmem:[%s242 + $0x80] sm:$0xff]
        %v304 = vld [vmem:[%s242 + $0x88] sm:$0xff]
        %v305 = vld [vmem:[%s242 + $0x90] sm:$0xff]
        %v306 = vld [vmem:[%s242 + $0x98] sm:$0xff]
        %v307 = vld [vmem:[%s242 + $0xa0] sm:$0xff]
        %v308 = vld [vmem:[%s242 + $0xa8] sm:$0xff]
        %v309 = vld [vmem:[%s242 + $0xb0] sm:$0xff]
        %v310 = vld [vmem:[%s242 + $0xb8] sm:$0xff]
        %v311 = vld [vmem:[%s242 + $0xc0] sm:$0xff]
        %v312 = vld [vmem:[%s242 + $0xc8] sm:$0xff]
        %v313 = vld [vmem:[%s242 + $0xd0] sm:$0xff]
        %v314 = vld [vmem:[%s242 + $0xd8] sm:$0xff]
        %v315 = vld [vmem:[%s242 + $0xe0] sm:$0xff]
        %v316 = vld [vmem:[%s242 + $0xe8] sm:$0xff]
        %v317 = vld [vmem:[%s242 + $0xf0] sm:$0xff]
        %v318 = vld [vmem:[%s242 + $0xf8] sm:$0xff]
        %v319 = vld [vmem:[%s242 + $0x100] sm:$0xff]
        %v320 = vld [vmem:[%s242 + $0x108] sm:$0xff]
        %v321 = vld [vmem:[%s242 + $0x110] sm:$0xff]
        %v322 = vld [vmem:[%s242 + $0x118] sm:$0xff]
        %v323 = vld [vmem:[%s251] sm:$0xff]
        %v324 = vld [vmem:[%s251 + $0x8] sm:$0xff]
        %v325 = vld [vmem:[%s251 + $0x10] sm:$0xff]
        %v326 = vld [vmem:[%s251 + $0x18] sm:$0xff]
        %v327 = vld [vmem:[%s251 + $0x20] sm:$0xff]
        %v328 = vld [vmem:[%s251 + $0x28] sm:$0xff]
        %v329 = vld [vmem:[%s251 + $0x30] sm:$0xff]
        %v330 = vld [vmem:[%s251 + $0x38] sm:$0xff]
        %v331 = vld [vmem:[%s251 + $0x40] sm:$0xff]
        %v332 = vld [vmem:[%s251 + $0x48] sm:$0xff]
        %v333 = vld [vmem:[%s251 + $0x50] sm:$0xff]
        %v334 = vld [vmem:[%s251 + $0x58] sm:$0xff]
        %v335 = vld [vmem:[%s251 + $0x60] sm:$0xff]
        %v336 = vld [vmem:[%s251 + $0x68] sm:$0xff]
        %v337 = vld [vmem:[%s251 + $0x70] sm:$0xff]
        %v338 = vld [vmem:[%s251 + $0x78] sm:$0xff]
        %v339 = vld [vmem:[%s251 + $0x80] sm:$0xff]
        %v340 = vld [vmem:[%s251 + $0x88] sm:$0xff]
        %v341 = vld [vmem:[%s251 + $0x90] sm:$0xff]
        %v342 = vld [vmem:[%s251 + $0x98] sm:$0xff]
        %v343 = vld [vmem:[%s251 + $0xa0] sm:$0xff]
        %v344 = vld [vmem:[%s251 + $0xa8] sm:$0xff]
        %v345 = vld [vmem:[%s251 + $0xb0] sm:$0xff]
        %v346 = vld [vmem:[%s251 + $0xb8] sm:$0xff]
        %v347 = vld [vmem:[%s251 + $0xc0] sm:$0xff]
        %v348 = vld [vmem:[%s251 + $0xc8] sm:$0xff]
        %v349 = vld [vmem:[%s251 + $0xd0] sm:$0xff]
        %v350 = vld [vmem:[%s251 + $0xd8] sm:$0xff]
        %v351 = vld [vmem:[%s251 + $0xe0] sm:$0xff]
        %v352 = vld [vmem:[%s251 + $0xe8] sm:$0xff]
        %v353 = vld [vmem:[%s251 + $0xf0] sm:$0xff]
        %v354 = vld [vmem:[%s251 + $0xf8] sm:$0xff]
        %v355 = vld [vmem:[%s251 + $0x100] sm:$0xff]
        %v356 = vld [vmem:[%s251 + $0x108] sm:$0xff]
        %v357 = vld [vmem:[%s251 + $0x110] sm:$0xff]
        %v358 = vld [vmem:[%s251 + $0x118] sm:$0xff]
        %v359 = vld [vmem:[%s2] sm:$0xff]
        %v360 = vld [vmem:[%s2 + $0x8] sm:$0xf]
        %v361 = vld [vmem:[%s2 + $0xc] sm:$0xff]
        %v362 = vld [vmem:[%s2 + $0x14] sm:$0xf]
        %v363 = vld [vmem:[%s2 + $0x18] sm:$0xff]
        %v364 = vld [vmem:[%s2 + $0x20] sm:$0xf]
        %v365 = vld [vmem:[%s2 + $0x24] sm:$0xff]
        %v366 = vld [vmem:[%s2 + $0x2c] sm:$0xf]
        %v367 = vld [vmem:[%s2 + $0x30] sm:$0xff]
        %v368 = vld [vmem:[%s2 + $0x38] sm:$0xf]
        %v369 = vld [vmem:[%s2 + $0x3c] sm:$0xff]
        %v370 = vld [vmem:[%s2 + $0x44] sm:$0xf]
        %v371 = vld [vmem:[%s2 + $0x48] sm:$0xff]
        %v372 = vld [vmem:[%s2 + $0x50] sm:$0xf]
        %v373 = vld [vmem:[%s2 + $0x54] sm:$0xff]
        %v374 = vld [vmem:[%s2 + $0x5c] sm:$0xf]
        %v375 = vld [vmem:[%s2 + $0x60] sm:$0xff]
        %v376 = vld [vmem:[%s2 + $0x68] sm:$0xf]
        %v377 = vld [vmem:[%s2 + $0x6c] sm:$0xff]
        %v378 = vld [vmem:[%s2 + $0x74] sm:$0xf]
        %v379 = vld [vmem:[%s2 + $0x78] sm:$0xff]
        %v380 = vld [vmem:[%s2 + $0x80] sm:$0xf]
        %v381 = vld [vmem:[%s2 + $0x84] sm:$0xff]
        %v382 = vld [vmem:[%s2 + $0x8c] sm:$0xf]
        %v383 = vld [vmem:[%s2 + $0x90] sm:$0xff]
        %v384 = vld [vmem:[%s2 + $0x98] sm:$0xf]
        %v385 = vld [vmem:[%s2 + $0x9c] sm:$0xff]
        %v386 = vld [vmem:[%s2 + $0xa4] sm:$0xf]
        %v387 = vld [vmem:[%s2 + $0xa8] sm:$0xff]
        %v388 = vld [vmem:[%s2 + $0xb0] sm:$0xf]
        %v389 = vld [vmem:[%s2 + $0xb4] sm:$0xff]
        %v390 = vld [vmem:[%s2 + $0xbc] sm:$0xf]
        %v391 = vld [vmem:[%s3] sm:$0xff]
        %v392 = vld [vmem:[%s3 + $0x8] sm:$0xf]
        %v393 = vld [vmem:[%s3 + $0xc] sm:$0xff]
        %v394 = vld [vmem:[%s3 + $0x14] sm:$0xf]
        %v395 = vld [vmem:[%s3 + $0x18] sm:$0xff]
        %v396 = vld [vmem:[%s3 + $0x20] sm:$0xf]
        %v397 = vld [vmem:[%s3 + $0x24] sm:$0xff]
        %v398 = vld [vmem:[%s3 + $0x2c] sm:$0xf]
        %v399 = vld [vmem:[%s3 + $0x30] sm:$0xff]
        %v400 = vld [vmem:[%s3 + $0x38] sm:$0xf]
        %v401 = vld [vmem:[%s3 + $0x3c] sm:$0xff]
        %v402 = vld [vmem:[%s3 + $0x44] sm:$0xf]
        %v403 = vld [vmem:[%s3 + $0x48] sm:$0xff]
        %v404 = vld [vmem:[%s3 + $0x50] sm:$0xf]
        %v405 = vld [vmem:[%s3 + $0x54] sm:$0xff]
        %v406 = vld [vmem:[%s3 + $0x5c] sm:$0xf]
        %v407 = vld [vmem:[%s3 + $0x60] sm:$0xff]
        %v408 = vld [vmem:[%s3 + $0x68] sm:$0xf]
        %v409 = vld [vmem:[%s3 + $0x6c] sm:$0xff]
        %v410 = vld [vmem:[%s3 + $0x74] sm:$0xf]
        %v411 = vld [vmem:[%s3 + $0x78] sm:$0xff]
        %v412 = vld [vmem:[%s3 + $0x80] sm:$0xf]
        %v413 = vld [vmem:[%s3 + $0x84] sm:$0xff]
        %v414 = vld [vmem:[%s3 + $0x8c] sm:$0xf]
        %v415 = vld [vmem:[%s3 + $0x90] sm:$0xff]
        %v416 = vld [vmem:[%s3 + $0x98] sm:$0xf]
        %v417 = vld [vmem:[%s3 + $0x9c] sm:$0xff]
        %v418 = vld [vmem:[%s3 + $0xa4] sm:$0xf]
        %v419 = vld [vmem:[%s3 + $0xa8] sm:$0xff]
        %v420 = vld [vmem:[%s3 + $0xb0] sm:$0xf]
        %v421 = vld [vmem:[%s3 + $0xb4] sm:$0xff]
        %v422 = vld [vmem:[%s3 + $0xbc] sm:$0xf]
        %v455 = vunpack.c.l.b16 %v359
        %v456 = vunpack.c.h.b16 %v359
        %v457 = vunpack.c.l.b16 %v360
        %v458 = vunpack.c.l.b16 %v361
        %v459 = vunpack.c.h.b16 %v361
        %v460 = vunpack.c.l.b16 %v362
        %v461 = vunpack.c.l.b16 %v363
        %v462 = vunpack.c.h.b16 %v363
        %v463 = vunpack.c.l.b16 %v364
        %v464 = vunpack.c.l.b16 %v365
        %v465 = vunpack.c.h.b16 %v365
        %v466 = vunpack.c.l.b16 %v366
        %v467 = vunpack.c.l.b16 %v367
        %v468 = vunpack.c.h.b16 %v367
        %v469 = vunpack.c.l.b16 %v368
        %v470 = vunpack.c.l.b16 %v369
        %v471 = vunpack.c.h.b16 %v369
        %v472 = vunpack.c.l.b16 %v370
        %v473 = vunpack.c.l.b16 %v371
        %v474 = vunpack.c.h.b16 %v371
        %v475 = vunpack.c.l.b16 %v372
        %v476 = vunpack.c.l.b16 %v373
        %v477 = vunpack.c.h.b16 %v373
        %v478 = vunpack.c.l.b16 %v374
        %v479 = vunpack.c.l.b16 %v375
        %v480 = vunpack.c.h.b16 %v375
        %v481 = vunpack.c.l.b16 %v376
        %v482 = vunpack.c.l.b16 %v377
        %v483 = vunpack.c.h.b16 %v377
        %v484 = vunpack.c.l.b16 %v378
        %v485 = vunpack.c.l.b16 %v379
        %v486 = vunpack.c.h.b16 %v379
        %v487 = vunpack.c.l.b16 %v380
        %v488 = vunpack.c.l.b16 %v381
        %v489 = vunpack.c.h.b16 %v381
        %v490 = vunpack.c.l.b16 %v382
        %v491 = vunpack.c.l.b16 %v383
        %v492 = vunpack.c.h.b16 %v383
        %v493 = vunpack.c.l.b16 %v384
        %v494 = vunpack.c.l.b16 %v385
        %v495 = vunpack.c.h.b16 %v385
        %v496 = vunpack.c.l.b16 %v386
        %v497 = vunpack.c.l.b16 %v387
        %v498 = vunpack.c.h.b16 %v387
        %v499 = vunpack.c.l.b16 %v388
        %v500 = vunpack.c.l.b16 %v389
        %v501 = vunpack.c.h.b16 %v389
        %v502 = vunpack.c.l.b16 %v390
        %v503 = vpack.c.b16 %v458, %v455
        %v504 = vpack.c.b16 %v459, %v456
        %v505 = vpack.c.b16 %v460, %v457
        %v506 = vpack.c.b16 %v464, %v461
        %v507 = vpack.c.b16 %v465, %v462
        %v508 = vpack.c.b16 %v466, %v463
        %v509 = vpack.c.b16 %v470, %v467
        %v510 = vpack.c.b16 %v471, %v468
        %v511 = vpack.c.b16 %v472, %v469
        %v512 = vpack.c.b16 %v476, %v473
        %v513 = vpack.c.b16 %v477, %v474
        %v514 = vpack.c.b16 %v478, %v475
        %v515 = vpack.c.b16 %v482, %v479
        %v516 = vpack.c.b16 %v483, %v480
        %v517 = vpack.c.b16 %v484, %v481
        %v518 = vpack.c.b16 %v488, %v485
        %v519 = vpack.c.b16 %v489, %v486
        %v520 = vpack.c.b16 %v490, %v487
        %v521 = vpack.c.b16 %v494, %v491
        %v522 = vpack.c.b16 %v495, %v492
        %v523 = vpack.c.b16 %v496, %v493
        %v524 = vpack.c.b16 %v500, %v497
        %v525 = vpack.c.b16 %v501, %v498
        %v526 = vpack.c.b16 %v502, %v499
        %v579 = vunpack.c.l.b16 %v323
        %v580 = vunpack.c.h.b16 %v323
        %v581 = vunpack.c.l.b16 %v324
        %v582 = vunpack.c.h.b16 %v324
        %v583 = vunpack.c.l.b16 %v325
        %v584 = vunpack.c.h.b16 %v325
        %v585 = vunpack.c.l.b16 %v326
        %v586 = vunpack.c.h.b16 %v326
        %v587 = vunpack.c.l.b16 %v327
        %v588 = vunpack.c.h.b16 %v327
        %v589 = vunpack.c.l.b16 %v328
        %v590 = vunpack.c.h.b16 %v328
        %v591 = vunpack.c.l.b16 %v329
        %v592 = vunpack.c.h.b16 %v329
        %v593 = vunpack.c.l.b16 %v330
        %v594 = vunpack.c.h.b16 %v330
        %v595 = vunpack.c.l.b16 %v331
        %v596 = vunpack.c.h.b16 %v331
        %v597 = vunpack.c.l.b16 %v332
        %v598 = vunpack.c.h.b16 %v332
        %v599 = vunpack.c.l.b16 %v333
        %v600 = vunpack.c.h.b16 %v333
        %v601 = vunpack.c.l.b16 %v334
        %v602 = vunpack.c.h.b16 %v334
        %v603 = vunpack.c.l.b16 %v335
        %v604 = vunpack.c.h.b16 %v335
        %v605 = vunpack.c.l.b16 %v336
        %v606 = vunpack.c.h.b16 %v336
        %v607 = vunpack.c.l.b16 %v337
        %v608 = vunpack.c.h.b16 %v337
        %v609 = vunpack.c.l.b16 %v338
        %v610 = vunpack.c.h.b16 %v338
        %v611 = vunpack.c.l.b16 %v339
        %v612 = vunpack.c.h.b16 %v339
        %v613 = vunpack.c.l.b16 %v340
        %v614 = vunpack.c.h.b16 %v340
        %v615 = vunpack.c.l.b16 %v341
        %v616 = vunpack.c.h.b16 %v341
        %v617 = vunpack.c.l.b16 %v342
        %v618 = vunpack.c.h.b16 %v342
        %v619 = vunpack.c.l.b16 %v343
        %v620 = vunpack.c.h.b16 %v343
        %v621 = vunpack.c.l.b16 %v344
        %v622 = vunpack.c.h.b16 %v344
        %v623 = vunpack.c.l.b16 %v345
        %v624 = vunpack.c.h.b16 %v345
        %v625 = vunpack.c.l.b16 %v346
        %v626 = vunpack.c.h.b16 %v346
        %v627 = vunpack.c.l.b16 %v347
        %v628 = vunpack.c.h.b16 %v347
        %v629 = vunpack.c.l.b16 %v348
        %v630 = vunpack.c.h.b16 %v348
        %v631 = vunpack.c.l.b16 %v349
        %v632 = vunpack.c.h.b16 %v349
        %v633 = vunpack.c.l.b16 %v350
        %v634 = vunpack.c.h.b16 %v350
        %v635 = vunpack.c.l.b16 %v351
        %v636 = vunpack.c.h.b16 %v351
        %v637 = vunpack.c.l.b16 %v352
        %v638 = vunpack.c.h.b16 %v352
        %v639 = vunpack.c.l.b16 %v353
        %v640 = vunpack.c.h.b16 %v353
        %v641 = vunpack.c.l.b16 %v354
        %v642 = vunpack.c.h.b16 %v354
        %v643 = vunpack.c.l.b16 %v355
        %v644 = vunpack.c.h.b16 %v355
        %v645 = vunpack.c.l.b16 %v356
        %v646 = vunpack.c.h.b16 %v356
        %v647 = vunpack.c.l.b16 %v357
        %v648 = vunpack.c.h.b16 %v357
        %v649 = vunpack.c.l.b16 %v358
        %v650 = vunpack.c.h.b16 %v358
        %v651 = vpack.c.b16 %v581, %v579
        %v652 = vpack.c.b16 %v582, %v580
        %v653 = vpack.c.b16 %v585, %v583
        %v654 = vpack.c.b16 %v586, %v584
        %v655 = vpack.c.b16 %v589, %v587
        %v656 = vpack.c.b16 %v590, %v588
        %v657 = vpack.c.b16 %v593, %v591
        %v658 = vpack.c.b16 %v594, %v592
        %v659 = vpack.c.b16 %v597, %v595
        %v660 = vpack.c.b16 %v598, %v596
        %v661 = vpack.c.b16 %v601, %v599
        %v662 = vpack.c.b16 %v602, %v600
        %v663 = vpack.c.b16 %v605, %v603
        %v664 = vpack.c.b16 %v606, %v604
        %v665 = vpack.c.b16 %v609, %v607
        %v666 = vpack.c.b16 %v610, %v608
        %v667 = vpack.c.b16 %v613, %v611
        %v668 = vpack.c.b16 %v614, %v612
        %v669 = vpack.c.b16 %v617, %v615
        %v670 = vpack.c.b16 %v618, %v616
        %v671 = vpack.c.b16 %v621, %v619
        %v672 = vpack.c.b16 %v622, %v620
        %v673 = vpack.c.b16 %v625, %v623
        %v674 = vpack.c.b16 %v626, %v624
        %v675 = vpack.c.b16 %v629, %v627
        %v676 = vpack.c.b16 %v630, %v628
        %v677 = vpack.c.b16 %v633, %v631
        %v678 = vpack.c.b16 %v634, %v632
        %v679 = vpack.c.b16 %v637, %v635
        %v680 = vpack.c.b16 %v638, %v636
        %v681 = vpack.c.b16 %v641, %v639
        %v682 = vpack.c.b16 %v642, %v640
        %v683 = vpack.c.b16 %v645, %v643
        %v684 = vpack.c.b16 %v646, %v644
        %v685 = vpack.c.b16 %v649, %v647
        %v686 = vpack.c.b16 %v650, %v648
        %vm723 = vcmask 261120
        %v725 = vsel %vm723, %v505, 0
        %v728 = vsel %vm723, %v508, 0
        %v731 = vsel %vm723, %v511, 0
        %v734 = vsel %vm723, %v514, 0
        %v737 = vsel %vm723, %v517, 0
        %v740 = vsel %vm723, %v520, 0
        %v743 = vsel %vm723, %v523, 0
        %v746 = vsel %vm723, %v526, 0
        %748 = vmatprep.subr.bf16.mxu0 %v652
        %749 = vmatpush1.bf16.msra.mxu0 %v651
        %750 = vmatprep.subr.bf16.mxu0 %v654
        %751 = vmatpush1.bf16.msra.mxu0 %v653
        %752 = vmatprep.subr.bf16.mxu0 %v656
        %753 = vmatpush1.bf16.msra.mxu0 %v655
        %754 = vmatprep.subr.bf16.mxu0 %v658
        %755 = vmatpush1.bf16.msra.mxu0 %v657
        %756 = vmatprep.subr.bf16.mxu0 %v660
        %757 = vmatpush1.bf16.msra.mxu0 %v659
        %758 = vmatprep.subr.bf16.mxu0 %v662
        %759 = vmatpush1.bf16.msra.mxu0 %v661
        %760 = vmatprep.subr.bf16.mxu0 %v664
        %761 = vmatpush1.bf16.msra.mxu0 %v663
        %762 = vmatprep.subr.bf16.mxu0 %v666
        %763 = vmatpush1.bf16.msra.mxu0 %v665
        %764 = vmatprep.subr.bf16.mxu0 %v668
        %765 = vmatpush1.bf16.msra.mxu0 %v667
        %766 = vmatprep.subr.bf16.mxu0 %v670
        %767 = vmatpush1.bf16.msra.mxu0 %v669
        %768 = vmatprep.subr.bf16.mxu0 %v672
        %769 = vmatpush1.bf16.msra.mxu0 %v671
        %770 = vmatprep.subr.bf16.mxu0 %v674
        %771 = vmatpush1.bf16.msra.mxu0 %v673
        %772 = vmatprep.subr.bf16.mxu0 %v676
        %773 = vmatpush1.bf16.msra.mxu0 %v675
        %774 = vmatprep.subr.bf16.mxu0 %v678
        %775 = vmatpush1.bf16.msra.mxu0 %v677
        %776 = vmatprep.subr.bf16.mxu0 %v680
        %777 = vmatpush1.bf16.msra.mxu0 %v679
        %778 = vmatprep.subr.bf16.mxu0 %v682
        %779 = vmatpush1.bf16.msra.mxu0 %v681
        %780 = vmatprep.mubr.bf16.mxu0 %v504
        %781 = vmatmul.mubr.bf16.gmra.mrb[0].mxu0 %v503
        %v782 = vpop.f32.mrb[0].mxu0
        %v783 = vadd.f32 0.0, %v782
        %v784 = vpop.f32.mrb[0].mxu0
        %v785 = vadd.f32 0.0, %v784
        %v786 = vpop.f32.mrb[0].mxu0
        %v787 = vadd.f32 0.0, %v786
        %v788 = vpop.f32.mrb[0].mxu0
        %v789 = vadd.f32 0.0, %v788
        %790 = vmatprep.mubr.bf16.mxu0 %v507
        %791 = vmatmul.mubr.bf16.gmra.mrb[0].mxu0 %v506
        %v792 = vpop.f32.mrb[0].mxu0
        %v793 = vadd.f32 0.0, %v792
        %v794 = vpop.f32.mrb[0].mxu0
        %v795 = vadd.f32 0.0, %v794
        %v796 = vpop.f32.mrb[0].mxu0
        %v797 = vadd.f32 0.0, %v796
        %v798 = vpop.f32.mrb[0].mxu0
        %v799 = vadd.f32 0.0, %v798
        %800 = vmatprep.mubr.bf16.mxu0 %v510
        %801 = vmatmul.mubr.bf16.gmra.mrb[0].mxu0 %v509
        %v802 = vpop.f32.mrb[0].mxu0
        %v803 = vadd.f32 0.0, %v802
        %v804 = vpop.f32.mrb[0].mxu0
        %v805 = vadd.f32 0.0, %v804
        %v806 = vpop.f32.mrb[0].mxu0
        %v807 = vadd.f32 0.0, %v806
        %v808 = vpop.f32.mrb[0].mxu0
        %v809 = vadd.f32 0.0, %v808
        %810 = vmatprep.mubr.bf16.mxu0 %v513
        %811 = vmatmul.mubr.bf16.gmra.mrb[0].mxu0 %v512
        %v812 = vpop.f32.mrb[0].mxu0
        %v813 = vadd.f32 0.0, %v812
        %v814 = vpop.f32.mrb[0].mxu0
        %v815 = vadd.f32 0.0, %v814
        %v816 = vpop.f32.mrb[0].mxu0
        %v817 = vadd.f32 0.0, %v816
        %v818 = vpop.f32.mrb[0].mxu0
        %v819 = vadd.f32 0.0, %v818
        %820 = vmatprep.mubr.bf16.mxu0 %v516
        %821 = vmatmul.mubr.bf16.gmra.mrb[0].mxu0 %v515
        %v822 = vpop.f32.mrb[0].mxu0
        %v823 = vadd.f32 0.0, %v822
        %v824 = vpop.f32.mrb[0].mxu0
        %v825 = vadd.f32 0.0, %v824
        %v826 = vpop.f32.mrb[0].mxu0
        %v827 = vadd.f32 0.0, %v826
        %v828 = vpop.f32.mrb[0].mxu0
        %v829 = vadd.f32 0.0, %v828
        %830 = vmatprep.mubr.bf16.mxu0 %v519
        %831 = vmatmul.mubr.bf16.gmra.mrb[0].mxu0 %v518
        %v832 = vpop.f32.mrb[0].mxu0
        %v833 = vadd.f32 0.0, %v832
        %v834 = vpop.f32.mrb[0].mxu0
        %v835 = vadd.f32 0.0, %v834
        %v836 = vpop.f32.mrb[0].mxu0
        %v837 = vadd.f32 0.0, %v836
        %v838 = vpop.f32.mrb[0].mxu0
        %v839 = vadd.f32 0.0, %v838
        %840 = vmatprep.mubr.bf16.mxu0 %v522
        %841 = vmatmul.mubr.bf16.gmra.mrb[0].mxu0 %v521
        %v842 = vpop.f32.mrb[0].mxu0
        %v843 = vadd.f32 0.0, %v842
        %v844 = vpop.f32.mrb[0].mxu0
        %v845 = vadd.f32 0.0, %v844
        %v846 = vpop.f32.mrb[0].mxu0
        %v847 = vadd.f32 0.0, %v846
        %v848 = vpop.f32.mrb[0].mxu0
        %v849 = vadd.f32 0.0, %v848
        %850 = vmatprep.mubr.bf16.mxu0 %v525
        %851 = vmatmul.mubr.bf16.gmra.mrb[0].mxu0 %v524
        %v852 = vpop.f32.mrb[0].mxu0
        %v853 = vadd.f32 0.0, %v852
        %v854 = vpop.f32.mrb[0].mxu0
        %v855 = vadd.f32 0.0, %v854
        %v856 = vpop.f32.mrb[0].mxu0
        %v857 = vadd.f32 0.0, %v856
        %v858 = vpop.f32.mrb[0].mxu0
        %v859 = vadd.f32 0.0, %v858
        %860 = vdwg.mxu0
        %861 = vmatprep.subr.bf16.mxu0 %v684
        %862 = vmatpush1.bf16.msra.mxu0 %v683
        %863 = vmatprep.subr.bf16.mxu0 %v686
        %864 = vmatpush1.bf16.msra.mxu0 %v685
        %865 = vmatprep.subr.bf16.mxu0 0
        %866 = vmatpush1.bf16.msra.mxu0 0
        %867 = vmatprep.subr.bf16.mxu0 0
        %868 = vmatpush1.bf16.msra.mxu0 0
        %869 = vmatprep.subr.bf16.mxu0 0
        %870 = vmatpush1.bf16.msra.mxu0 0
        %871 = vmatprep.subr.bf16.mxu0 0
        %872 = vmatpush1.bf16.msra.mxu0 0
        %873 = vmatprep.subr.bf16.mxu0 0
        %874 = vmatpush1.bf16.msra.mxu0 0
        %875 = vmatprep.subr.bf16.mxu0 0
        %876 = vmatpush1.bf16.msra.mxu0 0
        %877 = vmatprep.subr.bf16.mxu0 0
        %878 = vmatpush1.bf16.msra.mxu0 0
        %879 = vmatprep.subr.bf16.mxu0 0
        %880 = vmatpush1.bf16.msra.mxu0 0
        %881 = vmatprep.subr.bf16.mxu0 0
        %882 = vmatpush1.bf16.msra.mxu0 0
        %883 = vmatprep.subr.bf16.mxu0 0
        %884 = vmatpush1.bf16.msra.mxu0 0
        %885 = vmatprep.subr.bf16.mxu0 0
        %886 = vmatpush1.bf16.msra.mxu0 0
        %887 = vmatprep.subr.bf16.mxu0 0
        %888 = vmatpush1.bf16.msra.mxu0 0
        %889 = vmatprep.subr.bf16.mxu0 0
        %890 = vmatpush1.bf16.msra.mxu0 0
        %891 = vmatprep.subr.bf16.mxu0 0
        %892 = vmatpush1.bf16.msra.mxu0 0
        %893 = vmatprep.mubr.bf16.mxu0 0
        %894 = vmatmul.mubr.bf16.gmra.mrb[0].mxu0 %v725
        %v895 = vpop.f32.mrb[0].mxu0
        %v896 = vadd.f32 %v783, %v895
        %v897 = vpop.f32.mrb[0].mxu0
        %v898 = vadd.f32 %v785, %v897
        %v899 = vpop.f32.mrb[0].mxu0
        %v900 = vadd.f32 %v787, %v899
        %v901 = vpop.f32.mrb[0].mxu0
        %v902 = vadd.f32 %v789, %v901
        %903 = vmatprep.mubr.bf16.mxu0 0
        %904 = vmatmul.mubr.bf16.gmra.mrb[0].mxu0 %v728
        %v905 = vpop.f32.mrb[0].mxu0
        %v906 = vadd.f32 %v793, %v905
        %v907 = vpop.f32.mrb[0].mxu0
        %v908 = vadd.f32 %v795, %v907
        %v909 = vpop.f32.mrb[0].mxu0
        %v910 = vadd.f32 %v797, %v909
        %v911 = vpop.f32.mrb[0].mxu0
        %v912 = vadd.f32 %v799, %v911
        %913 = vmatprep.mubr.bf16.mxu0 0
        %914 = vmatmul.mubr.bf16.gmra.mrb[0].mxu0 %v731
        %v915 = vpop.f32.mrb[0].mxu0
        %v916 = vadd.f32 %v803, %v915
        %v917 = vpop.f32.mrb[0].mxu0
        %v918 = vadd.f32 %v805, %v917
        %v919 = vpop.f32.mrb[0].mxu0
        %v920 = vadd.f32 %v807, %v919
        %v921 = vpop.f32.mrb[0].mxu0
        %v922 = vadd.f32 %v809, %v921
        %923 = vmatprep.mubr.bf16.mxu0 0
        %924 = vmatmul.mubr.bf16.gmra.mrb[0].mxu0 %v734
        %v925 = vpop.f32.mrb[0].mxu0
        %v926 = vadd.f32 %v813, %v925
        %v927 = vpop.f32.mrb[0].mxu0
        %v928 = vadd.f32 %v815, %v927
        %v929 = vpop.f32.mrb[0].mxu0
        %v930 = vadd.f32 %v817, %v929
        %v931 = vpop.f32.mrb[0].mxu0
        %v932 = vadd.f32 %v819, %v931
        %933 = vmatprep.mubr.bf16.mxu0 0
        %934 = vmatmul.mubr.bf16.gmra.mrb[0].mxu0 %v737
        %v935 = vpop.f32.mrb[0].mxu0
        %v936 = vadd.f32 %v823, %v935
        %v937 = vpop.f32.mrb[0].mxu0
        %v938 = vadd.f32 %v825, %v937
        %v939 = vpop.f32.mrb[0].mxu0
        %v940 = vadd.f32 %v827, %v939
        %v941 = vpop.f32.mrb[0].mxu0
        %v942 = vadd.f32 %v829, %v941
        %943 = vmatprep.mubr.bf16.mxu0 0
        %944 = vmatmul.mubr.bf16.gmra.mrb[0].mxu0 %v740
        %v945 = vpop.f32.mrb[0].mxu0
        %v946 = vadd.f32 %v833, %v945
        %v947 = vpop.f32.mrb[0].mxu0
        %v948 = vadd.f32 %v835, %v947
        %v949 = vpop.f32.mrb[0].mxu0
        %v950 = vadd.f32 %v837, %v949
        %v951 = vpop.f32.mrb[0].mxu0
        %v952 = vadd.f32 %v839, %v951
        %953 = vmatprep.mubr.bf16.mxu0 0
        %954 = vmatmul.mubr.bf16.gmra.mrb[0].mxu0 %v743
        %v955 = vpop.f32.mrb[0].mxu0
        %v956 = vadd.f32 %v843, %v955
        %v957 = vpop.f32.mrb[0].mxu0
        %v958 = vadd.f32 %v845, %v957
        %v959 = vpop.f32.mrb[0].mxu0
        %v960 = vadd.f32 %v847, %v959
        %v961 = vpop.f32.mrb[0].mxu0
        %v962 = vadd.f32 %v849, %v961
        %963 = vmatprep.mubr.bf16.mxu0 0
        %964 = vmatmul.mubr.bf16.gmra.mrb[0].mxu0 %v746
        %v965 = vpop.f32.mrb[0].mxu0
        %v966 = vadd.f32 %v853, %v965
        %v967 = vpop.f32.mrb[0].mxu0
        %v968 = vadd.f32 %v855, %v967
        %v969 = vpop.f32.mrb[0].mxu0
        %v970 = vadd.f32 %v857, %v969
        %v971 = vpop.f32.mrb[0].mxu0
        %v972 = vadd.f32 %v859, %v971
        %973 = vdwg.mxu0
        %v1010 = vunpack.c.l.b16 %v287
        %v1011 = vunpack.c.h.b16 %v287
        %v1012 = vunpack.c.l.b16 %v288
        %v1013 = vunpack.c.h.b16 %v288
        %v1014 = vunpack.c.l.b16 %v289
        %v1015 = vunpack.c.h.b16 %v289
        %v1016 = vunpack.c.l.b16 %v290
        %v1017 = vunpack.c.h.b16 %v290
        %v1018 = vunpack.c.l.b16 %v291
        %v1019 = vunpack.c.h.b16 %v291
        %v1020 = vunpack.c.l.b16 %v292
        %v1021 = vunpack.c.h.b16 %v292
        %v1022 = vunpack.c.l.b16 %v293
        %v1023 = vunpack.c.h.b16 %v293
        %v1024 = vunpack.c.l.b16 %v294
        %v1025 = vunpack.c.h.b16 %v294
        %v1026 = vunpack.c.l.b16 %v295
        %v1027 = vunpack.c.h.b16 %v295
        %v1028 = vunpack.c.l.b16 %v296
        %v1029 = vunpack.c.h.b16 %v296
        %v1030 = vunpack.c.l.b16 %v297
        %v1031 = vunpack.c.h.b16 %v297
        %v1032 = vunpack.c.l.b16 %v298
        %v1033 = vunpack.c.h.b16 %v298
        %v1034 = vunpack.c.l.b16 %v299
        %v1035 = vunpack.c.h.b16 %v299
        %v1036 = vunpack.c.l.b16 %v300
        %v1037 = vunpack.c.h.b16 %v300
        %v1038 = vunpack.c.l.b16 %v301
        %v1039 = vunpack.c.h.b16 %v301
        %v1040 = vunpack.c.l.b16 %v302
        %v1041 = vunpack.c.h.b16 %v302
        %v1042 = vunpack.c.l.b16 %v303
        %v1043 = vunpack.c.h.b16 %v303
        %v1044 = vunpack.c.l.b16 %v304
        %v1045 = vunpack.c.h.b16 %v304
        %v1046 = vunpack.c.l.b16 %v305
        %v1047 = vunpack.c.h.b16 %v305
        %v1048 = vunpack.c.l.b16 %v306
        %v1049 = vunpack.c.h.b16 %v306
        %v1050 = vunpack.c.l.b16 %v307
        %v1051 = vunpack.c.h.b16 %v307
        %v1052 = vunpack.c.l.b16 %v308
        %v1053 = vunpack.c.h.b16 %v308
        %v1054 = vunpack.c.l.b16 %v309
        %v1055 = vunpack.c.h.b16 %v309
        %v1056 = vunpack.c.l.b16 %v310
        %v1057 = vunpack.c.h.b16 %v310
        %v1058 = vunpack.c.l.b16 %v311
        %v1059 = vunpack.c.h.b16 %v311
        %v1060 = vunpack.c.l.b16 %v312
        %v1061 = vunpack.c.h.b16 %v312
        %v1062 = vunpack.c.l.b16 %v313
        %v1063 = vunpack.c.h.b16 %v313
        %v1064 = vunpack.c.l.b16 %v314
        %v1065 = vunpack.c.h.b16 %v314
        %v1066 = vunpack.c.l.b16 %v315
        %v1067 = vunpack.c.h.b16 %v315
        %v1068 = vunpack.c.l.b16 %v316
        %v1069 = vunpack.c.h.b16 %v316
        %v1070 = vunpack.c.l.b16 %v317
        %v1071 = vunpack.c.h.b16 %v317
        %v1072 = vunpack.c.l.b16 %v318
        %v1073 = vunpack.c.h.b16 %v318
        %v1074 = vunpack.c.l.b16 %v319
        %v1075 = vunpack.c.h.b16 %v319
        %v1076 = vunpack.c.l.b16 %v320
        %v1077 = vunpack.c.h.b16 %v320
        %v1078 = vunpack.c.l.b16 %v321
        %v1079 = vunpack.c.h.b16 %v321
        %v1080 = vunpack.c.l.b16 %v322
        %v1081 = vunpack.c.h.b16 %v322
        %v1082 = vpack.c.b16 %v1012, %v1010
        %v1083 = vpack.c.b16 %v1013, %v1011
        %v1084 = vpack.c.b16 %v1016, %v1014
        %v1085 = vpack.c.b16 %v1017, %v1015
        %v1086 = vpack.c.b16 %v1020, %v1018
        %v1087 = vpack.c.b16 %v1021, %v1019
        %v1088 = vpack.c.b16 %v1024, %v1022
        %v1089 = vpack.c.b16 %v1025, %v1023
        %v1090 = vpack.c.b16 %v1028, %v1026
        %v1091 = vpack.c.b16 %v1029, %v1027
        %v1092 = vpack.c.b16 %v1032, %v1030
        %v1093 = vpack.c.b16 %v1033, %v1031
        %v1094 = vpack.c.b16 %v1036, %v1034
        %v1095 = vpack.c.b16 %v1037, %v1035
        %v1096 = vpack.c.b16 %v1040, %v1038
        %v1097 = vpack.c.b16 %v1041, %v1039
        %v1098 = vpack.c.b16 %v1044, %v1042
        %v1099 = vpack.c.b16 %v1045, %v1043
        %v1100 = vpack.c.b16 %v1048, %v1046
        %v1101 = vpack.c.b16 %v1049, %v1047
        %v1102 = vpack.c.b16 %v1052, %v1050
        %v1103 = vpack.c.b16 %v1053, %v1051
        %v1104 = vpack.c.b16 %v1056, %v1054
        %v1105 = vpack.c.b16 %v1057, %v1055
        %v1106 = vpack.c.b16 %v1060, %v1058
        %v1107 = vpack.c.b16 %v1061, %v1059
        %v1108 = vpack.c.b16 %v1064, %v1062
        %v1109 = vpack.c.b16 %v1065, %v1063
        %v1110 = vpack.c.b16 %v1068, %v1066
        %v1111 = vpack.c.b16 %v1069, %v1067
        %v1112 = vpack.c.b16 %v1072, %v1070
        %v1113 = vpack.c.b16 %v1073, %v1071
        %v1114 = vpack.c.b16 %v1076, %v1074
        %v1115 = vpack.c.b16 %v1077, %v1075
        %v1116 = vpack.c.b16 %v1080, %v1078
        %v1117 = vpack.c.b16 %v1081, %v1079
        %1154 = vmatprep.subr.bf16.mxu0 %v1083
        %1155 = vmatpush1.bf16.msra.mxu0 %v1082
        %1156 = vmatprep.subr.bf16.mxu0 %v1085
        %1157 = vmatpush1.bf16.msra.mxu0 %v1084
        %1158 = vmatprep.subr.bf16.mxu0 %v1087
        %1159 = vmatpush1.bf16.msra.mxu0 %v1086
        %1160 = vmatprep.subr.bf16.mxu0 %v1089
        %1161 = vmatpush1.bf16.msra.mxu0 %v1088
        %1162 = vmatprep.subr.bf16.mxu0 %v1091
        %1163 = vmatpush1.bf16.msra.mxu0 %v1090
        %1164 = vmatprep.subr.bf16.mxu0 %v1093
        %1165 = vmatpush1.bf16.msra.mxu0 %v1092
        %1166 = vmatprep.subr.bf16.mxu0 %v1095
        %1167 = vmatpush1.bf16.msra.mxu0 %v1094
        %1168 = vmatprep.subr.bf16.mxu0 %v1097
        %1169 = vmatpush1.bf16.msra.mxu0 %v1096
        %1170 = vmatprep.subr.bf16.mxu0 %v1099
        %1171 = vmatpush1.bf16.msra.mxu0 %v1098
        %1172 = vmatprep.subr.bf16.mxu0 %v1101
        %1173 = vmatpush1.bf16.msra.mxu0 %v1100
        %1174 = vmatprep.subr.bf16.mxu0 %v1103
        %1175 = vmatpush1.bf16.msra.mxu0 %v1102
        %1176 = vmatprep.subr.bf16.mxu0 %v1105
        %1177 = vmatpush1.bf16.msra.mxu0 %v1104
        %1178 = vmatprep.subr.bf16.mxu0 %v1107
        %1179 = vmatpush1.bf16.msra.mxu0 %v1106
        %1180 = vmatprep.subr.bf16.mxu0 %v1109
        %1181 = vmatpush1.bf16.msra.mxu0 %v1108
        %1182 = vmatprep.subr.bf16.mxu0 %v1111
        %1183 = vmatpush1.bf16.msra.mxu0 %v1110
        %1184 = vmatprep.subr.bf16.mxu0 %v1113
        %1185 = vmatpush1.bf16.msra.mxu0 %v1112
        %1186 = vmatprep.mubr.bf16.mxu0 %v504
        %1187 = vmatmul.mubr.bf16.gmra.mrb[0].mxu0 %v503
        %v1188 = vpop.f32.mrb[0].mxu0
        %v1189 = vadd.f32 %v896, %v1188
        %v1190 = vpop.f32.mrb[0].mxu0
        %v1191 = vadd.f32 %v898, %v1190
        %v1192 = vpop.f32.mrb[0].mxu0
        %v1193 = vadd.f32 %v900, %v1192
        %v1194 = vpop.f32.mrb[0].mxu0
        %v1195 = vadd.f32 %v902, %v1194
        %1196 = vmatprep.mubr.bf16.mxu0 %v507
        %1197 = vmatmul.mubr.bf16.gmra.mrb[0].mxu0 %v506
        %v1198 = vpop.f32.mrb[0].mxu0
        %v1199 = vadd.f32 %v906, %v1198
        %v1200 = vpop.f32.mrb[0].mxu0
        %v1201 = vadd.f32 %v908, %v1200
        %v1202 = vpop.f32.mrb[0].mxu0
        %v1203 = vadd.f32 %v910, %v1202
        %v1204 = vpop.f32.mrb[0].mxu0
        %v1205 = vadd.f32 %v912, %v1204
        %1206 = vmatprep.mubr.bf16.mxu0 %v510
        %1207 = vmatmul.mubr.bf16.gmra.mrb[0].mxu0 %v509
        %v1208 = vpop.f32.mrb[0].mxu0
        %v1209 = vadd.f32 %v916, %v1208
        %v1210 = vpop.f32.mrb[0].mxu0
        %v1211 = vadd.f32 %v918, %v1210
        %v1212 = vpop.f32.mrb[0].mxu0
        %v1213 = vadd.f32 %v920, %v1212
        %v1214 = vpop.f32.mrb[0].mxu0
        %v1215 = vadd.f32 %v922, %v1214
        %1216 = vmatprep.mubr.bf16.mxu0 %v513
        %1217 = vmatmul.mubr.bf16.gmra.mrb[0].mxu0 %v512
        %v1218 = vpop.f32.mrb[0].mxu0
        %v1219 = vadd.f32 %v926, %v1218
        %v1220 = vpop.f32.mrb[0].mxu0
        %v1221 = vadd.f32 %v928, %v1220
        %v1222 = vpop.f32.mrb[0].mxu0
        %v1223 = vadd.f32 %v930, %v1222
        %v1224 = vpop.f32.mrb[0].mxu0
        %v1225 = vadd.f32 %v932, %v1224
        %1226 = vmatprep.mubr.bf16.mxu0 %v516
        %1227 = vmatmul.mubr.bf16.gmra.mrb[0].mxu0 %v515
        %v1228 = vpop.f32.mrb[0].mxu0
        %v1229 = vadd.f32 %v936, %v1228
        %v1230 = vpop.f32.mrb[0].mxu0
        %v1231 = vadd.f32 %v938, %v1230
        %v1232 = vpop.f32.mrb[0].mxu0
        %v1233 = vadd.f32 %v940, %v1232
        %v1234 = vpop.f32.mrb[0].mxu0
        %v1235 = vadd.f32 %v942, %v1234
        %1236 = vmatprep.mubr.bf16.mxu0 %v519
        %1237 = vmatmul.mubr.bf16.gmra.mrb[0].mxu0 %v518
        %v1238 = vpop.f32.mrb[0].mxu0
        %v1239 = vadd.f32 %v946, %v1238
        %v1240 = vpop.f32.mrb[0].mxu0
        %v1241 = vadd.f32 %v948, %v1240
        %v1242 = vpop.f32.mrb[0].mxu0
        %v1243 = vadd.f32 %v950, %v1242
        %v1244 = vpop.f32.mrb[0].mxu0
        %v1245 = vadd.f32 %v952, %v1244
        %1246 = vmatprep.mubr.bf16.mxu0 %v522
        %1247 = vmatmul.mubr.bf16.gmra.mrb[0].mxu0 %v521
        %v1248 = vpop.f32.mrb[0].mxu0
        %v1249 = vadd.f32 %v956, %v1248
        %v1250 = vpop.f32.mrb[0].mxu0
        %v1251 = vadd.f32 %v958, %v1250
        %v1252 = vpop.f32.mrb[0].mxu0
        %v1253 = vadd.f32 %v960, %v1252
        %v1254 = vpop.f32.mrb[0].mxu0
        %v1255 = vadd.f32 %v962, %v1254
        %1256 = vmatprep.mubr.bf16.mxu0 %v525
        %1257 = vmatmul.mubr.bf16.gmra.mrb[0].mxu0 %v524
        %v1258 = vpop.f32.mrb[0].mxu0
        %v1259 = vadd.f32 %v966, %v1258
        %v1260 = vpop.f32.mrb[0].mxu0
        %v1261 = vadd.f32 %v968, %v1260
        %v1262 = vpop.f32.mrb[0].mxu0
        %v1263 = vadd.f32 %v970, %v1262
        %v1264 = vpop.f32.mrb[0].mxu0
        %v1265 = vadd.f32 %v972, %v1264
        %1266 = vdwg.mxu0
        %1267 = vmatprep.subr.bf16.mxu0 %v1115
        %1268 = vmatpush1.bf16.msra.mxu0 %v1114
        %1269 = vmatprep.subr.bf16.mxu0 %v1117
        %1270 = vmatpush1.bf16.msra.mxu0 %v1116
        %1271 = vmatprep.subr.bf16.mxu0 0
        %1272 = vmatpush1.bf16.msra.mxu0 0
        %1273 = vmatprep.subr.bf16.mxu0 0
        %1274 = vmatpush1.bf16.msra.mxu0 0
        %1275 = vmatprep.subr.bf16.mxu0 0
        %1276 = vmatpush1.bf16.msra.mxu0 0
        %1277 = vmatprep.subr.bf16.mxu0 0
        %1278 = vmatpush1.bf16.msra.mxu0 0
        %1279 = vmatprep.subr.bf16.mxu0 0
        %1280 = vmatpush1.bf16.msra.mxu0 0
        %1281 = vmatprep.subr.bf16.mxu0 0
        %1282 = vmatpush1.bf16.msra.mxu0 0
        %1283 = vmatprep.subr.bf16.mxu0 0
        %1284 = vmatpush1.bf16.msra.mxu0 0
        %1285 = vmatprep.subr.bf16.mxu0 0
        %1286 = vmatpush1.bf16.msra.mxu0 0
        %1287 = vmatprep.subr.bf16.mxu0 0
        %1288 = vmatpush1.bf16.msra.mxu0 0
        %1289 = vmatprep.subr.bf16.mxu0 0
        %1290 = vmatpush1.bf16.msra.mxu0 0
        %1291 = vmatprep.subr.bf16.mxu0 0
        %1292 = vmatpush1.bf16.msra.mxu0 0
        %1293 = vmatprep.subr.bf16.mxu0 0
        %1294 = vmatpush1.bf16.msra.mxu0 0
        %1295 = vmatprep.subr.bf16.mxu0 0
        %1296 = vmatpush1.bf16.msra.mxu0 0
        %1297 = vmatprep.subr.bf16.mxu0 0
        %1298 = vmatpush1.bf16.msra.mxu0 0
        %1299 = vmatprep.mubr.bf16.mxu0 0
        %1300 = vmatmul.mubr.bf16.gmra.mrb[0].mxu0 %v725
        %v1301 = vpop.f32.mrb[0].mxu0
        %v1302 = vadd.f32 %v1189, %v1301
        %v1303 = vpop.f32.mrb[0].mxu0
        %v1304 = vadd.f32 %v1191, %v1303
        %v1305 = vpop.f32.mrb[0].mxu0
        %v1306 = vadd.f32 %v1193, %v1305
        %v1307 = vpop.f32.mrb[0].mxu0
        %v1308 = vadd.f32 %v1195, %v1307
        %1309 = vmatprep.mubr.bf16.mxu0 0
        %1310 = vmatmul.mubr.bf16.gmra.mrb[0].mxu0 %v728
        %v1311 = vpop.f32.mrb[0].mxu0
        %v1312 = vadd.f32 %v1199, %v1311
        %v1313 = vpop.f32.mrb[0].mxu0
        %v1314 = vadd.f32 %v1201, %v1313
        %v1315 = vpop.f32.mrb[0].mxu0
        %v1316 = vadd.f32 %v1203, %v1315
        %v1317 = vpop.f32.mrb[0].mxu0
        %v1318 = vadd.f32 %v1205, %v1317
        %1319 = vmatprep.mubr.bf16.mxu0 0
        %1320 = vmatmul.mubr.bf16.gmra.mrb[0].mxu0 %v731
        %v1321 = vpop.f32.mrb[0].mxu0
        %v1322 = vadd.f32 %v1209, %v1321
        %v1323 = vpop.f32.mrb[0].mxu0
        %v1324 = vadd.f32 %v1211, %v1323
        %v1325 = vpop.f32.mrb[0].mxu0
        %v1326 = vadd.f32 %v1213, %v1325
        %v1327 = vpop.f32.mrb[0].mxu0
        %v1328 = vadd.f32 %v1215, %v1327
        %1329 = vmatprep.mubr.bf16.mxu0 0
        %1330 = vmatmul.mubr.bf16.gmra.mrb[0].mxu0 %v734
        %v1331 = vpop.f32.mrb[0].mxu0
        %v1332 = vadd.f32 %v1219, %v1331
        %v1333 = vpop.f32.mrb[0].mxu0
        %v1334 = vadd.f32 %v1221, %v1333
        %v1335 = vpop.f32.mrb[0].mxu0
        %v1336 = vadd.f32 %v1223, %v1335
        %v1337 = vpop.f32.mrb[0].mxu0
        %v1338 = vadd.f32 %v1225, %v1337
        %1339 = vmatprep.mubr.bf16.mxu0 0
        %1340 = vmatmul.mubr.bf16.gmra.mrb[0].mxu0 %v737
        %v1341 = vpop.f32.mrb[0].mxu0
        %v1342 = vadd.f32 %v1229, %v1341
        %v1343 = vpop.f32.mrb[0].mxu0
        %v1344 = vadd.f32 %v1231, %v1343
        %v1345 = vpop.f32.mrb[0].mxu0
        %v1346 = vadd.f32 %v1233, %v1345
        %v1347 = vpop.f32.mrb[0].mxu0
        %v1348 = vadd.f32 %v1235, %v1347
        %1349 = vmatprep.mubr.bf16.mxu0 0
        %1350 = vmatmul.mubr.bf16.gmra.mrb[0].mxu0 %v740
        %v1351 = vpop.f32.mrb[0].mxu0
        %v1352 = vadd.f32 %v1239, %v1351
        %v1353 = vpop.f32.mrb[0].mxu0
        %v1354 = vadd.f32 %v1241, %v1353
        %v1355 = vpop.f32.mrb[0].mxu0
        %v1356 = vadd.f32 %v1243, %v1355
        %v1357 = vpop.f32.mrb[0].mxu0
        %v1358 = vadd.f32 %v1245, %v1357
        %1359 = vmatprep.mubr.bf16.mxu0 0
        %1360 = vmatmul.mubr.bf16.gmra.mrb[0].mxu0 %v743
        %v1361 = vpop.f32.mrb[0].mxu0
        %v1362 = vadd.f32 %v1249, %v1361
        %v1363 = vpop.f32.mrb[0].mxu0
        %v1364 = vadd.f32 %v1251, %v1363
        %v1365 = vpop.f32.mrb[0].mxu0
        %v1366 = vadd.f32 %v1253, %v1365
        %v1367 = vpop.f32.mrb[0].mxu0
        %v1368 = vadd.f32 %v1255, %v1367
        %1369 = vmatprep.mubr.bf16.mxu0 0
        %1370 = vmatmul.mubr.bf16.gmra.mrb[0].mxu0 %v746
        %v1371 = vpop.f32.mrb[0].mxu0
        %v1372 = vadd.f32 %v1259, %v1371
        %v1373 = vpop.f32.mrb[0].mxu0
        %v1374 = vadd.f32 %v1261, %v1373
        %v1375 = vpop.f32.mrb[0].mxu0
        %v1376 = vadd.f32 %v1263, %v1375
        %v1377 = vpop.f32.mrb[0].mxu0
        %v1378 = vadd.f32 %v1265, %v1377
        %1379 = vdwg.mxu0
        %v1412 = vunpack.c.l.b16 %v391
        %v1413 = vunpack.c.h.b16 %v391
        %v1414 = vunpack.c.l.b16 %v392
        %v1415 = vunpack.c.l.b16 %v393
        %v1416 = vunpack.c.h.b16 %v393
        %v1417 = vunpack.c.l.b16 %v394
        %v1418 = vunpack.c.l.b16 %v395
        %v1419 = vunpack.c.h.b16 %v395
        %v1420 = vunpack.c.l.b16 %v396
        %v1421 = vunpack.c.l.b16 %v397
        %v1422 = vunpack.c.h.b16 %v397
        %v1423 = vunpack.c.l.b16 %v398
        %v1424 = vunpack.c.l.b16 %v399
        %v1425 = vunpack.c.h.b16 %v399
        %v1426 = vunpack.c.l.b16 %v400
        %v1427 = vunpack.c.l.b16 %v401
        %v1428 = vunpack.c.h.b16 %v401
        %v1429 = vunpack.c.l.b16 %v402
        %v1430 = vunpack.c.l.b16 %v403
        %v1431 = vunpack.c.h.b16 %v403
        %v1432 = vunpack.c.l.b16 %v404
        %v1433 = vunpack.c.l.b16 %v405
        %v1434 = vunpack.c.h.b16 %v405
        %v1435 = vunpack.c.l.b16 %v406
        %v1436 = vunpack.c.l.b16 %v407
        %v1437 = vunpack.c.h.b16 %v407
        %v1438 = vunpack.c.l.b16 %v408
        %v1439 = vunpack.c.l.b16 %v409
        %v1440 = vunpack.c.h.b16 %v409
        %v1441 = vunpack.c.l.b16 %v410
        %v1442 = vunpack.c.l.b16 %v411
        %v1443 = vunpack.c.h.b16 %v411
        %v1444 = vunpack.c.l.b16 %v412
        %v1445 = vunpack.c.l.b16 %v413
        %v1446 = vunpack.c.h.b16 %v413
        %v1447 = vunpack.c.l.b16 %v414
        %v1448 = vunpack.c.l.b16 %v415
        %v1449 = vunpack.c.h.b16 %v415
        %v1450 = vunpack.c.l.b16 %v416
        %v1451 = vunpack.c.l.b16 %v417
        %v1452 = vunpack.c.h.b16 %v417
        %v1453 = vunpack.c.l.b16 %v418
        %v1454 = vunpack.c.l.b16 %v419
        %v1455 = vunpack.c.h.b16 %v419
        %v1456 = vunpack.c.l.b16 %v420
        %v1457 = vunpack.c.l.b16 %v421
        %v1458 = vunpack.c.h.b16 %v421
        %v1459 = vunpack.c.l.b16 %v422
        %v1460 = vpack.c.b16 %v1415, %v1412
        %v1461 = vpack.c.b16 %v1416, %v1413
        %v1462 = vpack.c.b16 %v1417, %v1414
        %v1463 = vpack.c.b16 %v1421, %v1418
        %v1464 = vpack.c.b16 %v1422, %v1419
        %v1465 = vpack.c.b16 %v1423, %v1420
        %v1466 = vpack.c.b16 %v1427, %v1424
        %v1467 = vpack.c.b16 %v1428, %v1425
        %v1468 = vpack.c.b16 %v1429, %v1426
        %v1469 = vpack.c.b16 %v1433, %v1430
        %v1470 = vpack.c.b16 %v1434, %v1431
        %v1471 = vpack.c.b16 %v1435, %v1432
        %v1472 = vpack.c.b16 %v1439, %v1436
        %v1473 = vpack.c.b16 %v1440, %v1437
        %v1474 = vpack.c.b16 %v1441, %v1438
        %v1475 = vpack.c.b16 %v1445, %v1442
        %v1476 = vpack.c.b16 %v1446, %v1443
        %v1477 = vpack.c.b16 %v1447, %v1444
        %v1478 = vpack.c.b16 %v1451, %v1448
        %v1479 = vpack.c.b16 %v1452, %v1449
        %v1480 = vpack.c.b16 %v1453, %v1450
        %v1481 = vpack.c.b16 %v1457, %v1454
        %v1482 = vpack.c.b16 %v1458, %v1455
        %v1483 = vpack.c.b16 %v1459, %v1456
        %v1501 = vsel %vm723, %v1462, 0
        %v1504 = vsel %vm723, %v1465, 0
        %v1507 = vsel %vm723, %v1468, 0
        %v1510 = vsel %vm723, %v1471, 0
        %v1513 = vsel %vm723, %v1474, 0
        %v1516 = vsel %vm723, %v1477, 0
        %v1519 = vsel %vm723, %v1480, 0
        %v1522 = vsel %vm723, %v1483, 0
        %1524 = vmatprep.subr.bf16.mxu0 %v1083
        %1525 = vmatpush1.bf16.msra.mxu0 %v1082
        %1526 = vmatprep.subr.bf16.mxu0 %v1085
        %1527 = vmatpush1.bf16.msra.mxu0 %v1084
        %1528 = vmatprep.subr.bf16.mxu0 %v1087
        %1529 = vmatpush1.bf16.msra.mxu0 %v1086
        %1530 = vmatprep.subr.bf16.mxu0 %v1089
        %1531 = vmatpush1.bf16.msra.mxu0 %v1088
        %1532 = vmatprep.subr.bf16.mxu0 %v1091
        %1533 = vmatpush1.bf16.msra.mxu0 %v1090
        %1534 = vmatprep.subr.bf16.mxu0 %v1093
        %1535 = vmatpush1.bf16.msra.mxu0 %v1092
        %1536 = vmatprep.subr.bf16.mxu0 %v1095
        %1537 = vmatpush1.bf16.msra.mxu0 %v1094
        %1538 = vmatprep.subr.bf16.mxu0 %v1097
        %1539 = vmatpush1.bf16.msra.mxu0 %v1096
        %1540 = vmatprep.subr.bf16.mxu0 %v1099
        %1541 = vmatpush1.bf16.msra.mxu0 %v1098
        %1542 = vmatprep.subr.bf16.mxu0 %v1101
        %1543 = vmatpush1.bf16.msra.mxu0 %v1100
        %1544 = vmatprep.subr.bf16.mxu0 %v1103
        %1545 = vmatpush1.bf16.msra.mxu0 %v1102
        %1546 = vmatprep.subr.bf16.mxu0 %v1105
        %1547 = vmatpush1.bf16.msra.mxu0 %v1104
        %1548 = vmatprep.subr.bf16.mxu0 %v1107
        %1549 = vmatpush1.bf16.msra.mxu0 %v1106
        %1550 = vmatprep.subr.bf16.mxu0 %v1109
        %1551 = vmatpush1.bf16.msra.mxu0 %v1108
        %1552 = vmatprep.subr.bf16.mxu0 %v1111
        %1553 = vmatpush1.bf16.msra.mxu0 %v1110
        %1554 = vmatprep.subr.bf16.mxu0 %v1113
        %1555 = vmatpush1.bf16.msra.mxu0 %v1112
        %1556 = vmatprep.mubr.bf16.mxu0 %v1461
        %1557 = vmatmul.mubr.bf16.gmra.mrb[0].mxu0 %v1460
        %v1558 = vpop.f32.mrb[0].mxu0
        %v1559 = vadd.f32 0.0, %v1558
        %v1560 = vpop.f32.mrb[0].mxu0
        %v1561 = vadd.f32 0.0, %v1560
        %v1562 = vpop.f32.mrb[0].mxu0
        %v1563 = vadd.f32 0.0, %v1562
        %v1564 = vpop.f32.mrb[0].mxu0
        %v1565 = vadd.f32 0.0, %v1564
        %1566 = vmatprep.mubr.bf16.mxu0 %v1464
        %1567 = vmatmul.mubr.bf16.gmra.mrb[0].mxu0 %v1463
        %v1568 = vpop.f32.mrb[0].mxu0
        %v1569 = vadd.f32 0.0, %v1568
        %v1570 = vpop.f32.mrb[0].mxu0
        %v1571 = vadd.f32 0.0, %v1570
        %v1572 = vpop.f32.mrb[0].mxu0
        %v1573 = vadd.f32 0.0, %v1572
        %v1574 = vpop.f32.mrb[0].mxu0
        %v1575 = vadd.f32 0.0, %v1574
        %1576 = vmatprep.mubr.bf16.mxu0 %v1467
        %1577 = vmatmul.mubr.bf16.gmra.mrb[0].mxu0 %v1466
        %v1578 = vpop.f32.mrb[0].mxu0
        %v1579 = vadd.f32 0.0, %v1578
        %v1580 = vpop.f32.mrb[0].mxu0
        %v1581 = vadd.f32 0.0, %v1580
        %v1582 = vpop.f32.mrb[0].mxu0
        %v1583 = vadd.f32 0.0, %v1582
        %v1584 = vpop.f32.mrb[0].mxu0
        %v1585 = vadd.f32 0.0, %v1584
        %1586 = vmatprep.mubr.bf16.mxu0 %v1470
        %1587 = vmatmul.mubr.bf16.gmra.mrb[0].mxu0 %v1469
        %v1588 = vpop.f32.mrb[0].mxu0
        %v1589 = vadd.f32 0.0, %v1588
        %v1590 = vpop.f32.mrb[0].mxu0
        %v1591 = vadd.f32 0.0, %v1590
        %v1592 = vpop.f32.mrb[0].mxu0
        %v1593 = vadd.f32 0.0, %v1592
        %v1594 = vpop.f32.mrb[0].mxu0
        %v1595 = vadd.f32 0.0, %v1594
        %1596 = vmatprep.mubr.bf16.mxu0 %v1473
        %1597 = vmatmul.mubr.bf16.gmra.mrb[0].mxu0 %v1472
        %v1598 = vpop.f32.mrb[0].mxu0
        %v1599 = vadd.f32 0.0, %v1598
        %v1600 = vpop.f32.mrb[0].mxu0
        %v1601 = vadd.f32 0.0, %v1600
        %v1602 = vpop.f32.mrb[0].mxu0
        %v1603 = vadd.f32 0.0, %v1602
        %v1604 = vpop.f32.mrb[0].mxu0
        %v1605 = vadd.f32 0.0, %v1604
        %1606 = vmatprep.mubr.bf16.mxu0 %v1476
        %1607 = vmatmul.mubr.bf16.gmra.mrb[0].mxu0 %v1475
        %v1608 = vpop.f32.mrb[0].mxu0
        %v1609 = vadd.f32 0.0, %v1608
        %v1610 = vpop.f32.mrb[0].mxu0
        %v1611 = vadd.f32 0.0, %v1610
        %v1612 = vpop.f32.mrb[0].mxu0
        %v1613 = vadd.f32 0.0, %v1612
        %v1614 = vpop.f32.mrb[0].mxu0
        %v1615 = vadd.f32 0.0, %v1614
        %1616 = vmatprep.mubr.bf16.mxu0 %v1479
        %1617 = vmatmul.mubr.bf16.gmra.mrb[0].mxu0 %v1478
        %v1618 = vpop.f32.mrb[0].mxu0
        %v1619 = vadd.f32 0.0, %v1618
        %v1620 = vpop.f32.mrb[0].mxu0
        %v1621 = vadd.f32 0.0, %v1620
        %v1622 = vpop.f32.mrb[0].mxu0
        %v1623 = vadd.f32 0.0, %v1622
        %v1624 = vpop.f32.mrb[0].mxu0
        %v1625 = vadd.f32 0.0, %v1624
        %1626 = vmatprep.mubr.bf16.mxu0 %v1482
        %1627 = vmatmul.mubr.bf16.gmra.mrb[0].mxu0 %v1481
        %v1628 = vpop.f32.mrb[0].mxu0
        %v1629 = vadd.f32 0.0, %v1628
        %v1630 = vpop.f32.mrb[0].mxu0
        %v1631 = vadd.f32 0.0, %v1630
        %v1632 = vpop.f32.mrb[0].mxu0
        %v1633 = vadd.f32 0.0, %v1632
        %v1634 = vpop.f32.mrb[0].mxu0
        %v1635 = vadd.f32 0.0, %v1634
        %1636 = vdwg.mxu0
        %1637 = vmatprep.subr.bf16.mxu0 %v1115
        %1638 = vmatpush1.bf16.msra.mxu0 %v1114
        %1639 = vmatprep.subr.bf16.mxu0 %v1117
        %1640 = vmatpush1.bf16.msra.mxu0 %v1116
        %1641 = vmatprep.subr.bf16.mxu0 0
        %1642 = vmatpush1.bf16.msra.mxu0 0
        %1643 = vmatprep.subr.bf16.mxu0 0
        %1644 = vmatpush1.bf16.msra.mxu0 0
        %1645 = vmatprep.subr.bf16.mxu0 0
        %1646 = vmatpush1.bf16.msra.mxu0 0
        %1647 = vmatprep.subr.bf16.mxu0 0
        %1648 = vmatpush1.bf16.msra.mxu0 0
        %1649 = vmatprep.subr.bf16.mxu0 0
        %1650 = vmatpush1.bf16.msra.mxu0 0
        %1651 = vmatprep.subr.bf16.mxu0 0
        %1652 = vmatpush1.bf16.msra.mxu0 0
        %1653 = vmatprep.subr.bf16.mxu0 0
        %1654 = vmatpush1.bf16.msra.mxu0 0
        %1655 = vmatprep.subr.bf16.mxu0 0
        %1656 = vmatpush1.bf16.msra.mxu0 0
        %1657 = vmatprep.subr.bf16.mxu0 0
        %1658 = vmatpush1.bf16.msra.mxu0 0
        %1659 = vmatprep.subr.bf16.mxu0 0
        %1660 = vmatpush1.bf16.msra.mxu0 0
        %1661 = vmatprep.subr.bf16.mxu0 0
        %1662 = vmatpush1.bf16.msra.mxu0 0
        %1663 = vmatprep.subr.bf16.mxu0 0
        %1664 = vmatpush1.bf16.msra.mxu0 0
        %1665 = vmatprep.subr.bf16.mxu0 0
        %1666 = vmatpush1.bf16.msra.mxu0 0
        %1667 = vmatprep.subr.bf16.mxu0 0
        %1668 = vmatpush1.bf16.msra.mxu0 0
        %1669 = vmatprep.mubr.bf16.mxu0 0
        %1670 = vmatmul.mubr.bf16.gmra.mrb[0].mxu0 %v1501
        %v1671 = vpop.f32.mrb[0].mxu0
        %v1672 = vadd.f32 %v1559, %v1671
        %v1673 = vpop.f32.mrb[0].mxu0
        %v1674 = vadd.f32 %v1561, %v1673
        %v1675 = vpop.f32.mrb[0].mxu0
        %v1676 = vadd.f32 %v1563, %v1675
        %v1677 = vpop.f32.mrb[0].mxu0
        %v1678 = vadd.f32 %v1565, %v1677
        %1679 = vmatprep.mubr.bf16.mxu0 0
        %1680 = vmatmul.mubr.bf16.gmra.mrb[0].mxu0 %v1504
        %v1681 = vpop.f32.mrb[0].mxu0
        %v1682 = vadd.f32 %v1569, %v1681
        %v1683 = vpop.f32.mrb[0].mxu0
        %v1684 = vadd.f32 %v1571, %v1683
        %v1685 = vpop.f32.mrb[0].mxu0
        %v1686 = vadd.f32 %v1573, %v1685
        %v1687 = vpop.f32.mrb[0].mxu0
        %v1688 = vadd.f32 %v1575, %v1687
        %1689 = vmatprep.mubr.bf16.mxu0 0
        %1690 = vmatmul.mubr.bf16.gmra.mrb[0].mxu0 %v1507
        %v1691 = vpop.f32.mrb[0].mxu0
        %v1692 = vadd.f32 %v1579, %v1691
        %v1693 = vpop.f32.mrb[0].mxu0
        %v1694 = vadd.f32 %v1581, %v1693
        %v1695 = vpop.f32.mrb[0].mxu0
        %v1696 = vadd.f32 %v1583, %v1695
        %v1697 = vpop.f32.mrb[0].mxu0
        %v1698 = vadd.f32 %v1585, %v1697
        %1699 = vmatprep.mubr.bf16.mxu0 0
        %1700 = vmatmul.mubr.bf16.gmra.mrb[0].mxu0 %v1510
        %v1701 = vpop.f32.mrb[0].mxu0
        %v1702 = vadd.f32 %v1589, %v1701
        %v1703 = vpop.f32.mrb[0].mxu0
        %v1704 = vadd.f32 %v1591, %v1703
        %v1705 = vpop.f32.mrb[0].mxu0
        %v1706 = vadd.f32 %v1593, %v1705
        %v1707 = vpop.f32.mrb[0].mxu0
        %v1708 = vadd.f32 %v1595, %v1707
        %1709 = vmatprep.mubr.bf16.mxu0 0
        %1710 = vmatmul.mubr.bf16.gmra.mrb[0].mxu0 %v1513
        %v1711 = vpop.f32.mrb[0].mxu0
        %v1712 = vadd.f32 %v1599, %v1711
        %v1713 = vpop.f32.mrb[0].mxu0
        %v1714 = vadd.f32 %v1601, %v1713
        %v1715 = vpop.f32.mrb[0].mxu0
        %v1716 = vadd.f32 %v1603, %v1715
        %v1717 = vpop.f32.mrb[0].mxu0
        %v1718 = vadd.f32 %v1605, %v1717
        %1719 = vmatprep.mubr.bf16.mxu0 0
        %1720 = vmatmul.mubr.bf16.gmra.mrb[0].mxu0 %v1516
        %v1721 = vpop.f32.mrb[0].mxu0
        %v1722 = vadd.f32 %v1609, %v1721
        %v1723 = vpop.f32.mrb[0].mxu0
        %v1724 = vadd.f32 %v1611, %v1723
        %v1725 = vpop.f32.mrb[0].mxu0
        %v1726 = vadd.f32 %v1613, %v1725
        %v1727 = vpop.f32.mrb[0].mxu0
        %v1728 = vadd.f32 %v1615, %v1727
        %1729 = vmatprep.mubr.bf16.mxu0 0
        %1730 = vmatmul.mubr.bf16.gmra.mrb[0].mxu0 %v1519
        %v1731 = vpop.f32.mrb[0].mxu0
        %v1732 = vadd.f32 %v1619, %v1731
        %v1733 = vpop.f32.mrb[0].mxu0
        %v1734 = vadd.f32 %v1621, %v1733
        %v1735 = vpop.f32.mrb[0].mxu0
        %v1736 = vadd.f32 %v1623, %v1735
        %v1737 = vpop.f32.mrb[0].mxu0
        %v1738 = vadd.f32 %v1625, %v1737
        %1739 = vmatprep.mubr.bf16.mxu0 0
        %1740 = vmatmul.mubr.bf16.gmra.mrb[0].mxu0 %v1522
        %v1741 = vpop.f32.mrb[0].mxu0
        %v1742 = vadd.f32 %v1629, %v1741
        %v1743 = vpop.f32.mrb[0].mxu0
        %v1744 = vadd.f32 %v1631, %v1743
        %v1745 = vpop.f32.mrb[0].mxu0
        %v1746 = vadd.f32 %v1633, %v1745
        %v1747 = vpop.f32.mrb[0].mxu0
        %v1748 = vadd.f32 %v1635, %v1747
        %1749 = vdwg.mxu0
        %v1750 = vadd.f32 %v1302, %v1672
        %v1751 = vadd.f32 %v1304, %v1674
        %v1752 = vadd.f32 %v1306, %v1676
        %v1753 = vadd.f32 %v1308, %v1678
        %v1754 = vadd.f32 %v1312, %v1682
        %v1755 = vadd.f32 %v1314, %v1684
        %v1756 = vadd.f32 %v1316, %v1686
        %v1757 = vadd.f32 %v1318, %v1688
        %v1758 = vadd.f32 %v1322, %v1692
        %v1759 = vadd.f32 %v1324, %v1694
        %v1760 = vadd.f32 %v1326, %v1696
        %v1761 = vadd.f32 %v1328, %v1698
        %v1762 = vadd.f32 %v1332, %v1702
        %v1763 = vadd.f32 %v1334, %v1704
        %v1764 = vadd.f32 %v1336, %v1706
        %v1765 = vadd.f32 %v1338, %v1708
        %v1766 = vadd.f32 %v1342, %v1712
        %v1767 = vadd.f32 %v1344, %v1714
        %v1768 = vadd.f32 %v1346, %v1716
        %v1769 = vadd.f32 %v1348, %v1718
        %v1770 = vadd.f32 %v1352, %v1722
        %v1771 = vadd.f32 %v1354, %v1724
        %v1772 = vadd.f32 %v1356, %v1726
        %v1773 = vadd.f32 %v1358, %v1728
        %v1774 = vadd.f32 %v1362, %v1732
        %v1775 = vadd.f32 %v1364, %v1734
        %v1776 = vadd.f32 %v1366, %v1736
        %v1777 = vadd.f32 %v1368, %v1738
        %v1778 = vadd.f32 %v1372, %v1742
        %v1779 = vadd.f32 %v1374, %v1744
        %v1780 = vadd.f32 %v1376, %v1746
        %v1781 = vadd.f32 %v1378, %v1748
        %v1782 = vld [vmem:[%s4] sm:$0xff]
        %v1783 = vld [vmem:[%s4 + $0x8] sm:$0xff]
        %1785 = vset.pattern.permute.xlu0 0
        %1786 = vperm.xlu0 %1785, %v1782
        %v1787 = vpop.permute.xlu0 %1786
        %1790 = vset.pattern.permute.xlu0 0
        %1791 = vperm.xlu0 %1790, %v1783
        %v1792 = vpop.permute.xlu0 %1791
        %vm1794 = vcmask 1043456
        %v1795 = vsel %vm1794, %v1787, -inf
        %v1796 = vrot.slane %v1795, 4
        %v1797 = vmax.f32 %v1795, %v1796
        %v1798 = vrot.slane %v1797, 2
        %v1799 = vmax.f32 %v1797, %v1798
        %v1800 = vrot.slane %v1799, 1
        %v1801 = vmax.f32 %v1799, %v1800
        %vm1802 = vcmask 1047556
        %v1803 = vsel %vm1802, %v1787, -inf
        %v1804 = vrot.slane %v1803, 4
        %v1805 = vmax.f32 %v1803, %v1804
        %v1806 = vrot.slane %v1805, 2
        %v1807 = vmax.f32 %v1805, %v1806
        %v1808 = vrot.slane %v1807, 1
        %v1809 = vmax.f32 %v1807, %v1808
        %v1810 = vsel %vm1794, %v1792, -inf
        %v1811 = vrot.slane %v1810, 4
        %v1812 = vmax.f32 %v1810, %v1811
        %v1813 = vrot.slane %v1812, 2
        %v1814 = vmax.f32 %v1812, %v1813
        %v1815 = vrot.slane %v1814, 1
        %v1816 = vmax.f32 %v1814, %v1815
        %v1817 = vsel %vm1802, %v1792, -inf
        %v1818 = vrot.slane %v1817, 4
        %v1819 = vmax.f32 %v1817, %v1818
        %v1820 = vrot.slane %v1819, 2
        %v1821 = vmax.f32 %v1819, %v1820
        %v1822 = vrot.slane %v1821, 1
        %v1823 = vmax.f32 %v1821, %v1822
        %v1824 = vsel %vm1794, %v1801, %v1809
        %v1825 = vsel %vm1794, %v1816, %v1823
        %v1826 = vsub.f32 %v1787, %v1824
        %v1827 = vsub.f32 %v1792, %v1825
        %v1828 = vmul.f32 %v1826, 1.442695
        %v1829 = vpow.pop %v1828
        %v1830 = vmul.f32 %v1827, 1.442695
        %v1831 = vpow.pop %v1830
        %v1832 = vsel %vm1794, %v1829, 0.0
        %v1833 = vrot.slane %v1832, 4
        %v1834 = vadd.f32 %v1832, %v1833
        %v1835 = vrot.slane %v1834, 2
        %v1836 = vadd.f32 %v1834, %v1835
        %v1837 = vrot.slane %v1836, 1
        %v1838 = vadd.f32 %v1836, %v1837
        %v1840 = vrot.slane %v1829, 4
        %v1842 = vsel %vm1794, %v1840, 0.0
        %v1843 = vrot.slane %v1842, 4
        %v1844 = vadd.f32 %v1842, %v1843
        %v1845 = vrot.slane %v1844, 2
        %v1846 = vadd.f32 %v1844, %v1845
        %v1847 = vrot.slane %v1846, 1
        %v1848 = vadd.f32 %v1846, %v1847
        %v1849 = vsel %vm1794, %v1831, 0.0
        %v1850 = vrot.slane %v1849, 4
        %v1851 = vadd.f32 %v1849, %v1850
        %v1852 = vrot.slane %v1851, 2
        %v1853 = vadd.f32 %v1851, %v1852
        %v1854 = vrot.slane %v1853, 1
        %v1855 = vadd.f32 %v1853, %v1854
        %v1857 = vrot.slane %v1831, 4
        %v1859 = vsel %vm1794, %v1857, 0.0
        %v1860 = vrot.slane %v1859, 4
        %v1861 = vadd.f32 %v1859, %v1860
        %v1862 = vrot.slane %v1861, 2
        %v1863 = vadd.f32 %v1861, %v1862
        %v1864 = vrot.slane %v1863, 1
        %v1865 = vadd.f32 %v1863, %v1864
        %v1866 = vsel %vm1794, %v1838, %v1848
        %v1867 = vsel %vm1794, %v1855, %v1865
        %v1868 = vrcp.pop %v1866
        %v1869 = vrcp.pop %v1867
        %v1870 = vmul.f32 %v1829, %v1868
        %v1871 = vmul.f32 %v1831, %v1869
        %v1872 = vlaneseq
        %v1873 = vshrl.u32 %v1872, 7
        %v1874 = vsub.s32 0, %v1873
        %v1875 = vrot.slane %v1870, %v1874
        %v1876 = vmul.f32 %v1875, %v1750
        %v1877 = vmul.f32 %v1875, %v1751
        %v1878 = vlaneseq
        %v1879 = vshrl.u32 %v1878, 7
        %v1880 = vsub.s32 4, %v1879
        %v1881 = vrot.slane %v1870, %v1880
        %v1882 = vmul.f32 %v1881, %v1758
        %v1883 = vmul.f32 %v1881, %v1759
        %v1884 = vadd.f32 %v1876, %v1882
        %v1885 = vadd.f32 %v1877, %v1883
        %v1886 = vlaneseq
        %v1887 = vshrl.u32 %v1886, 7
        %v1888 = vsub.s32 0, %v1887
        %v1889 = vrot.slane %v1871, %v1888
        %v1890 = vmul.f32 %v1889, %v1766
        %v1891 = vmul.f32 %v1889, %v1767
        %v1892 = vadd.f32 %v1884, %v1890
        %v1893 = vadd.f32 %v1885, %v1891
        %v1894 = vlaneseq
        %v1895 = vshrl.u32 %v1894, 7
        %v1896 = vsub.s32 4, %v1895
        %v1897 = vrot.slane %v1871, %v1896
        %v1898 = vmul.f32 %v1897, %v1774
        %v1899 = vmul.f32 %v1897, %v1775
        %v1900 = vadd.f32 %v1892, %v1898
        %v1901 = vadd.f32 %v1893, %v1899
        %v1902 = vmul.f32 %v1900, %v1900
        %v1903 = vmul.f32 %v1901, %v1901
        %v1904 = vrot.slane %v1902, 4
        %v1905 = vadd.f32 %v1902, %v1904
        %v1906 = vrot.slane %v1905, 2
        %v1907 = vadd.f32 %v1905, %v1906
        %v1908 = vrot.slane %v1907, 1
        %v1909 = vadd.f32 %v1907, %v1908
        %v1910 = vrot.slane %v1903, 4
        %v1911 = vadd.f32 %v1903, %v1910
        %v1912 = vrot.slane %v1911, 2
        %v1913 = vadd.f32 %v1911, %v1912
        %v1914 = vrot.slane %v1913, 1
        %v1915 = vadd.f32 %v1913, %v1914
        %v1916 = vadd.f32 %v1909, 1e-16
        %v1917 = vadd.f32 %v1915, 1e-16
        %v1918 = vrsqrt.pop %v1916
        %v1919 = vrsqrt.pop %v1917
        %v1920 = vmul.f32 %v1909, %v1918
        %v1921 = vmul.f32 %v1915, %v1919
        %v1922 = vadd.f32 %v1909, 1.0
        %v1923 = vadd.f32 %v1915, 1.0
        %v1924 = vrcp.pop %v1922
        %v1925 = vrcp.pop %v1923
        %v1926 = vmul.f32 %v1920, %v1924
        %v1927 = vmul.f32 %v1921, %v1925
        %v1928 = vmul.f32 %v1900, %v1926
        %v1929 = vmul.f32 %v1901, %v1927
        %v1930 = vlaneseq
        %v1931 = vshrl.u32 %v1930, 7
        %v1932 = vsub.s32 1, %v1931
        %v1933 = vrot.slane %v1870, %v1932
        %v1934 = vmul.f32 %v1933, %v1752
        %v1935 = vmul.f32 %v1933, %v1753
        %v1936 = vlaneseq
        %v1937 = vshrl.u32 %v1936, 7
        %v1938 = vsub.s32 5, %v1937
        %v1939 = vrot.slane %v1870, %v1938
        %v1940 = vmul.f32 %v1939, %v1760
        %v1941 = vmul.f32 %v1939, %v1761
        %v1942 = vadd.f32 %v1934, %v1940
        %v1943 = vadd.f32 %v1935, %v1941
        %v1944 = vlaneseq
        %v1945 = vshrl.u32 %v1944, 7
        %v1946 = vsub.s32 1, %v1945
        %v1947 = vrot.slane %v1871, %v1946
        %v1948 = vmul.f32 %v1947, %v1768
        %v1949 = vmul.f32 %v1947, %v1769
        %v1950 = vadd.f32 %v1942, %v1948
        %v1951 = vadd.f32 %v1943, %v1949
        %v1952 = vlaneseq
        %v1953 = vshrl.u32 %v1952, 7
        %v1954 = vsub.s32 5, %v1953
        %v1955 = vrot.slane %v1871, %v1954
        %v1956 = vmul.f32 %v1955, %v1776
        %v1957 = vmul.f32 %v1955, %v1777
        %v1958 = vadd.f32 %v1950, %v1956
        %v1959 = vadd.f32 %v1951, %v1957
        %v1960 = vmul.f32 %v1958, %v1958
        %v1961 = vmul.f32 %v1959, %v1959
        %v1962 = vrot.slane %v1960, 4
        %v1963 = vadd.f32 %v1960, %v1962
        %v1964 = vrot.slane %v1963, 2
        %v1965 = vadd.f32 %v1963, %v1964
        %v1966 = vrot.slane %v1965, 1
        %v1967 = vadd.f32 %v1965, %v1966
        %v1968 = vrot.slane %v1961, 4
        %v1969 = vadd.f32 %v1961, %v1968
        %v1970 = vrot.slane %v1969, 2
        %v1971 = vadd.f32 %v1969, %v1970
        %v1972 = vrot.slane %v1971, 1
        %v1973 = vadd.f32 %v1971, %v1972
        %v1974 = vadd.f32 %v1967, 1e-16
        %v1975 = vadd.f32 %v1973, 1e-16
        %v1976 = vrsqrt.pop %v1974
        %v1977 = vrsqrt.pop %v1975
        %v1978 = vmul.f32 %v1967, %v1976
        %v1979 = vmul.f32 %v1973, %v1977
        %v1980 = vadd.f32 %v1967, 1.0
        %v1981 = vadd.f32 %v1973, 1.0
        %v1982 = vrcp.pop %v1980
        %v1983 = vrcp.pop %v1981
        %v1984 = vmul.f32 %v1978, %v1982
        %v1985 = vmul.f32 %v1979, %v1983
        %v1986 = vmul.f32 %v1958, %v1984
        %v1987 = vmul.f32 %v1959, %v1985
        %v1988 = vlaneseq
        %v1989 = vshrl.u32 %v1988, 7
        %v1990 = vsub.s32 2, %v1989
        %v1991 = vrot.slane %v1870, %v1990
        %v1992 = vmul.f32 %v1991, %v1754
        %v1993 = vmul.f32 %v1991, %v1755
        %v1994 = vlaneseq
        %v1995 = vshrl.u32 %v1994, 7
        %v1996 = vsub.s32 6, %v1995
        %v1997 = vrot.slane %v1870, %v1996
        %v1998 = vmul.f32 %v1997, %v1762
        %v1999 = vmul.f32 %v1997, %v1763
        %v2000 = vadd.f32 %v1992, %v1998
        %v2001 = vadd.f32 %v1993, %v1999
        %v2002 = vlaneseq
        %v2003 = vshrl.u32 %v2002, 7
        %v2004 = vsub.s32 2, %v2003
        %v2005 = vrot.slane %v1871, %v2004
        %v2006 = vmul.f32 %v2005, %v1770
        %v2007 = vmul.f32 %v2005, %v1771
        %v2008 = vadd.f32 %v2000, %v2006
        %v2009 = vadd.f32 %v2001, %v2007
        %v2010 = vlaneseq
        %v2011 = vshrl.u32 %v2010, 7
        %v2012 = vsub.s32 6, %v2011
        %v2013 = vrot.slane %v1871, %v2012
        %v2014 = vmul.f32 %v2013, %v1778
        %v2015 = vmul.f32 %v2013, %v1779
        %v2016 = vadd.f32 %v2008, %v2014
        %v2017 = vadd.f32 %v2009, %v2015
        %v2018 = vmul.f32 %v2016, %v2016
        %v2019 = vmul.f32 %v2017, %v2017
        %v2020 = vrot.slane %v2018, 4
        %v2021 = vadd.f32 %v2018, %v2020
        %v2022 = vrot.slane %v2021, 2
        %v2023 = vadd.f32 %v2021, %v2022
        %v2024 = vrot.slane %v2023, 1
        %v2025 = vadd.f32 %v2023, %v2024
        %v2026 = vrot.slane %v2019, 4
        %v2027 = vadd.f32 %v2019, %v2026
        %v2028 = vrot.slane %v2027, 2
        %v2029 = vadd.f32 %v2027, %v2028
        %v2030 = vrot.slane %v2029, 1
        %v2031 = vadd.f32 %v2029, %v2030
        %v2032 = vadd.f32 %v2025, 1e-16
        %v2033 = vadd.f32 %v2031, 1e-16
        %v2034 = vrsqrt.pop %v2032
        %v2035 = vrsqrt.pop %v2033
        %v2036 = vmul.f32 %v2025, %v2034
        %v2037 = vmul.f32 %v2031, %v2035
        %v2038 = vadd.f32 %v2025, 1.0
        %v2039 = vadd.f32 %v2031, 1.0
        %v2040 = vrcp.pop %v2038
        %v2041 = vrcp.pop %v2039
        %v2042 = vmul.f32 %v2036, %v2040
        %v2043 = vmul.f32 %v2037, %v2041
        %v2044 = vmul.f32 %v2016, %v2042
        %v2045 = vmul.f32 %v2017, %v2043
        %v2046 = vlaneseq
        %v2047 = vshrl.u32 %v2046, 7
        %v2048 = vsub.s32 3, %v2047
        %v2049 = vrot.slane %v1870, %v2048
        %v2050 = vmul.f32 %v2049, %v1756
        %v2051 = vmul.f32 %v2049, %v1757
        %v2052 = vlaneseq
        %v2053 = vshrl.u32 %v2052, 7
        %v2054 = vsub.s32 7, %v2053
        %v2055 = vrot.slane %v1870, %v2054
        %v2056 = vmul.f32 %v2055, %v1764
        %v2057 = vmul.f32 %v2055, %v1765
        %v2058 = vadd.f32 %v2050, %v2056
        %v2059 = vadd.f32 %v2051, %v2057
        %v2060 = vlaneseq
        %v2061 = vshrl.u32 %v2060, 7
        %v2062 = vsub.s32 3, %v2061
        %v2063 = vrot.slane %v1871, %v2062
        %v2064 = vmul.f32 %v2063, %v1772
        %v2065 = vmul.f32 %v2063, %v1773
        %v2066 = vadd.f32 %v2058, %v2064
        %v2067 = vadd.f32 %v2059, %v2065
        %v2068 = vlaneseq
        %v2069 = vshrl.u32 %v2068, 7
        %v2070 = vsub.s32 7, %v2069
        %v2071 = vrot.slane %v1871, %v2070
        %v2072 = vmul.f32 %v2071, %v1780
        %v2073 = vmul.f32 %v2071, %v1781
        %v2074 = vadd.f32 %v2066, %v2072
        %v2075 = vadd.f32 %v2067, %v2073
        %v2076 = vmul.f32 %v2074, %v2074
        %v2077 = vmul.f32 %v2075, %v2075
        %v2078 = vrot.slane %v2076, 4
        %v2079 = vadd.f32 %v2076, %v2078
        %v2080 = vrot.slane %v2079, 2
        %v2081 = vadd.f32 %v2079, %v2080
        %v2082 = vrot.slane %v2081, 1
        %v2083 = vadd.f32 %v2081, %v2082
        %v2084 = vrot.slane %v2077, 4
        %v2085 = vadd.f32 %v2077, %v2084
        %v2086 = vrot.slane %v2085, 2
        %v2087 = vadd.f32 %v2085, %v2086
        %v2088 = vrot.slane %v2087, 1
        %v2089 = vadd.f32 %v2087, %v2088
        %v2090 = vadd.f32 %v2083, 1e-16
        %v2091 = vadd.f32 %v2089, 1e-16
        %v2092 = vrsqrt.pop %v2090
        %v2093 = vrsqrt.pop %v2091
        %v2094 = vmul.f32 %v2083, %v2092
        %v2095 = vmul.f32 %v2089, %v2093
        %v2096 = vadd.f32 %v2083, 1.0
        %v2097 = vadd.f32 %v2089, 1.0
        %v2098 = vrcp.pop %v2096
        %v2099 = vrcp.pop %v2097
        %v2100 = vmul.f32 %v2094, %v2098
        %v2101 = vmul.f32 %v2095, %v2099
        %v2102 = vmul.f32 %v2074, %v2100
        %v2103 = vmul.f32 %v2075, %v2101
        %v2104 = vmul.f32 %v1928, %v1750
        %v2105 = vmul.f32 %v1929, %v1751
        %v2106 = vrot.slane %v2104, 4
        %v2107 = vadd.f32 %v2104, %v2106
        %v2108 = vrot.slane %v2107, 2
        %v2109 = vadd.f32 %v2107, %v2108
        %v2110 = vrot.slane %v2109, 1
        %v2111 = vadd.f32 %v2109, %v2110
        %v2112 = vrot.slane %v2105, 4
        %v2113 = vadd.f32 %v2105, %v2112
        %v2114 = vrot.slane %v2113, 2
        %v2115 = vadd.f32 %v2113, %v2114
        %v2116 = vrot.slane %v2115, 1
        %v2117 = vadd.f32 %v2115, %v2116
        %v2118 = vmul.f32 %v1986, %v1752
        %v2119 = vmul.f32 %v1987, %v1753
        %v2120 = vrot.slane %v2118, 4
        %v2121 = vadd.f32 %v2118, %v2120
        %v2122 = vrot.slane %v2121, 2
        %v2123 = vadd.f32 %v2121, %v2122
        %v2124 = vrot.slane %v2123, 1
        %v2125 = vadd.f32 %v2123, %v2124
        %v2126 = vrot.slane %v2119, 4
        %v2127 = vadd.f32 %v2119, %v2126
        %v2128 = vrot.slane %v2127, 2
        %v2129 = vadd.f32 %v2127, %v2128
        %v2130 = vrot.slane %v2129, 1
        %v2131 = vadd.f32 %v2129, %v2130
        %v2132 = vmul.f32 %v2044, %v1754
        %v2133 = vmul.f32 %v2045, %v1755
        %v2134 = vrot.slane %v2132, 4
        %v2135 = vadd.f32 %v2132, %v2134
        %v2136 = vrot.slane %v2135, 2
        %v2137 = vadd.f32 %v2135, %v2136
        %v2138 = vrot.slane %v2137, 1
        %v2139 = vadd.f32 %v2137, %v2138
        %v2140 = vrot.slane %v2133, 4
        %v2141 = vadd.f32 %v2133, %v2140
        %v2142 = vrot.slane %v2141, 2
        %v2143 = vadd.f32 %v2141, %v2142
        %v2144 = vrot.slane %v2143, 1
        %v2145 = vadd.f32 %v2143, %v2144
        %v2146 = vmul.f32 %v2102, %v1756
        %v2147 = vmul.f32 %v2103, %v1757
        %v2148 = vrot.slane %v2146, 4
        %v2149 = vadd.f32 %v2146, %v2148
        %v2150 = vrot.slane %v2149, 2
        %v2151 = vadd.f32 %v2149, %v2150
        %v2152 = vrot.slane %v2151, 1
        %v2153 = vadd.f32 %v2151, %v2152
        %v2154 = vrot.slane %v2147, 4
        %v2155 = vadd.f32 %v2147, %v2154
        %v2156 = vrot.slane %v2155, 2
        %v2157 = vadd.f32 %v2155, %v2156
        %v2158 = vrot.slane %v2157, 1
        %v2159 = vadd.f32 %v2157, %v2158
        %v2160 = vmul.f32 %v1928, %v1758
        %v2161 = vmul.f32 %v1929, %v1759
        %v2162 = vrot.slane %v2160, 4
        %v2163 = vadd.f32 %v2160, %v2162
        %v2164 = vrot.slane %v2163, 2
        %v2165 = vadd.f32 %v2163, %v2164
        %v2166 = vrot.slane %v2165, 1
        %v2167 = vadd.f32 %v2165, %v2166
        %v2168 = vrot.slane %v2161, 4
        %v2169 = vadd.f32 %v2161, %v2168
        %v2170 = vrot.slane %v2169, 2
        %v2171 = vadd.f32 %v2169, %v2170
        %v2172 = vrot.slane %v2171, 1
        %v2173 = vadd.f32 %v2171, %v2172
        %v2174 = vmul.f32 %v1986, %v1760
        %v2175 = vmul.f32 %v1987, %v1761
        %v2176 = vrot.slane %v2174, 4
        %v2177 = vadd.f32 %v2174, %v2176
        %v2178 = vrot.slane %v2177, 2
        %v2179 = vadd.f32 %v2177, %v2178
        %v2180 = vrot.slane %v2179, 1
        %v2181 = vadd.f32 %v2179, %v2180
        %v2182 = vrot.slane %v2175, 4
        %v2183 = vadd.f32 %v2175, %v2182
        %v2184 = vrot.slane %v2183, 2
        %v2185 = vadd.f32 %v2183, %v2184
        %v2186 = vrot.slane %v2185, 1
        %v2187 = vadd.f32 %v2185, %v2186
        %v2188 = vmul.f32 %v2044, %v1762
        %v2189 = vmul.f32 %v2045, %v1763
        %v2190 = vrot.slane %v2188, 4
        %v2191 = vadd.f32 %v2188, %v2190
        %v2192 = vrot.slane %v2191, 2
        %v2193 = vadd.f32 %v2191, %v2192
        %v2194 = vrot.slane %v2193, 1
        %v2195 = vadd.f32 %v2193, %v2194
        %v2196 = vrot.slane %v2189, 4
        %v2197 = vadd.f32 %v2189, %v2196
        %v2198 = vrot.slane %v2197, 2
        %v2199 = vadd.f32 %v2197, %v2198
        %v2200 = vrot.slane %v2199, 1
        %v2201 = vadd.f32 %v2199, %v2200
        %v2202 = vmul.f32 %v2102, %v1764
        %v2203 = vmul.f32 %v2103, %v1765
        %v2204 = vrot.slane %v2202, 4
        %v2205 = vadd.f32 %v2202, %v2204
        %v2206 = vrot.slane %v2205, 2
        %v2207 = vadd.f32 %v2205, %v2206
        %v2208 = vrot.slane %v2207, 1
        %v2209 = vadd.f32 %v2207, %v2208
        %v2210 = vrot.slane %v2203, 4
        %v2211 = vadd.f32 %v2203, %v2210
        %v2212 = vrot.slane %v2211, 2
        %v2213 = vadd.f32 %v2211, %v2212
        %v2214 = vrot.slane %v2213, 1
        %v2215 = vadd.f32 %v2213, %v2214
        %v2216 = vmul.f32 %v1928, %v1766
        %v2217 = vmul.f32 %v1929, %v1767
        %v2218 = vrot.slane %v2216, 4
        %v2219 = vadd.f32 %v2216, %v2218
        %v2220 = vrot.slane %v2219, 2
        %v2221 = vadd.f32 %v2219, %v2220
        %v2222 = vrot.slane %v2221, 1
        %v2223 = vadd.f32 %v2221, %v2222
        %v2224 = vrot.slane %v2217, 4
        %v2225 = vadd.f32 %v2217, %v2224
        %v2226 = vrot.slane %v2225, 2
        %v2227 = vadd.f32 %v2225, %v2226
        %v2228 = vrot.slane %v2227, 1
        %v2229 = vadd.f32 %v2227, %v2228
        %v2230 = vmul.f32 %v1986, %v1768
        %v2231 = vmul.f32 %v1987, %v1769
        %v2232 = vrot.slane %v2230, 4
        %v2233 = vadd.f32 %v2230, %v2232
        %v2234 = vrot.slane %v2233, 2
        %v2235 = vadd.f32 %v2233, %v2234
        %v2236 = vrot.slane %v2235, 1
        %v2237 = vadd.f32 %v2235, %v2236
        %v2238 = vrot.slane %v2231, 4
        %v2239 = vadd.f32 %v2231, %v2238
        %v2240 = vrot.slane %v2239, 2
        %v2241 = vadd.f32 %v2239, %v2240
        %v2242 = vrot.slane %v2241, 1
        %v2243 = vadd.f32 %v2241, %v2242
        %v2244 = vmul.f32 %v2044, %v1770
        %v2245 = vmul.f32 %v2045, %v1771
        %v2246 = vrot.slane %v2244, 4
        %v2247 = vadd.f32 %v2244, %v2246
        %v2248 = vrot.slane %v2247, 2
        %v2249 = vadd.f32 %v2247, %v2248
        %v2250 = vrot.slane %v2249, 1
        %v2251 = vadd.f32 %v2249, %v2250
        %v2252 = vrot.slane %v2245, 4
        %v2253 = vadd.f32 %v2245, %v2252
        %v2254 = vrot.slane %v2253, 2
        %v2255 = vadd.f32 %v2253, %v2254
        %v2256 = vrot.slane %v2255, 1
        %v2257 = vadd.f32 %v2255, %v2256
        %v2258 = vmul.f32 %v2102, %v1772
        %v2259 = vmul.f32 %v2103, %v1773
        %v2260 = vrot.slane %v2258, 4
        %v2261 = vadd.f32 %v2258, %v2260
        %v2262 = vrot.slane %v2261, 2
        %v2263 = vadd.f32 %v2261, %v2262
        %v2264 = vrot.slane %v2263, 1
        %v2265 = vadd.f32 %v2263, %v2264
        %v2266 = vrot.slane %v2259, 4
        %v2267 = vadd.f32 %v2259, %v2266
        %v2268 = vrot.slane %v2267, 2
        %v2269 = vadd.f32 %v2267, %v2268
        %v2270 = vrot.slane %v2269, 1
        %v2271 = vadd.f32 %v2269, %v2270
        %v2272 = vmul.f32 %v1928, %v1774
        %v2273 = vmul.f32 %v1929, %v1775
        %v2274 = vrot.slane %v2272, 4
        %v2275 = vadd.f32 %v2272, %v2274
        %v2276 = vrot.slane %v2275, 2
        %v2277 = vadd.f32 %v2275, %v2276
        %v2278 = vrot.slane %v2277, 1
        %v2279 = vadd.f32 %v2277, %v2278
        %v2280 = vrot.slane %v2273, 4
        %v2281 = vadd.f32 %v2273, %v2280
        %v2282 = vrot.slane %v2281, 2
        %v2283 = vadd.f32 %v2281, %v2282
        %v2284 = vrot.slane %v2283, 1
        %v2285 = vadd.f32 %v2283, %v2284
        %v2286 = vmul.f32 %v1986, %v1776
        %v2287 = vmul.f32 %v1987, %v1777
        %v2288 = vrot.slane %v2286, 4
        %v2289 = vadd.f32 %v2286, %v2288
        %v2290 = vrot.slane %v2289, 2
        %v2291 = vadd.f32 %v2289, %v2290
        %v2292 = vrot.slane %v2291, 1
        %v2293 = vadd.f32 %v2291, %v2292
        %v2294 = vrot.slane %v2287, 4
        %v2295 = vadd.f32 %v2287, %v2294
        %v2296 = vrot.slane %v2295, 2
        %v2297 = vadd.f32 %v2295, %v2296
        %v2298 = vrot.slane %v2297, 1
        %v2299 = vadd.f32 %v2297, %v2298
        %v2300 = vmul.f32 %v2044, %v1778
        %v2301 = vmul.f32 %v2045, %v1779
        %v2302 = vrot.slane %v2300, 4
        %v2303 = vadd.f32 %v2300, %v2302
        %v2304 = vrot.slane %v2303, 2
        %v2305 = vadd.f32 %v2303, %v2304
        %v2306 = vrot.slane %v2305, 1
        %v2307 = vadd.f32 %v2305, %v2306
        %v2308 = vrot.slane %v2301, 4
        %v2309 = vadd.f32 %v2301, %v2308
        %v2310 = vrot.slane %v2309, 2
        %v2311 = vadd.f32 %v2309, %v2310
        %v2312 = vrot.slane %v2311, 1
        %v2313 = vadd.f32 %v2311, %v2312
        %v2314 = vmul.f32 %v2102, %v1780
        %v2315 = vmul.f32 %v2103, %v1781
        %v2316 = vrot.slane %v2314, 4
        %v2317 = vadd.f32 %v2314, %v2316
        %v2318 = vrot.slane %v2317, 2
        %v2319 = vadd.f32 %v2317, %v2318
        %v2320 = vrot.slane %v2319, 1
        %v2321 = vadd.f32 %v2319, %v2320
        %v2322 = vrot.slane %v2315, 4
        %v2323 = vadd.f32 %v2315, %v2322
        %v2324 = vrot.slane %v2323, 2
        %v2325 = vadd.f32 %v2323, %v2324
        %v2326 = vrot.slane %v2325, 1
        %v2327 = vadd.f32 %v2325, %v2326
        %vm2328 = vcmask 1040384
        %v2329 = vsel %vm2328, %v2111, %v2125
        %v2330 = vsel %vm2328, %v2117, %v2131
        %vm2331 = vcmask 1041408
        %v2332 = vsel %vm2331, %v2329, %v2139
        %v2333 = vsel %vm2331, %v2330, %v2145
        %vm2334 = vcmask 1042432
        %v2335 = vsel %vm2334, %v2332, %v2153
        %v2336 = vsel %vm2334, %v2333, %v2159
        %v2337 = vsel %vm1794, %v2335, %v2167
        %v2338 = vsel %vm1794, %v2336, %v2173
        %vm2339 = vcmask 1044480
        %v2340 = vsel %vm2339, %v2337, %v2181
        %v2341 = vsel %vm2339, %v2338, %v2187
        %vm2342 = vcmask 1045504
        %v2343 = vsel %vm2342, %v2340, %v2195
        %v2344 = vsel %vm2342, %v2341, %v2201
        %vm2345 = vcmask 1046528
        %v2346 = vsel %vm2345, %v2343, %v2209
        %v2347 = vsel %vm2345, %v2344, %v2215
        %v2348 = vsel %vm2328, %v2223, %v2237
        %v2349 = vsel %vm2328, %v2229, %v2243
        %v2350 = vsel %vm2331, %v2348, %v2251
        %v2351 = vsel %vm2331, %v2349, %v2257
        %v2352 = vsel %vm2334, %v2350, %v2265
        %v2353 = vsel %vm2334, %v2351, %v2271
        %v2354 = vsel %vm1794, %v2352, %v2279
        %v2355 = vsel %vm1794, %v2353, %v2285
        %v2356 = vsel %vm2339, %v2354, %v2293
        %v2357 = vsel %vm2339, %v2355, %v2299
        %v2358 = vsel %vm2342, %v2356, %v2307
        %v2359 = vsel %vm2342, %v2357, %v2313
        %v2360 = vsel %vm2345, %v2358, %v2321
        %v2361 = vsel %vm2345, %v2359, %v2327
        %v2362 = vadd.f32 %v1787, %v2346
        %v2363 = vadd.f32 %v1787, %v2347
        %v2364 = vadd.f32 %v1792, %v2360
        %v2365 = vadd.f32 %v1792, %v2361
        %v2366 = vsel %vm1794, %v2362, -inf
        %v2367 = vrot.slane %v2366, 4
        %v2368 = vmax.f32 %v2366, %v2367
        %v2369 = vrot.slane %v2368, 2
        %v2370 = vmax.f32 %v2368, %v2369
        %v2371 = vrot.slane %v2370, 1
        %v2372 = vmax.f32 %v2370, %v2371
        %v2373 = vsel %vm1794, %v2363, -inf
        %v2374 = vrot.slane %v2373, 4
        %v2375 = vmax.f32 %v2373, %v2374
        %v2376 = vrot.slane %v2375, 2
        %v2377 = vmax.f32 %v2375, %v2376
        %v2378 = vrot.slane %v2377, 1
        %v2379 = vmax.f32 %v2377, %v2378
        %v2380 = vsel %vm1802, %v2362, -inf
        %v2381 = vrot.slane %v2380, 4
        %v2382 = vmax.f32 %v2380, %v2381
        %v2383 = vrot.slane %v2382, 2
        %v2384 = vmax.f32 %v2382, %v2383
        %v2385 = vrot.slane %v2384, 1
        %v2386 = vmax.f32 %v2384, %v2385
        %v2387 = vsel %vm1802, %v2363, -inf
        %v2388 = vrot.slane %v2387, 4
        %v2389 = vmax.f32 %v2387, %v2388
        %v2390 = vrot.slane %v2389, 2
        %v2391 = vmax.f32 %v2389, %v2390
        %v2392 = vrot.slane %v2391, 1
        %v2393 = vmax.f32 %v2391, %v2392
        %v2394 = vsel %vm1794, %v2364, -inf
        %v2395 = vrot.slane %v2394, 4
        %v2396 = vmax.f32 %v2394, %v2395
        %v2397 = vrot.slane %v2396, 2
        %v2398 = vmax.f32 %v2396, %v2397
        %v2399 = vrot.slane %v2398, 1
        %v2400 = vmax.f32 %v2398, %v2399
        %v2401 = vsel %vm1794, %v2365, -inf
        %v2402 = vrot.slane %v2401, 4
        %v2403 = vmax.f32 %v2401, %v2402
        %v2404 = vrot.slane %v2403, 2
        %v2405 = vmax.f32 %v2403, %v2404
        %v2406 = vrot.slane %v2405, 1
        %v2407 = vmax.f32 %v2405, %v2406
        %v2408 = vsel %vm1802, %v2364, -inf
        %v2409 = vrot.slane %v2408, 4
        %v2410 = vmax.f32 %v2408, %v2409
        %v2411 = vrot.slane %v2410, 2
        %v2412 = vmax.f32 %v2410, %v2411
        %v2413 = vrot.slane %v2412, 1
        %v2414 = vmax.f32 %v2412, %v2413
        %v2415 = vsel %vm1802, %v2365, -inf
        %v2416 = vrot.slane %v2415, 4
        %v2417 = vmax.f32 %v2415, %v2416
        %v2418 = vrot.slane %v2417, 2
        %v2419 = vmax.f32 %v2417, %v2418
        %v2420 = vrot.slane %v2419, 1
        %v2421 = vmax.f32 %v2419, %v2420
        %v2422 = vsel %vm1794, %v2372, %v2386
        %v2423 = vsel %vm1794, %v2379, %v2393
        %v2424 = vsel %vm1794, %v2400, %v2414
        %v2425 = vsel %vm1794, %v2407, %v2421
        %v2426 = vsub.f32 %v2362, %v2422
        %v2427 = vsub.f32 %v2363, %v2423
        %v2428 = vsub.f32 %v2364, %v2424
        %v2429 = vsub.f32 %v2365, %v2425
        %v2430 = vmul.f32 %v2426, 1.442695
        %v2431 = vpow.pop %v2430
        %v2432 = vmul.f32 %v2427, 1.442695
        %v2433 = vpow.pop %v2432
        %v2434 = vmul.f32 %v2428, 1.442695
        %v2435 = vpow.pop %v2434
        %v2436 = vmul.f32 %v2429, 1.442695
        %v2437 = vpow.pop %v2436
        %v2438 = vsel %vm1794, %v2431, 0.0
        %v2439 = vrot.slane %v2438, 4
        %v2440 = vadd.f32 %v2438, %v2439
        %v2441 = vrot.slane %v2440, 2
        %v2442 = vadd.f32 %v2440, %v2441
        %v2443 = vrot.slane %v2442, 1
        %v2444 = vadd.f32 %v2442, %v2443
        %v2445 = vsel %vm1794, %v2433, 0.0
        %v2446 = vrot.slane %v2445, 4
        %v2447 = vadd.f32 %v2445, %v2446
        %v2448 = vrot.slane %v2447, 2
        %v2449 = vadd.f32 %v2447, %v2448
        %v2450 = vrot.slane %v2449, 1
        %v2451 = vadd.f32 %v2449, %v2450
        %v2454 = vrot.slane %v2431, 4
        %v2455 = vrot.slane %v2433, 4
        %v2458 = vsel %vm1794, %v2454, 0.0
        %v2459 = vrot.slane %v2458, 4
        %v2460 = vadd.f32 %v2458, %v2459
        %v2461 = vrot.slane %v2460, 2
        %v2462 = vadd.f32 %v2460, %v2461
        %v2463 = vrot.slane %v2462, 1
        %v2464 = vadd.f32 %v2462, %v2463
        %v2465 = vsel %vm1794, %v2455, 0.0
        %v2466 = vrot.slane %v2465, 4
        %v2467 = vadd.f32 %v2465, %v2466
        %v2468 = vrot.slane %v2467, 2
        %v2469 = vadd.f32 %v2467, %v2468
        %v2470 = vrot.slane %v2469, 1
        %v2471 = vadd.f32 %v2469, %v2470
        %v2472 = vsel %vm1794, %v2435, 0.0
        %v2473 = vrot.slane %v2472, 4
        %v2474 = vadd.f32 %v2472, %v2473
        %v2475 = vrot.slane %v2474, 2
        %v2476 = vadd.f32 %v2474, %v2475
        %v2477 = vrot.slane %v2476, 1
        %v2478 = vadd.f32 %v2476, %v2477
        %v2479 = vsel %vm1794, %v2437, 0.0
        %v2480 = vrot.slane %v2479, 4
        %v2481 = vadd.f32 %v2479, %v2480
        %v2482 = vrot.slane %v2481, 2
        %v2483 = vadd.f32 %v2481, %v2482
        %v2484 = vrot.slane %v2483, 1
        %v2485 = vadd.f32 %v2483, %v2484
        %v2488 = vrot.slane %v2435, 4
        %v2489 = vrot.slane %v2437, 4
        %v2492 = vsel %vm1794, %v2488, 0.0
        %v2493 = vrot.slane %v2492, 4
        %v2494 = vadd.f32 %v2492, %v2493
        %v2495 = vrot.slane %v2494, 2
        %v2496 = vadd.f32 %v2494, %v2495
        %v2497 = vrot.slane %v2496, 1
        %v2498 = vadd.f32 %v2496, %v2497
        %v2499 = vsel %vm1794, %v2489, 0.0
        %v2500 = vrot.slane %v2499, 4
        %v2501 = vadd.f32 %v2499, %v2500
        %v2502 = vrot.slane %v2501, 2
        %v2503 = vadd.f32 %v2501, %v2502
        %v2504 = vrot.slane %v2503, 1
        %v2505 = vadd.f32 %v2503, %v2504
        %v2506 = vsel %vm1794, %v2444, %v2464
        %v2507 = vsel %vm1794, %v2451, %v2471
        %v2508 = vsel %vm1794, %v2478, %v2498
        %v2509 = vsel %vm1794, %v2485, %v2505
        %v2510 = vrcp.pop %v2506
        %v2511 = vrcp.pop %v2507
        %v2512 = vrcp.pop %v2508
        %v2513 = vrcp.pop %v2509
        %v2514 = vmul.f32 %v2431, %v2510
        %v2515 = vmul.f32 %v2433, %v2511
        %v2516 = vmul.f32 %v2435, %v2512
        %v2517 = vmul.f32 %v2437, %v2513
        %v2518 = vlaneseq
        %v2519 = vshrl.u32 %v2518, 7
        %v2520 = vsub.s32 0, %v2519
        %v2521 = vrot.slane %v2514, %v2520
        %v2522 = vlaneseq
        %v2523 = vshrl.u32 %v2522, 7
        %v2524 = vsub.s32 0, %v2523
        %v2525 = vrot.slane %v2515, %v2524
        %v2526 = vmul.f32 %v2521, %v1750
        %v2527 = vmul.f32 %v2525, %v1751
        %v2528 = vlaneseq
        %v2529 = vshrl.u32 %v2528, 7
        %v2530 = vsub.s32 4, %v2529
        %v2531 = vrot.slane %v2514, %v2530
        %v2532 = vlaneseq
        %v2533 = vshrl.u32 %v2532, 7
        %v2534 = vsub.s32 4, %v2533
        %v2535 = vrot.slane %v2515, %v2534
        %v2536 = vmul.f32 %v2531, %v1758
        %v2537 = vmul.f32 %v2535, %v1759
        %v2538 = vadd.f32 %v2526, %v2536
        %v2539 = vadd.f32 %v2527, %v2537
        %v2540 = vlaneseq
        %v2541 = vshrl.u32 %v2540, 7
        %v2542 = vsub.s32 0, %v2541
        %v2543 = vrot.slane %v2516, %v2542
        %v2544 = vlaneseq
        %v2545 = vshrl.u32 %v2544, 7
        %v2546 = vsub.s32 0, %v2545
        %v2547 = vrot.slane %v2517, %v2546
        %v2548 = vmul.f32 %v2543, %v1766
        %v2549 = vmul.f32 %v2547, %v1767
        %v2550 = vadd.f32 %v2538, %v2548
        %v2551 = vadd.f32 %v2539, %v2549
        %v2552 = vlaneseq
        %v2553 = vshrl.u32 %v2552, 7
        %v2554 = vsub.s32 4, %v2553
        %v2555 = vrot.slane %v2516, %v2554
        %v2556 = vlaneseq
        %v2557 = vshrl.u32 %v2556, 7
        %v2558 = vsub.s32 4, %v2557
        %v2559 = vrot.slane %v2517, %v2558
        %v2560 = vmul.f32 %v2555, %v1774
        %v2561 = vmul.f32 %v2559, %v1775
        %v2562 = vadd.f32 %v2550, %v2560
        %v2563 = vadd.f32 %v2551, %v2561
        %v2564 = vmul.f32 %v2562, %v2562
        %v2565 = vmul.f32 %v2563, %v2563
        %v2566 = vrot.slane %v2564, 4
        %v2567 = vadd.f32 %v2564, %v2566
        %v2568 = vrot.slane %v2567, 2
        %v2569 = vadd.f32 %v2567, %v2568
        %v2570 = vrot.slane %v2569, 1
        %v2571 = vadd.f32 %v2569, %v2570
        %v2572 = vrot.slane %v2565, 4
        %v2573 = vadd.f32 %v2565, %v2572
        %v2574 = vrot.slane %v2573, 2
        %v2575 = vadd.f32 %v2573, %v2574
        %v2576 = vrot.slane %v2575, 1
        %v2577 = vadd.f32 %v2575, %v2576
        %v2578 = vadd.f32 %v2571, 1e-16
        %v2579 = vadd.f32 %v2577, 1e-16
        %v2580 = vrsqrt.pop %v2578
        %v2581 = vrsqrt.pop %v2579
        %v2582 = vmul.f32 %v2571, %v2580
        %v2583 = vmul.f32 %v2577, %v2581
        %v2584 = vadd.f32 %v2571, 1.0
        %v2585 = vadd.f32 %v2577, 1.0
        %v2586 = vrcp.pop %v2584
        %v2587 = vrcp.pop %v2585
        %v2588 = vmul.f32 %v2582, %v2586
        %v2589 = vmul.f32 %v2583, %v2587
        %v2590 = vmul.f32 %v2562, %v2588
        %v2591 = vmul.f32 %v2563, %v2589
        %v2592 = vlaneseq
        %v2593 = vshrl.u32 %v2592, 7
        %v2594 = vsub.s32 1, %v2593
        %v2595 = vrot.slane %v2514, %v2594
        %v2596 = vlaneseq
        %v2597 = vshrl.u32 %v2596, 7
        %v2598 = vsub.s32 1, %v2597
        %v2599 = vrot.slane %v2515, %v2598
        %v2600 = vmul.f32 %v2595, %v1752
        %v2601 = vmul.f32 %v2599, %v1753
        %v2602 = vlaneseq
        %v2603 = vshrl.u32 %v2602, 7
        %v2604 = vsub.s32 5, %v2603
        %v2605 = vrot.slane %v2514, %v2604
        %v2606 = vlaneseq
        %v2607 = vshrl.u32 %v2606, 7
        %v2608 = vsub.s32 5, %v2607
        %v2609 = vrot.slane %v2515, %v2608
        %v2610 = vmul.f32 %v2605, %v1760
        %v2611 = vmul.f32 %v2609, %v1761
        %v2612 = vadd.f32 %v2600, %v2610
        %v2613 = vadd.f32 %v2601, %v2611
        %v2614 = vlaneseq
        %v2615 = vshrl.u32 %v2614, 7
        %v2616 = vsub.s32 1, %v2615
        %v2617 = vrot.slane %v2516, %v2616
        %v2618 = vlaneseq
        %v2619 = vshrl.u32 %v2618, 7
        %v2620 = vsub.s32 1, %v2619
        %v2621 = vrot.slane %v2517, %v2620
        %v2622 = vmul.f32 %v2617, %v1768
        %v2623 = vmul.f32 %v2621, %v1769
        %v2624 = vadd.f32 %v2612, %v2622
        %v2625 = vadd.f32 %v2613, %v2623
        %v2626 = vlaneseq
        %v2627 = vshrl.u32 %v2626, 7
        %v2628 = vsub.s32 5, %v2627
        %v2629 = vrot.slane %v2516, %v2628
        %v2630 = vlaneseq
        %v2631 = vshrl.u32 %v2630, 7
        %v2632 = vsub.s32 5, %v2631
        %v2633 = vrot.slane %v2517, %v2632
        %v2634 = vmul.f32 %v2629, %v1776
        %v2635 = vmul.f32 %v2633, %v1777
        %v2636 = vadd.f32 %v2624, %v2634
        %v2637 = vadd.f32 %v2625, %v2635
        %v2638 = vmul.f32 %v2636, %v2636
        %v2639 = vmul.f32 %v2637, %v2637
        %v2640 = vrot.slane %v2638, 4
        %v2641 = vadd.f32 %v2638, %v2640
        %v2642 = vrot.slane %v2641, 2
        %v2643 = vadd.f32 %v2641, %v2642
        %v2644 = vrot.slane %v2643, 1
        %v2645 = vadd.f32 %v2643, %v2644
        %v2646 = vrot.slane %v2639, 4
        %v2647 = vadd.f32 %v2639, %v2646
        %v2648 = vrot.slane %v2647, 2
        %v2649 = vadd.f32 %v2647, %v2648
        %v2650 = vrot.slane %v2649, 1
        %v2651 = vadd.f32 %v2649, %v2650
        %v2652 = vadd.f32 %v2645, 1e-16
        %v2653 = vadd.f32 %v2651, 1e-16
        %v2654 = vrsqrt.pop %v2652
        %v2655 = vrsqrt.pop %v2653
        %v2656 = vmul.f32 %v2645, %v2654
        %v2657 = vmul.f32 %v2651, %v2655
        %v2658 = vadd.f32 %v2645, 1.0
        %v2659 = vadd.f32 %v2651, 1.0
        %v2660 = vrcp.pop %v2658
        %v2661 = vrcp.pop %v2659
        %v2662 = vmul.f32 %v2656, %v2660
        %v2663 = vmul.f32 %v2657, %v2661
        %v2664 = vmul.f32 %v2636, %v2662
        %v2665 = vmul.f32 %v2637, %v2663
        %v2666 = vlaneseq
        %v2667 = vshrl.u32 %v2666, 7
        %v2668 = vsub.s32 2, %v2667
        %v2669 = vrot.slane %v2514, %v2668
        %v2670 = vlaneseq
        %v2671 = vshrl.u32 %v2670, 7
        %v2672 = vsub.s32 2, %v2671
        %v2673 = vrot.slane %v2515, %v2672
        %v2674 = vmul.f32 %v2669, %v1754
        %v2675 = vmul.f32 %v2673, %v1755
        %v2676 = vlaneseq
        %v2677 = vshrl.u32 %v2676, 7
        %v2678 = vsub.s32 6, %v2677
        %v2679 = vrot.slane %v2514, %v2678
        %v2680 = vlaneseq
        %v2681 = vshrl.u32 %v2680, 7
        %v2682 = vsub.s32 6, %v2681
        %v2683 = vrot.slane %v2515, %v2682
        %v2684 = vmul.f32 %v2679, %v1762
        %v2685 = vmul.f32 %v2683, %v1763
        %v2686 = vadd.f32 %v2674, %v2684
        %v2687 = vadd.f32 %v2675, %v2685
        %v2688 = vlaneseq
        %v2689 = vshrl.u32 %v2688, 7
        %v2690 = vsub.s32 2, %v2689
        %v2691 = vrot.slane %v2516, %v2690
        %v2692 = vlaneseq
        %v2693 = vshrl.u32 %v2692, 7
        %v2694 = vsub.s32 2, %v2693
        %v2695 = vrot.slane %v2517, %v2694
        %v2696 = vmul.f32 %v2691, %v1770
        %v2697 = vmul.f32 %v2695, %v1771
        %v2698 = vadd.f32 %v2686, %v2696
        %v2699 = vadd.f32 %v2687, %v2697
        %v2700 = vlaneseq
        %v2701 = vshrl.u32 %v2700, 7
        %v2702 = vsub.s32 6, %v2701
        %v2703 = vrot.slane %v2516, %v2702
        %v2704 = vlaneseq
        %v2705 = vshrl.u32 %v2704, 7
        %v2706 = vsub.s32 6, %v2705
        %v2707 = vrot.slane %v2517, %v2706
        %v2708 = vmul.f32 %v2703, %v1778
        %v2709 = vmul.f32 %v2707, %v1779
        %v2710 = vadd.f32 %v2698, %v2708
        %v2711 = vadd.f32 %v2699, %v2709
        %v2712 = vmul.f32 %v2710, %v2710
        %v2713 = vmul.f32 %v2711, %v2711
        %v2714 = vrot.slane %v2712, 4
        %v2715 = vadd.f32 %v2712, %v2714
        %v2716 = vrot.slane %v2715, 2
        %v2717 = vadd.f32 %v2715, %v2716
        %v2718 = vrot.slane %v2717, 1
        %v2719 = vadd.f32 %v2717, %v2718
        %v2720 = vrot.slane %v2713, 4
        %v2721 = vadd.f32 %v2713, %v2720
        %v2722 = vrot.slane %v2721, 2
        %v2723 = vadd.f32 %v2721, %v2722
        %v2724 = vrot.slane %v2723, 1
        %v2725 = vadd.f32 %v2723, %v2724
        %v2726 = vadd.f32 %v2719, 1e-16
        %v2727 = vadd.f32 %v2725, 1e-16
        %v2728 = vrsqrt.pop %v2726
        %v2729 = vrsqrt.pop %v2727
        %v2730 = vmul.f32 %v2719, %v2728
        %v2731 = vmul.f32 %v2725, %v2729
        %v2732 = vadd.f32 %v2719, 1.0
        %v2733 = vadd.f32 %v2725, 1.0
        %v2734 = vrcp.pop %v2732
        %v2735 = vrcp.pop %v2733
        %v2736 = vmul.f32 %v2730, %v2734
        %v2737 = vmul.f32 %v2731, %v2735
        %v2738 = vmul.f32 %v2710, %v2736
        %v2739 = vmul.f32 %v2711, %v2737
        %v2740 = vlaneseq
        %v2741 = vshrl.u32 %v2740, 7
        %v2742 = vsub.s32 3, %v2741
        %v2743 = vrot.slane %v2514, %v2742
        %v2744 = vlaneseq
        %v2745 = vshrl.u32 %v2744, 7
        %v2746 = vsub.s32 3, %v2745
        %v2747 = vrot.slane %v2515, %v2746
        %v2748 = vmul.f32 %v2743, %v1756
        %v2749 = vmul.f32 %v2747, %v1757
        %v2750 = vlaneseq
        %v2751 = vshrl.u32 %v2750, 7
        %v2752 = vsub.s32 7, %v2751
        %v2753 = vrot.slane %v2514, %v2752
        %v2754 = vlaneseq
        %v2755 = vshrl.u32 %v2754, 7
        %v2756 = vsub.s32 7, %v2755
        %v2757 = vrot.slane %v2515, %v2756
        %v2758 = vmul.f32 %v2753, %v1764
        %v2759 = vmul.f32 %v2757, %v1765
        %v2760 = vadd.f32 %v2748, %v2758
        %v2761 = vadd.f32 %v2749, %v2759
        %v2762 = vlaneseq
        %v2763 = vshrl.u32 %v2762, 7
        %v2764 = vsub.s32 3, %v2763
        %v2765 = vrot.slane %v2516, %v2764
        %v2766 = vlaneseq
        %v2767 = vshrl.u32 %v2766, 7
        %v2768 = vsub.s32 3, %v2767
        %v2769 = vrot.slane %v2517, %v2768
        %v2770 = vmul.f32 %v2765, %v1772
        %v2771 = vmul.f32 %v2769, %v1773
        %v2772 = vadd.f32 %v2760, %v2770
        %v2773 = vadd.f32 %v2761, %v2771
        %v2774 = vlaneseq
        %v2775 = vshrl.u32 %v2774, 7
        %v2776 = vsub.s32 7, %v2775
        %v2777 = vrot.slane %v2516, %v2776
        %v2778 = vlaneseq
        %v2779 = vshrl.u32 %v2778, 7
        %v2780 = vsub.s32 7, %v2779
        %v2781 = vrot.slane %v2517, %v2780
        %v2782 = vmul.f32 %v2777, %v1780
        %v2783 = vmul.f32 %v2781, %v1781
        %v2784 = vadd.f32 %v2772, %v2782
        %v2785 = vadd.f32 %v2773, %v2783
        %v2786 = vmul.f32 %v2784, %v2784
        %v2787 = vmul.f32 %v2785, %v2785
        %v2788 = vrot.slane %v2786, 4
        %v2789 = vadd.f32 %v2786, %v2788
        %v2790 = vrot.slane %v2789, 2
        %v2791 = vadd.f32 %v2789, %v2790
        %v2792 = vrot.slane %v2791, 1
        %v2793 = vadd.f32 %v2791, %v2792
        %v2794 = vrot.slane %v2787, 4
        %v2795 = vadd.f32 %v2787, %v2794
        %v2796 = vrot.slane %v2795, 2
        %v2797 = vadd.f32 %v2795, %v2796
        %v2798 = vrot.slane %v2797, 1
        %v2799 = vadd.f32 %v2797, %v2798
        %v2800 = vadd.f32 %v2793, 1e-16
        %v2801 = vadd.f32 %v2799, 1e-16
        %v2802 = vrsqrt.pop %v2800
        %v2803 = vrsqrt.pop %v2801
        %v2804 = vmul.f32 %v2793, %v2802
        %v2805 = vmul.f32 %v2799, %v2803
        %v2806 = vadd.f32 %v2793, 1.0
        %v2807 = vadd.f32 %v2799, 1.0
        %v2808 = vrcp.pop %v2806
        %v2809 = vrcp.pop %v2807
        %v2810 = vmul.f32 %v2804, %v2808
        %v2811 = vmul.f32 %v2805, %v2809
        %v2812 = vmul.f32 %v2784, %v2810
        %v2813 = vmul.f32 %v2785, %v2811
        %v2814 = vmul.f32 %v2590, %v1750
        %v2815 = vmul.f32 %v2591, %v1751
        %v2816 = vrot.slane %v2814, 4
        %v2817 = vadd.f32 %v2814, %v2816
        %v2818 = vrot.slane %v2817, 2
        %v2819 = vadd.f32 %v2817, %v2818
        %v2820 = vrot.slane %v2819, 1
        %v2821 = vadd.f32 %v2819, %v2820
        %v2822 = vrot.slane %v2815, 4
        %v2823 = vadd.f32 %v2815, %v2822
        %v2824 = vrot.slane %v2823, 2
        %v2825 = vadd.f32 %v2823, %v2824
        %v2826 = vrot.slane %v2825, 1
        %v2827 = vadd.f32 %v2825, %v2826
        %v2828 = vmul.f32 %v2664, %v1752
        %v2829 = vmul.f32 %v2665, %v1753
        %v2830 = vrot.slane %v2828, 4
        %v2831 = vadd.f32 %v2828, %v2830
        %v2832 = vrot.slane %v2831, 2
        %v2833 = vadd.f32 %v2831, %v2832
        %v2834 = vrot.slane %v2833, 1
        %v2835 = vadd.f32 %v2833, %v2834
        %v2836 = vrot.slane %v2829, 4
        %v2837 = vadd.f32 %v2829, %v2836
        %v2838 = vrot.slane %v2837, 2
        %v2839 = vadd.f32 %v2837, %v2838
        %v2840 = vrot.slane %v2839, 1
        %v2841 = vadd.f32 %v2839, %v2840
        %v2842 = vmul.f32 %v2738, %v1754
        %v2843 = vmul.f32 %v2739, %v1755
        %v2844 = vrot.slane %v2842, 4
        %v2845 = vadd.f32 %v2842, %v2844
        %v2846 = vrot.slane %v2845, 2
        %v2847 = vadd.f32 %v2845, %v2846
        %v2848 = vrot.slane %v2847, 1
        %v2849 = vadd.f32 %v2847, %v2848
        %v2850 = vrot.slane %v2843, 4
        %v2851 = vadd.f32 %v2843, %v2850
        %v2852 = vrot.slane %v2851, 2
        %v2853 = vadd.f32 %v2851, %v2852
        %v2854 = vrot.slane %v2853, 1
        %v2855 = vadd.f32 %v2853, %v2854
        %v2856 = vmul.f32 %v2812, %v1756
        %v2857 = vmul.f32 %v2813, %v1757
        %v2858 = vrot.slane %v2856, 4
        %v2859 = vadd.f32 %v2856, %v2858
        %v2860 = vrot.slane %v2859, 2
        %v2861 = vadd.f32 %v2859, %v2860
        %v2862 = vrot.slane %v2861, 1
        %v2863 = vadd.f32 %v2861, %v2862
        %v2864 = vrot.slane %v2857, 4
        %v2865 = vadd.f32 %v2857, %v2864
        %v2866 = vrot.slane %v2865, 2
        %v2867 = vadd.f32 %v2865, %v2866
        %v2868 = vrot.slane %v2867, 1
        %v2869 = vadd.f32 %v2867, %v2868
        %v2870 = vmul.f32 %v2590, %v1758
        %v2871 = vmul.f32 %v2591, %v1759
        %v2872 = vrot.slane %v2870, 4
        %v2873 = vadd.f32 %v2870, %v2872
        %v2874 = vrot.slane %v2873, 2
        %v2875 = vadd.f32 %v2873, %v2874
        %v2876 = vrot.slane %v2875, 1
        %v2877 = vadd.f32 %v2875, %v2876
        %v2878 = vrot.slane %v2871, 4
        %v2879 = vadd.f32 %v2871, %v2878
        %v2880 = vrot.slane %v2879, 2
        %v2881 = vadd.f32 %v2879, %v2880
        %v2882 = vrot.slane %v2881, 1
        %v2883 = vadd.f32 %v2881, %v2882
        %v2884 = vmul.f32 %v2664, %v1760
        %v2885 = vmul.f32 %v2665, %v1761
        %v2886 = vrot.slane %v2884, 4
        %v2887 = vadd.f32 %v2884, %v2886
        %v2888 = vrot.slane %v2887, 2
        %v2889 = vadd.f32 %v2887, %v2888
        %v2890 = vrot.slane %v2889, 1
        %v2891 = vadd.f32 %v2889, %v2890
        %v2892 = vrot.slane %v2885, 4
        %v2893 = vadd.f32 %v2885, %v2892
        %v2894 = vrot.slane %v2893, 2
        %v2895 = vadd.f32 %v2893, %v2894
        %v2896 = vrot.slane %v2895, 1
        %v2897 = vadd.f32 %v2895, %v2896
        %v2898 = vmul.f32 %v2738, %v1762
        %v2899 = vmul.f32 %v2739, %v1763
        %v2900 = vrot.slane %v2898, 4
        %v2901 = vadd.f32 %v2898, %v2900
        %v2902 = vrot.slane %v2901, 2
        %v2903 = vadd.f32 %v2901, %v2902
        %v2904 = vrot.slane %v2903, 1
        %v2905 = vadd.f32 %v2903, %v2904
        %v2906 = vrot.slane %v2899, 4
        %v2907 = vadd.f32 %v2899, %v2906
        %v2908 = vrot.slane %v2907, 2
        %v2909 = vadd.f32 %v2907, %v2908
        %v2910 = vrot.slane %v2909, 1
        %v2911 = vadd.f32 %v2909, %v2910
        %v2912 = vmul.f32 %v2812, %v1764
        %v2913 = vmul.f32 %v2813, %v1765
        %v2914 = vrot.slane %v2912, 4
        %v2915 = vadd.f32 %v2912, %v2914
        %v2916 = vrot.slane %v2915, 2
        %v2917 = vadd.f32 %v2915, %v2916
        %v2918 = vrot.slane %v2917, 1
        %v2919 = vadd.f32 %v2917, %v2918
        %v2920 = vrot.slane %v2913, 4
        %v2921 = vadd.f32 %v2913, %v2920
        %v2922 = vrot.slane %v2921, 2
        %v2923 = vadd.f32 %v2921, %v2922
        %v2924 = vrot.slane %v2923, 1
        %v2925 = vadd.f32 %v2923, %v2924
        %v2926 = vmul.f32 %v2590, %v1766
        %v2927 = vmul.f32 %v2591, %v1767
        %v2928 = vrot.slane %v2926, 4
        %v2929 = vadd.f32 %v2926, %v2928
        %v2930 = vrot.slane %v2929, 2
        %v2931 = vadd.f32 %v2929, %v2930
        %v2932 = vrot.slane %v2931, 1
        %v2933 = vadd.f32 %v2931, %v2932
        %v2934 = vrot.slane %v2927, 4
        %v2935 = vadd.f32 %v2927, %v2934
        %v2936 = vrot.slane %v2935, 2
        %v2937 = vadd.f32 %v2935, %v2936
        %v2938 = vrot.slane %v2937, 1
        %v2939 = vadd.f32 %v2937, %v2938
        %v2940 = vmul.f32 %v2664, %v1768
        %v2941 = vmul.f32 %v2665, %v1769
        %v2942 = vrot.slane %v2940, 4
        %v2943 = vadd.f32 %v2940, %v2942
        %v2944 = vrot.slane %v2943, 2
        %v2945 = vadd.f32 %v2943, %v2944
        %v2946 = vrot.slane %v2945, 1
        %v2947 = vadd.f32 %v2945, %v2946
        %v2948 = vrot.slane %v2941, 4
        %v2949 = vadd.f32 %v2941, %v2948
        %v2950 = vrot.slane %v2949, 2
        %v2951 = vadd.f32 %v2949, %v2950
        %v2952 = vrot.slane %v2951, 1
        %v2953 = vadd.f32 %v2951, %v2952
        %v2954 = vmul.f32 %v2738, %v1770
        %v2955 = vmul.f32 %v2739, %v1771
        %v2956 = vrot.slane %v2954, 4
        %v2957 = vadd.f32 %v2954, %v2956
        %v2958 = vrot.slane %v2957, 2
        %v2959 = vadd.f32 %v2957, %v2958
        %v2960 = vrot.slane %v2959, 1
        %v2961 = vadd.f32 %v2959, %v2960
        %v2962 = vrot.slane %v2955, 4
        %v2963 = vadd.f32 %v2955, %v2962
        %v2964 = vrot.slane %v2963, 2
        %v2965 = vadd.f32 %v2963, %v2964
        %v2966 = vrot.slane %v2965, 1
        %v2967 = vadd.f32 %v2965, %v2966
        %v2968 = vmul.f32 %v2812, %v1772
        %v2969 = vmul.f32 %v2813, %v1773
        %v2970 = vrot.slane %v2968, 4
        %v2971 = vadd.f32 %v2968, %v2970
        %v2972 = vrot.slane %v2971, 2
        %v2973 = vadd.f32 %v2971, %v2972
        %v2974 = vrot.slane %v2973, 1
        %v2975 = vadd.f32 %v2973, %v2974
        %v2976 = vrot.slane %v2969, 4
        %v2977 = vadd.f32 %v2969, %v2976
        %v2978 = vrot.slane %v2977, 2
        %v2979 = vadd.f32 %v2977, %v2978
        %v2980 = vrot.slane %v2979, 1
        %v2981 = vadd.f32 %v2979, %v2980
        %v2982 = vmul.f32 %v2590, %v1774
        %v2983 = vmul.f32 %v2591, %v1775
        %v2984 = vrot.slane %v2982, 4
        %v2985 = vadd.f32 %v2982, %v2984
        %v2986 = vrot.slane %v2985, 2
        %v2987 = vadd.f32 %v2985, %v2986
        %v2988 = vrot.slane %v2987, 1
        %v2989 = vadd.f32 %v2987, %v2988
        %v2990 = vrot.slane %v2983, 4
        %v2991 = vadd.f32 %v2983, %v2990
        %v2992 = vrot.slane %v2991, 2
        %v2993 = vadd.f32 %v2991, %v2992
        %v2994 = vrot.slane %v2993, 1
        %v2995 = vadd.f32 %v2993, %v2994
        %v2996 = vmul.f32 %v2664, %v1776
        %v2997 = vmul.f32 %v2665, %v1777
        %v2998 = vrot.slane %v2996, 4
        %v2999 = vadd.f32 %v2996, %v2998
        %v3000 = vrot.slane %v2999, 2
        %v3001 = vadd.f32 %v2999, %v3000
        %v3002 = vrot.slane %v3001, 1
        %v3003 = vadd.f32 %v3001, %v3002
        %v3004 = vrot.slane %v2997, 4
        %v3005 = vadd.f32 %v2997, %v3004
        %v3006 = vrot.slane %v3005, 2
        %v3007 = vadd.f32 %v3005, %v3006
        %v3008 = vrot.slane %v3007, 1
        %v3009 = vadd.f32 %v3007, %v3008
        %v3010 = vmul.f32 %v2738, %v1778
        %v3011 = vmul.f32 %v2739, %v1779
        %v3012 = vrot.slane %v3010, 4
        %v3013 = vadd.f32 %v3010, %v3012
        %v3014 = vrot.slane %v3013, 2
        %v3015 = vadd.f32 %v3013, %v3014
        %v3016 = vrot.slane %v3015, 1
        %v3017 = vadd.f32 %v3015, %v3016
        %v3018 = vrot.slane %v3011, 4
        %v3019 = vadd.f32 %v3011, %v3018
        %v3020 = vrot.slane %v3019, 2
        %v3021 = vadd.f32 %v3019, %v3020
        %v3022 = vrot.slane %v3021, 1
        %v3023 = vadd.f32 %v3021, %v3022
        %v3024 = vmul.f32 %v2812, %v1780
        %v3025 = vmul.f32 %v2813, %v1781
        %v3026 = vrot.slane %v3024, 4
        %v3027 = vadd.f32 %v3024, %v3026
        %v3028 = vrot.slane %v3027, 2
        %v3029 = vadd.f32 %v3027, %v3028
        %v3030 = vrot.slane %v3029, 1
        %v3031 = vadd.f32 %v3029, %v3030
        %v3032 = vrot.slane %v3025, 4
        %v3033 = vadd.f32 %v3025, %v3032
        %v3034 = vrot.slane %v3033, 2
        %v3035 = vadd.f32 %v3033, %v3034
        %v3036 = vrot.slane %v3035, 1
        %v3037 = vadd.f32 %v3035, %v3036
        %v3038 = vsel %vm2328, %v2821, %v2835
        %v3039 = vsel %vm2328, %v2827, %v2841
        %v3040 = vsel %vm2331, %v3038, %v2849
        %v3041 = vsel %vm2331, %v3039, %v2855
        %v3042 = vsel %vm2334, %v3040, %v2863
        %v3043 = vsel %vm2334, %v3041, %v2869
        %v3044 = vsel %vm1794, %v3042, %v2877
        %v3045 = vsel %vm1794, %v3043, %v2883
        %v3046 = vsel %vm2339, %v3044, %v2891
        %v3047 = vsel %vm2339, %v3045, %v2897
        %v3048 = vsel %vm2342, %v3046, %v2905
        %v3049 = vsel %vm2342, %v3047, %v2911
        %v3050 = vsel %vm2345, %v3048, %v2919
        %v3051 = vsel %vm2345, %v3049, %v2925
        %v3052 = vsel %vm2328, %v2933, %v2947
        %v3053 = vsel %vm2328, %v2939, %v2953
        %v3054 = vsel %vm2331, %v3052, %v2961
        %v3055 = vsel %vm2331, %v3053, %v2967
        %v3056 = vsel %vm2334, %v3054, %v2975
        %v3057 = vsel %vm2334, %v3055, %v2981
        %v3058 = vsel %vm1794, %v3056, %v2989
        %v3059 = vsel %vm1794, %v3057, %v2995
        %v3060 = vsel %vm2339, %v3058, %v3003
        %v3061 = vsel %vm2339, %v3059, %v3009
        %v3062 = vsel %vm2342, %v3060, %v3017
        %v3063 = vsel %vm2342, %v3061, %v3023
        %v3064 = vsel %vm2345, %v3062, %v3031
        %v3065 = vsel %vm2345, %v3063, %v3037
        %v3066 = vadd.f32 %v2362, %v3050
        %v3067 = vadd.f32 %v2363, %v3051
        %v3068 = vadd.f32 %v2364, %v3064
        %v3069 = vadd.f32 %v2365, %v3065
        %v3070 = vsel %vm1794, %v3066, -inf
        %v3071 = vrot.slane %v3070, 4
        %v3072 = vmax.f32 %v3070, %v3071
        %v3073 = vrot.slane %v3072, 2
        %v3074 = vmax.f32 %v3072, %v3073
        %v3075 = vrot.slane %v3074, 1
        %v3076 = vmax.f32 %v3074, %v3075
        %v3077 = vsel %vm1794, %v3067, -inf
        %v3078 = vrot.slane %v3077, 4
        %v3079 = vmax.f32 %v3077, %v3078
        %v3080 = vrot.slane %v3079, 2
        %v3081 = vmax.f32 %v3079, %v3080
        %v3082 = vrot.slane %v3081, 1
        %v3083 = vmax.f32 %v3081, %v3082
        %v3084 = vsel %vm1802, %v3066, -inf
        %v3085 = vrot.slane %v3084, 4
        %v3086 = vmax.f32 %v3084, %v3085
        %v3087 = vrot.slane %v3086, 2
        %v3088 = vmax.f32 %v3086, %v3087
        %v3089 = vrot.slane %v3088, 1
        %v3090 = vmax.f32 %v3088, %v3089
        %v3091 = vsel %vm1802, %v3067, -inf
        %v3092 = vrot.slane %v3091, 4
        %v3093 = vmax.f32 %v3091, %v3092
        %v3094 = vrot.slane %v3093, 2
        %v3095 = vmax.f32 %v3093, %v3094
        %v3096 = vrot.slane %v3095, 1
        %v3097 = vmax.f32 %v3095, %v3096
        %v3098 = vsel %vm1794, %v3068, -inf
        %v3099 = vrot.slane %v3098, 4
        %v3100 = vmax.f32 %v3098, %v3099
        %v3101 = vrot.slane %v3100, 2
        %v3102 = vmax.f32 %v3100, %v3101
        %v3103 = vrot.slane %v3102, 1
        %v3104 = vmax.f32 %v3102, %v3103
        %v3105 = vsel %vm1794, %v3069, -inf
        %v3106 = vrot.slane %v3105, 4
        %v3107 = vmax.f32 %v3105, %v3106
        %v3108 = vrot.slane %v3107, 2
        %v3109 = vmax.f32 %v3107, %v3108
        %v3110 = vrot.slane %v3109, 1
        %v3111 = vmax.f32 %v3109, %v3110
        %v3112 = vsel %vm1802, %v3068, -inf
        %v3113 = vrot.slane %v3112, 4
        %v3114 = vmax.f32 %v3112, %v3113
        %v3115 = vrot.slane %v3114, 2
        %v3116 = vmax.f32 %v3114, %v3115
        %v3117 = vrot.slane %v3116, 1
        %v3118 = vmax.f32 %v3116, %v3117
        %v3119 = vsel %vm1802, %v3069, -inf
        %v3120 = vrot.slane %v3119, 4
        %v3121 = vmax.f32 %v3119, %v3120
        %v3122 = vrot.slane %v3121, 2
        %v3123 = vmax.f32 %v3121, %v3122
        %v3124 = vrot.slane %v3123, 1
        %v3125 = vmax.f32 %v3123, %v3124
        %v3126 = vsel %vm1794, %v3076, %v3090
        %v3127 = vsel %vm1794, %v3083, %v3097
        %v3128 = vsel %vm1794, %v3104, %v3118
        %v3129 = vsel %vm1794, %v3111, %v3125
        %v3130 = vsub.f32 %v3066, %v3126
        %v3131 = vsub.f32 %v3067, %v3127
        %v3132 = vsub.f32 %v3068, %v3128
        %v3133 = vsub.f32 %v3069, %v3129
        %v3134 = vmul.f32 %v3130, 1.442695
        %v3135 = vpow.pop %v3134
        %v3136 = vmul.f32 %v3131, 1.442695
        %v3137 = vpow.pop %v3136
        %v3138 = vmul.f32 %v3132, 1.442695
        %v3139 = vpow.pop %v3138
        %v3140 = vmul.f32 %v3133, 1.442695
        %v3141 = vpow.pop %v3140
        %v3142 = vsel %vm1794, %v3135, 0.0
        %v3143 = vrot.slane %v3142, 4
        %v3144 = vadd.f32 %v3142, %v3143
        %v3145 = vrot.slane %v3144, 2
        %v3146 = vadd.f32 %v3144, %v3145
        %v3147 = vrot.slane %v3146, 1
        %v3148 = vadd.f32 %v3146, %v3147
        %v3149 = vsel %vm1794, %v3137, 0.0
        %v3150 = vrot.slane %v3149, 4
        %v3151 = vadd.f32 %v3149, %v3150
        %v3152 = vrot.slane %v3151, 2
        %v3153 = vadd.f32 %v3151, %v3152
        %v3154 = vrot.slane %v3153, 1
        %v3155 = vadd.f32 %v3153, %v3154
        %v3158 = vrot.slane %v3135, 4
        %v3159 = vrot.slane %v3137, 4
        %v3162 = vsel %vm1794, %v3158, 0.0
        %v3163 = vrot.slane %v3162, 4
        %v3164 = vadd.f32 %v3162, %v3163
        %v3165 = vrot.slane %v3164, 2
        %v3166 = vadd.f32 %v3164, %v3165
        %v3167 = vrot.slane %v3166, 1
        %v3168 = vadd.f32 %v3166, %v3167
        %v3169 = vsel %vm1794, %v3159, 0.0
        %v3170 = vrot.slane %v3169, 4
        %v3171 = vadd.f32 %v3169, %v3170
        %v3172 = vrot.slane %v3171, 2
        %v3173 = vadd.f32 %v3171, %v3172
        %v3174 = vrot.slane %v3173, 1
        %v3175 = vadd.f32 %v3173, %v3174
        %v3176 = vsel %vm1794, %v3139, 0.0
        %v3177 = vrot.slane %v3176, 4
        %v3178 = vadd.f32 %v3176, %v3177
        %v3179 = vrot.slane %v3178, 2
        %v3180 = vadd.f32 %v3178, %v3179
        %v3181 = vrot.slane %v3180, 1
        %v3182 = vadd.f32 %v3180, %v3181
        %v3183 = vsel %vm1794, %v3141, 0.0
        %v3184 = vrot.slane %v3183, 4
        %v3185 = vadd.f32 %v3183, %v3184
        %v3186 = vrot.slane %v3185, 2
        %v3187 = vadd.f32 %v3185, %v3186
        %v3188 = vrot.slane %v3187, 1
        %v3189 = vadd.f32 %v3187, %v3188
        %v3192 = vrot.slane %v3139, 4
        %v3193 = vrot.slane %v3141, 4
        %v3196 = vsel %vm1794, %v3192, 0.0
        %v3197 = vrot.slane %v3196, 4
        %v3198 = vadd.f32 %v3196, %v3197
        %v3199 = vrot.slane %v3198, 2
        %v3200 = vadd.f32 %v3198, %v3199
        %v3201 = vrot.slane %v3200, 1
        %v3202 = vadd.f32 %v3200, %v3201
        %v3203 = vsel %vm1794, %v3193, 0.0
        %v3204 = vrot.slane %v3203, 4
        %v3205 = vadd.f32 %v3203, %v3204
        %v3206 = vrot.slane %v3205, 2
        %v3207 = vadd.f32 %v3205, %v3206
        %v3208 = vrot.slane %v3207, 1
        %v3209 = vadd.f32 %v3207, %v3208
        %v3210 = vsel %vm1794, %v3148, %v3168
        %v3211 = vsel %vm1794, %v3155, %v3175
        %v3212 = vsel %vm1794, %v3182, %v3202
        %v3213 = vsel %vm1794, %v3189, %v3209
        %v3214 = vrcp.pop %v3210
        %v3215 = vrcp.pop %v3211
        %v3216 = vrcp.pop %v3212
        %v3217 = vrcp.pop %v3213
        %v3218 = vmul.f32 %v3135, %v3214
        %v3219 = vmul.f32 %v3137, %v3215
        %v3220 = vmul.f32 %v3139, %v3216
        %v3221 = vmul.f32 %v3141, %v3217
        %v3222 = vlaneseq
        %v3223 = vshrl.u32 %v3222, 7
        %v3224 = vsub.s32 0, %v3223
        %v3225 = vrot.slane %v3218, %v3224
        %v3226 = vlaneseq
        %v3227 = vshrl.u32 %v3226, 7
        %v3228 = vsub.s32 0, %v3227
        %v3229 = vrot.slane %v3219, %v3228
        %v3230 = vmul.f32 %v3225, %v1750
        %v3231 = vmul.f32 %v3229, %v1751
        %v3232 = vlaneseq
        %v3233 = vshrl.u32 %v3232, 7
        %v3234 = vsub.s32 4, %v3233
        %v3235 = vrot.slane %v3218, %v3234
        %v3236 = vlaneseq
        %v3237 = vshrl.u32 %v3236, 7
        %v3238 = vsub.s32 4, %v3237
        %v3239 = vrot.slane %v3219, %v3238
        %v3240 = vmul.f32 %v3235, %v1758
        %v3241 = vmul.f32 %v3239, %v1759
        %v3242 = vadd.f32 %v3230, %v3240
        %v3243 = vadd.f32 %v3231, %v3241
        %v3244 = vlaneseq
        %v3245 = vshrl.u32 %v3244, 7
        %v3246 = vsub.s32 0, %v3245
        %v3247 = vrot.slane %v3220, %v3246
        %v3248 = vlaneseq
        %v3249 = vshrl.u32 %v3248, 7
        %v3250 = vsub.s32 0, %v3249
        %v3251 = vrot.slane %v3221, %v3250
        %v3252 = vmul.f32 %v3247, %v1766
        %v3253 = vmul.f32 %v3251, %v1767
        %v3254 = vadd.f32 %v3242, %v3252
        %v3255 = vadd.f32 %v3243, %v3253
        %v3256 = vlaneseq
        %v3257 = vshrl.u32 %v3256, 7
        %v3258 = vsub.s32 4, %v3257
        %v3259 = vrot.slane %v3220, %v3258
        %v3260 = vlaneseq
        %v3261 = vshrl.u32 %v3260, 7
        %v3262 = vsub.s32 4, %v3261
        %v3263 = vrot.slane %v3221, %v3262
        %v3264 = vmul.f32 %v3259, %v1774
        %v3265 = vmul.f32 %v3263, %v1775
        %v3266 = vadd.f32 %v3254, %v3264
        %v3267 = vadd.f32 %v3255, %v3265
        %v3268 = vmul.f32 %v3266, %v3266
        %v3269 = vmul.f32 %v3267, %v3267
        %v3270 = vrot.slane %v3268, 4
        %v3271 = vadd.f32 %v3268, %v3270
        %v3272 = vrot.slane %v3271, 2
        %v3273 = vadd.f32 %v3271, %v3272
        %v3274 = vrot.slane %v3273, 1
        %v3275 = vadd.f32 %v3273, %v3274
        %v3276 = vrot.slane %v3269, 4
        %v3277 = vadd.f32 %v3269, %v3276
        %v3278 = vrot.slane %v3277, 2
        %v3279 = vadd.f32 %v3277, %v3278
        %v3280 = vrot.slane %v3279, 1
        %v3281 = vadd.f32 %v3279, %v3280
        %v3282 = vadd.f32 %v3275, 1e-16
        %v3283 = vadd.f32 %v3281, 1e-16
        %v3284 = vrsqrt.pop %v3282
        %v3285 = vrsqrt.pop %v3283
        %v3286 = vmul.f32 %v3275, %v3284
        %v3287 = vmul.f32 %v3281, %v3285
        %v3288 = vadd.f32 %v3275, 1.0
        %v3289 = vadd.f32 %v3281, 1.0
        %v3290 = vrcp.pop %v3288
        %v3291 = vrcp.pop %v3289
        %v3292 = vmul.f32 %v3286, %v3290
        %v3293 = vmul.f32 %v3287, %v3291
        %v3294 = vmul.f32 %v3266, %v3292
        %v3295 = vmul.f32 %v3267, %v3293
        %v3296 = vlaneseq
        %v3297 = vshrl.u32 %v3296, 7
        %v3298 = vsub.s32 1, %v3297
        %v3299 = vrot.slane %v3218, %v3298
        %v3300 = vlaneseq
        %v3301 = vshrl.u32 %v3300, 7
        %v3302 = vsub.s32 1, %v3301
        %v3303 = vrot.slane %v3219, %v3302
        %v3304 = vmul.f32 %v3299, %v1752
        %v3305 = vmul.f32 %v3303, %v1753
        %v3306 = vlaneseq
        %v3307 = vshrl.u32 %v3306, 7
        %v3308 = vsub.s32 5, %v3307
        %v3309 = vrot.slane %v3218, %v3308
        %v3310 = vlaneseq
        %v3311 = vshrl.u32 %v3310, 7
        %v3312 = vsub.s32 5, %v3311
        %v3313 = vrot.slane %v3219, %v3312
        %v3314 = vmul.f32 %v3309, %v1760
        %v3315 = vmul.f32 %v3313, %v1761
        %v3316 = vadd.f32 %v3304, %v3314
        %v3317 = vadd.f32 %v3305, %v3315
        %v3318 = vlaneseq
        %v3319 = vshrl.u32 %v3318, 7
        %v3320 = vsub.s32 1, %v3319
        %v3321 = vrot.slane %v3220, %v3320
        %v3322 = vlaneseq
        %v3323 = vshrl.u32 %v3322, 7
        %v3324 = vsub.s32 1, %v3323
        %v3325 = vrot.slane %v3221, %v3324
        %v3326 = vmul.f32 %v3321, %v1768
        %v3327 = vmul.f32 %v3325, %v1769
        %v3328 = vadd.f32 %v3316, %v3326
        %v3329 = vadd.f32 %v3317, %v3327
        %v3330 = vlaneseq
        %v3331 = vshrl.u32 %v3330, 7
        %v3332 = vsub.s32 5, %v3331
        %v3333 = vrot.slane %v3220, %v3332
        %v3334 = vlaneseq
        %v3335 = vshrl.u32 %v3334, 7
        %v3336 = vsub.s32 5, %v3335
        %v3337 = vrot.slane %v3221, %v3336
        %v3338 = vmul.f32 %v3333, %v1776
        %v3339 = vmul.f32 %v3337, %v1777
        %v3340 = vadd.f32 %v3328, %v3338
        %v3341 = vadd.f32 %v3329, %v3339
        %v3342 = vmul.f32 %v3340, %v3340
        %v3343 = vmul.f32 %v3341, %v3341
        %v3344 = vrot.slane %v3342, 4
        %v3345 = vadd.f32 %v3342, %v3344
        %v3346 = vrot.slane %v3345, 2
        %v3347 = vadd.f32 %v3345, %v3346
        %v3348 = vrot.slane %v3347, 1
        %v3349 = vadd.f32 %v3347, %v3348
        %v3350 = vrot.slane %v3343, 4
        %v3351 = vadd.f32 %v3343, %v3350
        %v3352 = vrot.slane %v3351, 2
        %v3353 = vadd.f32 %v3351, %v3352
        %v3354 = vrot.slane %v3353, 1
        %v3355 = vadd.f32 %v3353, %v3354
        %v3356 = vadd.f32 %v3349, 1e-16
        %v3357 = vadd.f32 %v3355, 1e-16
        %v3358 = vrsqrt.pop %v3356
        %v3359 = vrsqrt.pop %v3357
        %v3360 = vmul.f32 %v3349, %v3358
        %v3361 = vmul.f32 %v3355, %v3359
        %v3362 = vadd.f32 %v3349, 1.0
        %v3363 = vadd.f32 %v3355, 1.0
        %v3364 = vrcp.pop %v3362
        %v3365 = vrcp.pop %v3363
        %v3366 = vmul.f32 %v3360, %v3364
        %v3367 = vmul.f32 %v3361, %v3365
        %v3368 = vmul.f32 %v3340, %v3366
        %v3369 = vmul.f32 %v3341, %v3367
        %v3370 = vlaneseq
        %v3371 = vshrl.u32 %v3370, 7
        %v3372 = vsub.s32 2, %v3371
        %v3373 = vrot.slane %v3218, %v3372
        %v3374 = vlaneseq
        %v3375 = vshrl.u32 %v3374, 7
        %v3376 = vsub.s32 2, %v3375
        %v3377 = vrot.slane %v3219, %v3376
        %v3378 = vmul.f32 %v3373, %v1754
        %v3379 = vmul.f32 %v3377, %v1755
        %v3380 = vlaneseq
        %v3381 = vshrl.u32 %v3380, 7
        %v3382 = vsub.s32 6, %v3381
        %v3383 = vrot.slane %v3218, %v3382
        %v3384 = vlaneseq
        %v3385 = vshrl.u32 %v3384, 7
        %v3386 = vsub.s32 6, %v3385
        %v3387 = vrot.slane %v3219, %v3386
        %v3388 = vmul.f32 %v3383, %v1762
        %v3389 = vmul.f32 %v3387, %v1763
        %v3390 = vadd.f32 %v3378, %v3388
        %v3391 = vadd.f32 %v3379, %v3389
        %v3392 = vlaneseq
        %v3393 = vshrl.u32 %v3392, 7
        %v3394 = vsub.s32 2, %v3393
        %v3395 = vrot.slane %v3220, %v3394
        %v3396 = vlaneseq
        %v3397 = vshrl.u32 %v3396, 7
        %v3398 = vsub.s32 2, %v3397
        %v3399 = vrot.slane %v3221, %v3398
        %v3400 = vmul.f32 %v3395, %v1770
        %v3401 = vmul.f32 %v3399, %v1771
        %v3402 = vadd.f32 %v3390, %v3400
        %v3403 = vadd.f32 %v3391, %v3401
        %v3404 = vlaneseq
        %v3405 = vshrl.u32 %v3404, 7
        %v3406 = vsub.s32 6, %v3405
        %v3407 = vrot.slane %v3220, %v3406
        %v3408 = vlaneseq
        %v3409 = vshrl.u32 %v3408, 7
        %v3410 = vsub.s32 6, %v3409
        %v3411 = vrot.slane %v3221, %v3410
        %v3412 = vmul.f32 %v3407, %v1778
        %v3413 = vmul.f32 %v3411, %v1779
        %v3414 = vadd.f32 %v3402, %v3412
        %v3415 = vadd.f32 %v3403, %v3413
        %v3416 = vmul.f32 %v3414, %v3414
        %v3417 = vmul.f32 %v3415, %v3415
        %v3418 = vrot.slane %v3416, 4
        %v3419 = vadd.f32 %v3416, %v3418
        %v3420 = vrot.slane %v3419, 2
        %v3421 = vadd.f32 %v3419, %v3420
        %v3422 = vrot.slane %v3421, 1
        %v3423 = vadd.f32 %v3421, %v3422
        %v3424 = vrot.slane %v3417, 4
        %v3425 = vadd.f32 %v3417, %v3424
        %v3426 = vrot.slane %v3425, 2
        %v3427 = vadd.f32 %v3425, %v3426
        %v3428 = vrot.slane %v3427, 1
        %v3429 = vadd.f32 %v3427, %v3428
        %v3430 = vadd.f32 %v3423, 1e-16
        %v3431 = vadd.f32 %v3429, 1e-16
        %v3432 = vrsqrt.pop %v3430
        %v3433 = vrsqrt.pop %v3431
        %v3434 = vmul.f32 %v3423, %v3432
        %v3435 = vmul.f32 %v3429, %v3433
        %v3436 = vadd.f32 %v3423, 1.0
        %v3437 = vadd.f32 %v3429, 1.0
        %v3438 = vrcp.pop %v3436
        %v3439 = vrcp.pop %v3437
        %v3440 = vmul.f32 %v3434, %v3438
        %v3441 = vmul.f32 %v3435, %v3439
        %v3442 = vmul.f32 %v3414, %v3440
        %v3443 = vmul.f32 %v3415, %v3441
        %v3444 = vlaneseq
        %v3445 = vshrl.u32 %v3444, 7
        %v3446 = vsub.s32 3, %v3445
        %v3447 = vrot.slane %v3218, %v3446
        %v3448 = vlaneseq
        %v3449 = vshrl.u32 %v3448, 7
        %v3450 = vsub.s32 3, %v3449
        %v3451 = vrot.slane %v3219, %v3450
        %v3452 = vmul.f32 %v3447, %v1756
        %v3453 = vmul.f32 %v3451, %v1757
        %v3454 = vlaneseq
        %v3455 = vshrl.u32 %v3454, 7
        %v3456 = vsub.s32 7, %v3455
        %v3457 = vrot.slane %v3218, %v3456
        %v3458 = vlaneseq
        %v3459 = vshrl.u32 %v3458, 7
        %v3460 = vsub.s32 7, %v3459
        %v3461 = vrot.slane %v3219, %v3460
        %v3462 = vmul.f32 %v3457, %v1764
        %v3463 = vmul.f32 %v3461, %v1765
        %v3464 = vadd.f32 %v3452, %v3462
        %v3465 = vadd.f32 %v3453, %v3463
        %v3466 = vlaneseq
        %v3467 = vshrl.u32 %v3466, 7
        %v3468 = vsub.s32 3, %v3467
        %v3469 = vrot.slane %v3220, %v3468
        %v3470 = vlaneseq
        %v3471 = vshrl.u32 %v3470, 7
        %v3472 = vsub.s32 3, %v3471
        %v3473 = vrot.slane %v3221, %v3472
        %v3474 = vmul.f32 %v3469, %v1772
        %v3475 = vmul.f32 %v3473, %v1773
        %v3476 = vadd.f32 %v3464, %v3474
        %v3477 = vadd.f32 %v3465, %v3475
        %v3478 = vlaneseq
        %v3479 = vshrl.u32 %v3478, 7
        %v3480 = vsub.s32 7, %v3479
        %v3481 = vrot.slane %v3220, %v3480
        %v3482 = vlaneseq
        %v3483 = vshrl.u32 %v3482, 7
        %v3484 = vsub.s32 7, %v3483
        %v3485 = vrot.slane %v3221, %v3484
        %v3486 = vmul.f32 %v3481, %v1780
        %v3487 = vmul.f32 %v3485, %v1781
        %v3488 = vadd.f32 %v3476, %v3486
        %v3489 = vadd.f32 %v3477, %v3487
        %v3490 = vmul.f32 %v3488, %v3488
        %v3491 = vmul.f32 %v3489, %v3489
        %v3492 = vrot.slane %v3490, 4
        %v3493 = vadd.f32 %v3490, %v3492
        %v3494 = vrot.slane %v3493, 2
        %v3495 = vadd.f32 %v3493, %v3494
        %v3496 = vrot.slane %v3495, 1
        %v3497 = vadd.f32 %v3495, %v3496
        %v3498 = vrot.slane %v3491, 4
        %v3499 = vadd.f32 %v3491, %v3498
        %v3500 = vrot.slane %v3499, 2
        %v3501 = vadd.f32 %v3499, %v3500
        %v3502 = vrot.slane %v3501, 1
        %v3503 = vadd.f32 %v3501, %v3502
        %v3504 = vadd.f32 %v3497, 1e-16
        %v3505 = vadd.f32 %v3503, 1e-16
        %v3506 = vrsqrt.pop %v3504
        %v3507 = vrsqrt.pop %v3505
        %v3508 = vmul.f32 %v3497, %v3506
        %v3509 = vmul.f32 %v3503, %v3507
        %v3510 = vadd.f32 %v3497, 1.0
        %v3511 = vadd.f32 %v3503, 1.0
        %v3512 = vrcp.pop %v3510
        %v3513 = vrcp.pop %v3511
        %v3514 = vmul.f32 %v3508, %v3512
        %v3515 = vmul.f32 %v3509, %v3513
        %v3516 = vmul.f32 %v3488, %v3514
        %v3517 = vmul.f32 %v3489, %v3515
        %v3518 = vmul.f32 %v3294, %v1750
        %v3519 = vmul.f32 %v3295, %v1751
        %v3520 = vrot.slane %v3518, 4
        %v3521 = vadd.f32 %v3518, %v3520
        %v3522 = vrot.slane %v3521, 2
        %v3523 = vadd.f32 %v3521, %v3522
        %v3524 = vrot.slane %v3523, 1
        %v3525 = vadd.f32 %v3523, %v3524
        %v3526 = vrot.slane %v3519, 4
        %v3527 = vadd.f32 %v3519, %v3526
        %v3528 = vrot.slane %v3527, 2
        %v3529 = vadd.f32 %v3527, %v3528
        %v3530 = vrot.slane %v3529, 1
        %v3531 = vadd.f32 %v3529, %v3530
        %v3532 = vmul.f32 %v3368, %v1752
        %v3533 = vmul.f32 %v3369, %v1753
        %v3534 = vrot.slane %v3532, 4
        %v3535 = vadd.f32 %v3532, %v3534
        %v3536 = vrot.slane %v3535, 2
        %v3537 = vadd.f32 %v3535, %v3536
        %v3538 = vrot.slane %v3537, 1
        %v3539 = vadd.f32 %v3537, %v3538
        %v3540 = vrot.slane %v3533, 4
        %v3541 = vadd.f32 %v3533, %v3540
        %v3542 = vrot.slane %v3541, 2
        %v3543 = vadd.f32 %v3541, %v3542
        %v3544 = vrot.slane %v3543, 1
        %v3545 = vadd.f32 %v3543, %v3544
        %v3546 = vmul.f32 %v3442, %v1754
        %v3547 = vmul.f32 %v3443, %v1755
        %v3548 = vrot.slane %v3546, 4
        %v3549 = vadd.f32 %v3546, %v3548
        %v3550 = vrot.slane %v3549, 2
        %v3551 = vadd.f32 %v3549, %v3550
        %v3552 = vrot.slane %v3551, 1
        %v3553 = vadd.f32 %v3551, %v3552
        %v3554 = vrot.slane %v3547, 4
        %v3555 = vadd.f32 %v3547, %v3554
        %v3556 = vrot.slane %v3555, 2
        %v3557 = vadd.f32 %v3555, %v3556
        %v3558 = vrot.slane %v3557, 1
        %v3559 = vadd.f32 %v3557, %v3558
        %v3560 = vmul.f32 %v3516, %v1756
        %v3561 = vmul.f32 %v3517, %v1757
        %v3562 = vrot.slane %v3560, 4
        %v3563 = vadd.f32 %v3560, %v3562
        %v3564 = vrot.slane %v3563, 2
        %v3565 = vadd.f32 %v3563, %v3564
        %v3566 = vrot.slane %v3565, 1
        %v3567 = vadd.f32 %v3565, %v3566
        %v3568 = vrot.slane %v3561, 4
        %v3569 = vadd.f32 %v3561, %v3568
        %v3570 = vrot.slane %v3569, 2
        %v3571 = vadd.f32 %v3569, %v3570
        %v3572 = vrot.slane %v3571, 1
        %v3573 = vadd.f32 %v3571, %v3572
        %v3574 = vmul.f32 %v3294, %v1758
        %v3575 = vmul.f32 %v3295, %v1759
        %v3576 = vrot.slane %v3574, 4
        %v3577 = vadd.f32 %v3574, %v3576
        %v3578 = vrot.slane %v3577, 2
        %v3579 = vadd.f32 %v3577, %v3578
        %v3580 = vrot.slane %v3579, 1
        %v3581 = vadd.f32 %v3579, %v3580
        %v3582 = vrot.slane %v3575, 4
        %v3583 = vadd.f32 %v3575, %v3582
        %v3584 = vrot.slane %v3583, 2
        %v3585 = vadd.f32 %v3583, %v3584
        %v3586 = vrot.slane %v3585, 1
        %v3587 = vadd.f32 %v3585, %v3586
        %v3588 = vmul.f32 %v3368, %v1760
        %v3589 = vmul.f32 %v3369, %v1761
        %v3590 = vrot.slane %v3588, 4
        %v3591 = vadd.f32 %v3588, %v3590
        %v3592 = vrot.slane %v3591, 2
        %v3593 = vadd.f32 %v3591, %v3592
        %v3594 = vrot.slane %v3593, 1
        %v3595 = vadd.f32 %v3593, %v3594
        %v3596 = vrot.slane %v3589, 4
        %v3597 = vadd.f32 %v3589, %v3596
        %v3598 = vrot.slane %v3597, 2
        %v3599 = vadd.f32 %v3597, %v3598
        %v3600 = vrot.slane %v3599, 1
        %v3601 = vadd.f32 %v3599, %v3600
        %v3602 = vmul.f32 %v3442, %v1762
        %v3603 = vmul.f32 %v3443, %v1763
        %v3604 = vrot.slane %v3602, 4
        %v3605 = vadd.f32 %v3602, %v3604
        %v3606 = vrot.slane %v3605, 2
        %v3607 = vadd.f32 %v3605, %v3606
        %v3608 = vrot.slane %v3607, 1
        %v3609 = vadd.f32 %v3607, %v3608
        %v3610 = vrot.slane %v3603, 4
        %v3611 = vadd.f32 %v3603, %v3610
        %v3612 = vrot.slane %v3611, 2
        %v3613 = vadd.f32 %v3611, %v3612
        %v3614 = vrot.slane %v3613, 1
        %v3615 = vadd.f32 %v3613, %v3614
        %v3616 = vmul.f32 %v3516, %v1764
        %v3617 = vmul.f32 %v3517, %v1765
        %v3618 = vrot.slane %v3616, 4
        %v3619 = vadd.f32 %v3616, %v3618
        %v3620 = vrot.slane %v3619, 2
        %v3621 = vadd.f32 %v3619, %v3620
        %v3622 = vrot.slane %v3621, 1
        %v3623 = vadd.f32 %v3621, %v3622
        %v3624 = vrot.slane %v3617, 4
        %v3625 = vadd.f32 %v3617, %v3624
        %v3626 = vrot.slane %v3625, 2
        %v3627 = vadd.f32 %v3625, %v3626
        %v3628 = vrot.slane %v3627, 1
        %v3629 = vadd.f32 %v3627, %v3628
        %v3630 = vmul.f32 %v3294, %v1766
        %v3631 = vmul.f32 %v3295, %v1767
        %v3632 = vrot.slane %v3630, 4
        %v3633 = vadd.f32 %v3630, %v3632
        %v3634 = vrot.slane %v3633, 2
        %v3635 = vadd.f32 %v3633, %v3634
        %v3636 = vrot.slane %v3635, 1
        %v3637 = vadd.f32 %v3635, %v3636
        %v3638 = vrot.slane %v3631, 4
        %v3639 = vadd.f32 %v3631, %v3638
        %v3640 = vrot.slane %v3639, 2
        %v3641 = vadd.f32 %v3639, %v3640
        %v3642 = vrot.slane %v3641, 1
        %v3643 = vadd.f32 %v3641, %v3642
        %v3644 = vmul.f32 %v3368, %v1768
        %v3645 = vmul.f32 %v3369, %v1769
        %v3646 = vrot.slane %v3644, 4
        %v3647 = vadd.f32 %v3644, %v3646
        %v3648 = vrot.slane %v3647, 2
        %v3649 = vadd.f32 %v3647, %v3648
        %v3650 = vrot.slane %v3649, 1
        %v3651 = vadd.f32 %v3649, %v3650
        %v3652 = vrot.slane %v3645, 4
        %v3653 = vadd.f32 %v3645, %v3652
        %v3654 = vrot.slane %v3653, 2
        %v3655 = vadd.f32 %v3653, %v3654
        %v3656 = vrot.slane %v3655, 1
        %v3657 = vadd.f32 %v3655, %v3656
        %v3658 = vmul.f32 %v3442, %v1770
        %v3659 = vmul.f32 %v3443, %v1771
        %v3660 = vrot.slane %v3658, 4
        %v3661 = vadd.f32 %v3658, %v3660
        %v3662 = vrot.slane %v3661, 2
        %v3663 = vadd.f32 %v3661, %v3662
        %v3664 = vrot.slane %v3663, 1
        %v3665 = vadd.f32 %v3663, %v3664
        %v3666 = vrot.slane %v3659, 4
        %v3667 = vadd.f32 %v3659, %v3666
        %v3668 = vrot.slane %v3667, 2
        %v3669 = vadd.f32 %v3667, %v3668
        %v3670 = vrot.slane %v3669, 1
        %v3671 = vadd.f32 %v3669, %v3670
        %v3672 = vmul.f32 %v3516, %v1772
        %v3673 = vmul.f32 %v3517, %v1773
        %v3674 = vrot.slane %v3672, 4
        %v3675 = vadd.f32 %v3672, %v3674
        %v3676 = vrot.slane %v3675, 2
        %v3677 = vadd.f32 %v3675, %v3676
        %v3678 = vrot.slane %v3677, 1
        %v3679 = vadd.f32 %v3677, %v3678
        %v3680 = vrot.slane %v3673, 4
        %v3681 = vadd.f32 %v3673, %v3680
        %v3682 = vrot.slane %v3681, 2
        %v3683 = vadd.f32 %v3681, %v3682
        %v3684 = vrot.slane %v3683, 1
        %v3685 = vadd.f32 %v3683, %v3684
        %v3686 = vmul.f32 %v3294, %v1774
        %v3687 = vmul.f32 %v3295, %v1775
        %v3688 = vrot.slane %v3686, 4
        %v3689 = vadd.f32 %v3686, %v3688
        %v3690 = vrot.slane %v3689, 2
        %v3691 = vadd.f32 %v3689, %v3690
        %v3692 = vrot.slane %v3691, 1
        %v3693 = vadd.f32 %v3691, %v3692
        %v3694 = vrot.slane %v3687, 4
        %v3695 = vadd.f32 %v3687, %v3694
        %v3696 = vrot.slane %v3695, 2
        %v3697 = vadd.f32 %v3695, %v3696
        %v3698 = vrot.slane %v3697, 1
        %v3699 = vadd.f32 %v3697, %v3698
        %v3700 = vmul.f32 %v3368, %v1776
        %v3701 = vmul.f32 %v3369, %v1777
        %v3702 = vrot.slane %v3700, 4
        %v3703 = vadd.f32 %v3700, %v3702
        %v3704 = vrot.slane %v3703, 2
        %v3705 = vadd.f32 %v3703, %v3704
        %v3706 = vrot.slane %v3705, 1
        %v3707 = vadd.f32 %v3705, %v3706
        %v3708 = vrot.slane %v3701, 4
        %v3709 = vadd.f32 %v3701, %v3708
        %v3710 = vrot.slane %v3709, 2
        %v3711 = vadd.f32 %v3709, %v3710
        %v3712 = vrot.slane %v3711, 1
        %v3713 = vadd.f32 %v3711, %v3712
        %v3714 = vmul.f32 %v3442, %v1778
        %v3715 = vmul.f32 %v3443, %v1779
        %v3716 = vrot.slane %v3714, 4
        %v3717 = vadd.f32 %v3714, %v3716
        %v3718 = vrot.slane %v3717, 2
        %v3719 = vadd.f32 %v3717, %v3718
        %v3720 = vrot.slane %v3719, 1
        %v3721 = vadd.f32 %v3719, %v3720
        %v3722 = vrot.slane %v3715, 4
        %v3723 = vadd.f32 %v3715, %v3722
        %v3724 = vrot.slane %v3723, 2
        %v3725 = vadd.f32 %v3723, %v3724
        %v3726 = vrot.slane %v3725, 1
        %v3727 = vadd.f32 %v3725, %v3726
        %v3728 = vmul.f32 %v3516, %v1780
        %v3729 = vmul.f32 %v3517, %v1781
        %v3730 = vrot.slane %v3728, 4
        %v3731 = vadd.f32 %v3728, %v3730
        %v3732 = vrot.slane %v3731, 2
        %v3733 = vadd.f32 %v3731, %v3732
        %v3734 = vrot.slane %v3733, 1
        %v3735 = vadd.f32 %v3733, %v3734
        %v3736 = vrot.slane %v3729, 4
        %v3737 = vadd.f32 %v3729, %v3736
        %v3738 = vrot.slane %v3737, 2
        %v3739 = vadd.f32 %v3737, %v3738
        %v3740 = vrot.slane %v3739, 1
        %v3741 = vadd.f32 %v3739, %v3740
        %v3742 = vsel %vm2328, %v3525, %v3539
        %v3743 = vsel %vm2328, %v3531, %v3545
        %v3744 = vsel %vm2331, %v3742, %v3553
        %v3745 = vsel %vm2331, %v3743, %v3559
        %v3746 = vsel %vm2334, %v3744, %v3567
        %v3747 = vsel %vm2334, %v3745, %v3573
        %v3748 = vsel %vm1794, %v3746, %v3581
        %v3749 = vsel %vm1794, %v3747, %v3587
        %v3750 = vsel %vm2339, %v3748, %v3595
        %v3751 = vsel %vm2339, %v3749, %v3601
        %v3752 = vsel %vm2342, %v3750, %v3609
        %v3753 = vsel %vm2342, %v3751, %v3615
        %v3754 = vsel %vm2345, %v3752, %v3623
        %v3755 = vsel %vm2345, %v3753, %v3629
        %v3756 = vsel %vm2328, %v3637, %v3651
        %v3757 = vsel %vm2328, %v3643, %v3657
        %v3758 = vsel %vm2331, %v3756, %v3665
        %v3759 = vsel %vm2331, %v3757, %v3671
        %v3760 = vsel %vm2334, %v3758, %v3679
        %v3761 = vsel %vm2334, %v3759, %v3685
        %v3762 = vsel %vm1794, %v3760, %v3693
        %v3763 = vsel %vm1794, %v3761, %v3699
        %v3764 = vsel %vm2339, %v3762, %v3707
        %v3765 = vsel %vm2339, %v3763, %v3713
        %v3766 = vsel %vm2342, %v3764, %v3721
        %v3767 = vsel %vm2342, %v3765, %v3727
        %v3768 = vsel %vm2345, %v3766, %v3735
        %v3769 = vsel %vm2345, %v3767, %v3741
        %v3770 = vadd.f32 %v3066, %v3754
        %v3771 = vadd.f32 %v3067, %v3755
        %v3772 = vadd.f32 %v3068, %v3768
        %v3773 = vadd.f32 %v3069, %v3769
        %v3774 = vsel %vm1794, %v3770, -inf
        %v3775 = vrot.slane %v3774, 4
        %v3776 = vmax.f32 %v3774, %v3775
        %v3777 = vrot.slane %v3776, 2
        %v3778 = vmax.f32 %v3776, %v3777
        %v3779 = vrot.slane %v3778, 1
        %v3780 = vmax.f32 %v3778, %v3779
        %v3781 = vsel %vm1794, %v3771, -inf
        %v3782 = vrot.slane %v3781, 4
        %v3783 = vmax.f32 %v3781, %v3782
        %v3784 = vrot.slane %v3783, 2
        %v3785 = vmax.f32 %v3783, %v3784
        %v3786 = vrot.slane %v3785, 1
        %v3787 = vmax.f32 %v3785, %v3786
        %v3788 = vsel %vm1802, %v3770, -inf
        %v3789 = vrot.slane %v3788, 4
        %v3790 = vmax.f32 %v3788, %v3789
        %v3791 = vrot.slane %v3790, 2
        %v3792 = vmax.f32 %v3790, %v3791
        %v3793 = vrot.slane %v3792, 1
        %v3794 = vmax.f32 %v3792, %v3793
        %v3795 = vsel %vm1802, %v3771, -inf
        %v3796 = vrot.slane %v3795, 4
        %v3797 = vmax.f32 %v3795, %v3796
        %v3798 = vrot.slane %v3797, 2
        %v3799 = vmax.f32 %v3797, %v3798
        %v3800 = vrot.slane %v3799, 1
        %v3801 = vmax.f32 %v3799, %v3800
        %v3802 = vsel %vm1794, %v3772, -inf
        %v3803 = vrot.slane %v3802, 4
        %v3804 = vmax.f32 %v3802, %v3803
        %v3805 = vrot.slane %v3804, 2
        %v3806 = vmax.f32 %v3804, %v3805
        %v3807 = vrot.slane %v3806, 1
        %v3808 = vmax.f32 %v3806, %v3807
        %v3809 = vsel %vm1794, %v3773, -inf
        %v3810 = vrot.slane %v3809, 4
        %v3811 = vmax.f32 %v3809, %v3810
        %v3812 = vrot.slane %v3811, 2
        %v3813 = vmax.f32 %v3811, %v3812
        %v3814 = vrot.slane %v3813, 1
        %v3815 = vmax.f32 %v3813, %v3814
        %v3816 = vsel %vm1802, %v3772, -inf
        %v3817 = vrot.slane %v3816, 4
        %v3818 = vmax.f32 %v3816, %v3817
        %v3819 = vrot.slane %v3818, 2
        %v3820 = vmax.f32 %v3818, %v3819
        %v3821 = vrot.slane %v3820, 1
        %v3822 = vmax.f32 %v3820, %v3821
        %v3823 = vsel %vm1802, %v3773, -inf
        %v3824 = vrot.slane %v3823, 4
        %v3825 = vmax.f32 %v3823, %v3824
        %v3826 = vrot.slane %v3825, 2
        %v3827 = vmax.f32 %v3825, %v3826
        %v3828 = vrot.slane %v3827, 1
        %v3829 = vmax.f32 %v3827, %v3828
        %v3830 = vsel %vm1794, %v3780, %v3794
        %v3831 = vsel %vm1794, %v3787, %v3801
        %v3832 = vsel %vm1794, %v3808, %v3822
        %v3833 = vsel %vm1794, %v3815, %v3829
        %v3834 = vsub.f32 %v3770, %v3830
        %v3835 = vsub.f32 %v3771, %v3831
        %v3836 = vsub.f32 %v3772, %v3832
        %v3837 = vsub.f32 %v3773, %v3833
        %v3838 = vmul.f32 %v3834, 1.442695
        %v3839 = vpow.pop %v3838
        %v3840 = vmul.f32 %v3835, 1.442695
        %v3841 = vpow.pop %v3840
        %v3842 = vmul.f32 %v3836, 1.442695
        %v3843 = vpow.pop %v3842
        %v3844 = vmul.f32 %v3837, 1.442695
        %v3845 = vpow.pop %v3844
        %v3846 = vsel %vm1794, %v3839, 0.0
        %v3847 = vrot.slane %v3846, 4
        %v3848 = vadd.f32 %v3846, %v3847
        %v3849 = vrot.slane %v3848, 2
        %v3850 = vadd.f32 %v3848, %v3849
        %v3851 = vrot.slane %v3850, 1
        %v3852 = vadd.f32 %v3850, %v3851
        %v3853 = vsel %vm1794, %v3841, 0.0
        %v3854 = vrot.slane %v3853, 4
        %v3855 = vadd.f32 %v3853, %v3854
        %v3856 = vrot.slane %v3855, 2
        %v3857 = vadd.f32 %v3855, %v3856
        %v3858 = vrot.slane %v3857, 1
        %v3859 = vadd.f32 %v3857, %v3858
        %v3862 = vrot.slane %v3839, 4
        %v3863 = vrot.slane %v3841, 4
        %v3866 = vsel %vm1794, %v3862, 0.0
        %v3867 = vrot.slane %v3866, 4
        %v3868 = vadd.f32 %v3866, %v3867
        %v3869 = vrot.slane %v3868, 2
        %v3870 = vadd.f32 %v3868, %v3869
        %v3871 = vrot.slane %v3870, 1
        %v3872 = vadd.f32 %v3870, %v3871
        %v3873 = vsel %vm1794, %v3863, 0.0
        %v3874 = vrot.slane %v3873, 4
        %v3875 = vadd.f32 %v3873, %v3874
        %v3876 = vrot.slane %v3875, 2
        %v3877 = vadd.f32 %v3875, %v3876
        %v3878 = vrot.slane %v3877, 1
        %v3879 = vadd.f32 %v3877, %v3878
        %v3880 = vsel %vm1794, %v3843, 0.0
        %v3881 = vrot.slane %v3880, 4
        %v3882 = vadd.f32 %v3880, %v3881
        %v3883 = vrot.slane %v3882, 2
        %v3884 = vadd.f32 %v3882, %v3883
        %v3885 = vrot.slane %v3884, 1
        %v3886 = vadd.f32 %v3884, %v3885
        %v3887 = vsel %vm1794, %v3845, 0.0
        %v3888 = vrot.slane %v3887, 4
        %v3889 = vadd.f32 %v3887, %v3888
        %v3890 = vrot.slane %v3889, 2
        %v3891 = vadd.f32 %v3889, %v3890
        %v3892 = vrot.slane %v3891, 1
        %v3893 = vadd.f32 %v3891, %v3892
        %v3896 = vrot.slane %v3843, 4
        %v3897 = vrot.slane %v3845, 4
        %v3900 = vsel %vm1794, %v3896, 0.0
        %v3901 = vrot.slane %v3900, 4
        %v3902 = vadd.f32 %v3900, %v3901
        %v3903 = vrot.slane %v3902, 2
        %v3904 = vadd.f32 %v3902, %v3903
        %v3905 = vrot.slane %v3904, 1
        %v3906 = vadd.f32 %v3904, %v3905
        %v3907 = vsel %vm1794, %v3897, 0.0
        %v3908 = vrot.slane %v3907, 4
        %v3909 = vadd.f32 %v3907, %v3908
        %v3910 = vrot.slane %v3909, 2
        %v3911 = vadd.f32 %v3909, %v3910
        %v3912 = vrot.slane %v3911, 1
        %v3913 = vadd.f32 %v3911, %v3912
        %v3914 = vsel %vm1794, %v3852, %v3872
        %v3915 = vsel %vm1794, %v3859, %v3879
        %v3916 = vsel %vm1794, %v3886, %v3906
        %v3917 = vsel %vm1794, %v3893, %v3913
        %v3918 = vrcp.pop %v3914
        %v3919 = vrcp.pop %v3915
        %v3920 = vrcp.pop %v3916
        %v3921 = vrcp.pop %v3917
        %v3922 = vmul.f32 %v3839, %v3918
        %v3923 = vmul.f32 %v3841, %v3919
        %v3924 = vmul.f32 %v3843, %v3920
        %v3925 = vmul.f32 %v3845, %v3921
        %v3926 = vlaneseq
        %v3927 = vshrl.u32 %v3926, 7
        %v3928 = vsub.s32 0, %v3927
        %v3929 = vrot.slane %v3922, %v3928
        %v3930 = vlaneseq
        %v3931 = vshrl.u32 %v3930, 7
        %v3932 = vsub.s32 0, %v3931
        %v3933 = vrot.slane %v3923, %v3932
        %v3934 = vmul.f32 %v3929, %v1750
        %v3935 = vmul.f32 %v3933, %v1751
        %v3936 = vlaneseq
        %v3937 = vshrl.u32 %v3936, 7
        %v3938 = vsub.s32 4, %v3937
        %v3939 = vrot.slane %v3922, %v3938
        %v3940 = vlaneseq
        %v3941 = vshrl.u32 %v3940, 7
        %v3942 = vsub.s32 4, %v3941
        %v3943 = vrot.slane %v3923, %v3942
        %v3944 = vmul.f32 %v3939, %v1758
        %v3945 = vmul.f32 %v3943, %v1759
        %v3946 = vadd.f32 %v3934, %v3944
        %v3947 = vadd.f32 %v3935, %v3945
        %v3948 = vlaneseq
        %v3949 = vshrl.u32 %v3948, 7
        %v3950 = vsub.s32 0, %v3949
        %v3951 = vrot.slane %v3924, %v3950
        %v3952 = vlaneseq
        %v3953 = vshrl.u32 %v3952, 7
        %v3954 = vsub.s32 0, %v3953
        %v3955 = vrot.slane %v3925, %v3954
        %v3956 = vmul.f32 %v3951, %v1766
        %v3957 = vmul.f32 %v3955, %v1767
        %v3958 = vadd.f32 %v3946, %v3956
        %v3959 = vadd.f32 %v3947, %v3957
        %v3960 = vlaneseq
        %v3961 = vshrl.u32 %v3960, 7
        %v3962 = vsub.s32 4, %v3961
        %v3963 = vrot.slane %v3924, %v3962
        %v3964 = vlaneseq
        %v3965 = vshrl.u32 %v3964, 7
        %v3966 = vsub.s32 4, %v3965
        %v3967 = vrot.slane %v3925, %v3966
        %v3968 = vmul.f32 %v3963, %v1774
        %v3969 = vmul.f32 %v3967, %v1775
        %v3970 = vadd.f32 %v3958, %v3968
        %v3971 = vadd.f32 %v3959, %v3969
        %v3972 = vmul.f32 %v3970, %v3970
        %v3973 = vmul.f32 %v3971, %v3971
        %v3974 = vrot.slane %v3972, 4
        %v3975 = vadd.f32 %v3972, %v3974
        %v3976 = vrot.slane %v3975, 2
        %v3977 = vadd.f32 %v3975, %v3976
        %v3978 = vrot.slane %v3977, 1
        %v3979 = vadd.f32 %v3977, %v3978
        %v3980 = vrot.slane %v3973, 4
        %v3981 = vadd.f32 %v3973, %v3980
        %v3982 = vrot.slane %v3981, 2
        %v3983 = vadd.f32 %v3981, %v3982
        %v3984 = vrot.slane %v3983, 1
        %v3985 = vadd.f32 %v3983, %v3984
        %v3986 = vadd.f32 %v3979, 1e-16
        %v3987 = vadd.f32 %v3985, 1e-16
        %v3988 = vrsqrt.pop %v3986
        %v3989 = vrsqrt.pop %v3987
        %v3990 = vmul.f32 %v3979, %v3988
        %v3991 = vmul.f32 %v3985, %v3989
        %v3992 = vadd.f32 %v3979, 1.0
        %v3993 = vadd.f32 %v3985, 1.0
        %v3994 = vrcp.pop %v3992
        %v3995 = vrcp.pop %v3993
        %v3996 = vmul.f32 %v3990, %v3994
        %v3997 = vmul.f32 %v3991, %v3995
        %v3998 = vmul.f32 %v3970, %v3996
        %v3999 = vmul.f32 %v3971, %v3997
        %v4000 = vlaneseq
        %v4001 = vshrl.u32 %v4000, 7
        %v4002 = vsub.s32 1, %v4001
        %v4003 = vrot.slane %v3922, %v4002
        %v4004 = vlaneseq
        %v4005 = vshrl.u32 %v4004, 7
        %v4006 = vsub.s32 1, %v4005
        %v4007 = vrot.slane %v3923, %v4006
        %v4008 = vmul.f32 %v4003, %v1752
        %v4009 = vmul.f32 %v4007, %v1753
        %v4010 = vlaneseq
        %v4011 = vshrl.u32 %v4010, 7
        %v4012 = vsub.s32 5, %v4011
        %v4013 = vrot.slane %v3922, %v4012
        %v4014 = vlaneseq
        %v4015 = vshrl.u32 %v4014, 7
        %v4016 = vsub.s32 5, %v4015
        %v4017 = vrot.slane %v3923, %v4016
        %v4018 = vmul.f32 %v4013, %v1760
        %v4019 = vmul.f32 %v4017, %v1761
        %v4020 = vadd.f32 %v4008, %v4018
        %v4021 = vadd.f32 %v4009, %v4019
        %v4022 = vlaneseq
        %v4023 = vshrl.u32 %v4022, 7
        %v4024 = vsub.s32 1, %v4023
        %v4025 = vrot.slane %v3924, %v4024
        %v4026 = vlaneseq
        %v4027 = vshrl.u32 %v4026, 7
        %v4028 = vsub.s32 1, %v4027
        %v4029 = vrot.slane %v3925, %v4028
        %v4030 = vmul.f32 %v4025, %v1768
        %v4031 = vmul.f32 %v4029, %v1769
        %v4032 = vadd.f32 %v4020, %v4030
        %v4033 = vadd.f32 %v4021, %v4031
        %v4034 = vlaneseq
        %v4035 = vshrl.u32 %v4034, 7
        %v4036 = vsub.s32 5, %v4035
        %v4037 = vrot.slane %v3924, %v4036
        %v4038 = vlaneseq
        %v4039 = vshrl.u32 %v4038, 7
        %v4040 = vsub.s32 5, %v4039
        %v4041 = vrot.slane %v3925, %v4040
        %v4042 = vmul.f32 %v4037, %v1776
        %v4043 = vmul.f32 %v4041, %v1777
        %v4044 = vadd.f32 %v4032, %v4042
        %v4045 = vadd.f32 %v4033, %v4043
        %v4046 = vmul.f32 %v4044, %v4044
        %v4047 = vmul.f32 %v4045, %v4045
        %v4048 = vrot.slane %v4046, 4
        %v4049 = vadd.f32 %v4046, %v4048
        %v4050 = vrot.slane %v4049, 2
        %v4051 = vadd.f32 %v4049, %v4050
        %v4052 = vrot.slane %v4051, 1
        %v4053 = vadd.f32 %v4051, %v4052
        %v4054 = vrot.slane %v4047, 4
        %v4055 = vadd.f32 %v4047, %v4054
        %v4056 = vrot.slane %v4055, 2
        %v4057 = vadd.f32 %v4055, %v4056
        %v4058 = vrot.slane %v4057, 1
        %v4059 = vadd.f32 %v4057, %v4058
        %v4060 = vadd.f32 %v4053, 1e-16
        %v4061 = vadd.f32 %v4059, 1e-16
        %v4062 = vrsqrt.pop %v4060
        %v4063 = vrsqrt.pop %v4061
        %v4064 = vmul.f32 %v4053, %v4062
        %v4065 = vmul.f32 %v4059, %v4063
        %v4066 = vadd.f32 %v4053, 1.0
        %v4067 = vadd.f32 %v4059, 1.0
        %v4068 = vrcp.pop %v4066
        %v4069 = vrcp.pop %v4067
        %v4070 = vmul.f32 %v4064, %v4068
        %v4071 = vmul.f32 %v4065, %v4069
        %v4072 = vmul.f32 %v4044, %v4070
        %v4073 = vmul.f32 %v4045, %v4071
        %v4074 = vlaneseq
        %v4075 = vshrl.u32 %v4074, 7
        %v4076 = vsub.s32 2, %v4075
        %v4077 = vrot.slane %v3922, %v4076
        %v4078 = vlaneseq
        %v4079 = vshrl.u32 %v4078, 7
        %v4080 = vsub.s32 2, %v4079
        %v4081 = vrot.slane %v3923, %v4080
        %v4082 = vmul.f32 %v4077, %v1754
        %v4083 = vmul.f32 %v4081, %v1755
        %v4084 = vlaneseq
        %v4085 = vshrl.u32 %v4084, 7
        %v4086 = vsub.s32 6, %v4085
        %v4087 = vrot.slane %v3922, %v4086
        %v4088 = vlaneseq
        %v4089 = vshrl.u32 %v4088, 7
        %v4090 = vsub.s32 6, %v4089
        %v4091 = vrot.slane %v3923, %v4090
        %v4092 = vmul.f32 %v4087, %v1762
        %v4093 = vmul.f32 %v4091, %v1763
        %v4094 = vadd.f32 %v4082, %v4092
        %v4095 = vadd.f32 %v4083, %v4093
        %v4096 = vlaneseq
        %v4097 = vshrl.u32 %v4096, 7
        %v4098 = vsub.s32 2, %v4097
        %v4099 = vrot.slane %v3924, %v4098
        %v4100 = vlaneseq
        %v4101 = vshrl.u32 %v4100, 7
        %v4102 = vsub.s32 2, %v4101
        %v4103 = vrot.slane %v3925, %v4102
        %v4104 = vmul.f32 %v4099, %v1770
        %v4105 = vmul.f32 %v4103, %v1771
        %v4106 = vadd.f32 %v4094, %v4104
        %v4107 = vadd.f32 %v4095, %v4105
        %v4108 = vlaneseq
        %v4109 = vshrl.u32 %v4108, 7
        %v4110 = vsub.s32 6, %v4109
        %v4111 = vrot.slane %v3924, %v4110
        %v4112 = vlaneseq
        %v4113 = vshrl.u32 %v4112, 7
        %v4114 = vsub.s32 6, %v4113
        %v4115 = vrot.slane %v3925, %v4114
        %v4116 = vmul.f32 %v4111, %v1778
        %v4117 = vmul.f32 %v4115, %v1779
        %v4118 = vadd.f32 %v4106, %v4116
        %v4119 = vadd.f32 %v4107, %v4117
        %v4120 = vmul.f32 %v4118, %v4118
        %v4121 = vmul.f32 %v4119, %v4119
        %v4122 = vrot.slane %v4120, 4
        %v4123 = vadd.f32 %v4120, %v4122
        %v4124 = vrot.slane %v4123, 2
        %v4125 = vadd.f32 %v4123, %v4124
        %v4126 = vrot.slane %v4125, 1
        %v4127 = vadd.f32 %v4125, %v4126
        %v4128 = vrot.slane %v4121, 4
        %v4129 = vadd.f32 %v4121, %v4128
        %v4130 = vrot.slane %v4129, 2
        %v4131 = vadd.f32 %v4129, %v4130
        %v4132 = vrot.slane %v4131, 1
        %v4133 = vadd.f32 %v4131, %v4132
        %v4134 = vadd.f32 %v4127, 1e-16
        %v4135 = vadd.f32 %v4133, 1e-16
        %v4136 = vrsqrt.pop %v4134
        %v4137 = vrsqrt.pop %v4135
        %v4138 = vmul.f32 %v4127, %v4136
        %v4139 = vmul.f32 %v4133, %v4137
        %v4140 = vadd.f32 %v4127, 1.0
        %v4141 = vadd.f32 %v4133, 1.0
        %v4142 = vrcp.pop %v4140
        %v4143 = vrcp.pop %v4141
        %v4144 = vmul.f32 %v4138, %v4142
        %v4145 = vmul.f32 %v4139, %v4143
        %v4146 = vmul.f32 %v4118, %v4144
        %v4147 = vmul.f32 %v4119, %v4145
        %v4148 = vlaneseq
        %v4149 = vshrl.u32 %v4148, 7
        %v4150 = vsub.s32 3, %v4149
        %v4151 = vrot.slane %v3922, %v4150
        %v4152 = vlaneseq
        %v4153 = vshrl.u32 %v4152, 7
        %v4154 = vsub.s32 3, %v4153
        %v4155 = vrot.slane %v3923, %v4154
        %v4156 = vmul.f32 %v4151, %v1756
        %v4157 = vmul.f32 %v4155, %v1757
        %v4158 = vlaneseq
        %v4159 = vshrl.u32 %v4158, 7
        %v4160 = vsub.s32 7, %v4159
        %v4161 = vrot.slane %v3922, %v4160
        %v4162 = vlaneseq
        %v4163 = vshrl.u32 %v4162, 7
        %v4164 = vsub.s32 7, %v4163
        %v4165 = vrot.slane %v3923, %v4164
        %v4166 = vmul.f32 %v4161, %v1764
        %v4167 = vmul.f32 %v4165, %v1765
        %v4168 = vadd.f32 %v4156, %v4166
        %v4169 = vadd.f32 %v4157, %v4167
        %v4170 = vlaneseq
        %v4171 = vshrl.u32 %v4170, 7
        %v4172 = vsub.s32 3, %v4171
        %v4173 = vrot.slane %v3924, %v4172
        %v4174 = vlaneseq
        %v4175 = vshrl.u32 %v4174, 7
        %v4176 = vsub.s32 3, %v4175
        %v4177 = vrot.slane %v3925, %v4176
        %v4178 = vmul.f32 %v4173, %v1772
        %v4179 = vmul.f32 %v4177, %v1773
        %v4180 = vadd.f32 %v4168, %v4178
        %v4181 = vadd.f32 %v4169, %v4179
        %v4182 = vlaneseq
        %v4183 = vshrl.u32 %v4182, 7
        %v4184 = vsub.s32 7, %v4183
        %v4185 = vrot.slane %v3924, %v4184
        %v4186 = vlaneseq
        %v4187 = vshrl.u32 %v4186, 7
        %v4188 = vsub.s32 7, %v4187
        %v4189 = vrot.slane %v3925, %v4188
        %v4190 = vmul.f32 %v4185, %v1780
        %v4191 = vmul.f32 %v4189, %v1781
        %v4192 = vadd.f32 %v4180, %v4190
        %v4193 = vadd.f32 %v4181, %v4191
        %v4194 = vmul.f32 %v4192, %v4192
        %v4195 = vmul.f32 %v4193, %v4193
        %v4196 = vrot.slane %v4194, 4
        %v4197 = vadd.f32 %v4194, %v4196
        %v4198 = vrot.slane %v4197, 2
        %v4199 = vadd.f32 %v4197, %v4198
        %v4200 = vrot.slane %v4199, 1
        %v4201 = vadd.f32 %v4199, %v4200
        %v4202 = vrot.slane %v4195, 4
        %v4203 = vadd.f32 %v4195, %v4202
        %v4204 = vrot.slane %v4203, 2
        %v4205 = vadd.f32 %v4203, %v4204
        %v4206 = vrot.slane %v4205, 1
        %v4207 = vadd.f32 %v4205, %v4206
        %v4208 = vadd.f32 %v4201, 1e-16
        %v4209 = vadd.f32 %v4207, 1e-16
        %v4210 = vrsqrt.pop %v4208
        %v4211 = vrsqrt.pop %v4209
        %v4212 = vmul.f32 %v4201, %v4210
        %v4213 = vmul.f32 %v4207, %v4211
        %v4214 = vadd.f32 %v4201, 1.0
        %v4215 = vadd.f32 %v4207, 1.0
        %v4216 = vrcp.pop %v4214
        %v4217 = vrcp.pop %v4215
        %v4218 = vmul.f32 %v4212, %v4216
        %v4219 = vmul.f32 %v4213, %v4217
        %v4220 = vmul.f32 %v4192, %v4218
        %v4221 = vmul.f32 %v4193, %v4219
        %4222 = vst [vmem:[%s282] sm:$0xff] %v3998
        %4223 = vst [vmem:[%s282 + $0x8] sm:$0xff] %v3999
        %4224 = vst [vmem:[%s282 + $0x10] sm:$0xff] %v4072
        %4225 = vst [vmem:[%s282 + $0x18] sm:$0xff] %v4073
        %4226 = vst [vmem:[%s282 + $0x20] sm:$0xff] %v4146
        %4227 = vst [vmem:[%s282 + $0x28] sm:$0xff] %v4147
        %4228 = vst [vmem:[%s282 + $0x30] sm:$0xff] %v4220
        %4229 = vst [vmem:[%s282 + $0x38] sm:$0xff] %v4221
        %s4230 = sand.u32 %s148, 1
        %s4231 = scalar_lea.sflag [#allocation4], %s4230
        %s4232 = sand.u32 %s148, 1
        %s4233 = smul.addr %s4232, 64
        %s4234 = scalar_lea.vmem [#allocation7], %s4233
        // Predicated region
        $region49: #{tpu_custom_call.1} parent=39 // pred_check
          %p4235 = pneg %p158
        $region50: #{tpu_custom_call.1} parent=39 // pred_check_branch
          %4237 = sbr.rel (%p4235) target = $region52
        $region51: #{tpu_custom_call.1} parent=39 // pred_region
          %s4238 = smul.u32 2, %s25
          %s4240 = ssub.s32 1024, 1024
          %4241 = vsyncadd %s4231, %s4240
          %s4242 = smul.addr %s4238, 128
          %s4243 = scalar_lea.hbm %s5, %s4242
          %s4244 = sshll.u32 %s4234, 4
          %s4245 = int_to_ptr.vmem [resolvable:$true] %s4244
          %4250 = dma.vmem_to_hbm [thread:$0]  %s4245, 1024, %s4243, %s4231, 256, 1024, 16
        $region52: #{tpu_custom_call.1} parent=39 // pred_fallthru
          _
      $region40: #{tpu_custom_call.1} parent=5 // pred_fallthru
        _
      %p4251 = scmp.le.s32.totalorder 2, %s20
      // Predicated region
      $region53: #{tpu_custom_call.1} parent=5 // pred_check
        %p4252 = pneg %p4251
      $region54: #{tpu_custom_call.1} parent=5 // pred_check_branch
        %4254 = sbr.rel (%p4252) target = $region56
      $region55: #{tpu_custom_call.1} parent=5 // pred_region
        %s4255 = ssub.s32 %s20, 2
        // Predicated region
        $region57: #{tpu_custom_call.1} parent=55 // pred_check
          %p4256 = pneg %p164
        $region58: #{tpu_custom_call.1} parent=55 // pred_check_branch
          %4258 = sbr.rel (%p4256) target = $region60
        $region59: #{tpu_custom_call.1} parent=55 // pred_region
          %s4259 = sand.u32 %s149, 1
          %s4260 = scalar_lea.sflag [#allocation4], %s4259
          %s4261 = sand.u32 %s149, 1
          %s4262 = smul.addr %s4261, 64
          %s4263 = scalar_lea.vmem [#allocation7], %s4262
          %4264 = dma.done %s4260, 1024
        $region60: #{tpu_custom_call.1} parent=55 // pred_fallthru
          _
      $region56: #{tpu_custom_call.1} parent=5 // pred_fallthru
        _
    $region6: #{tpu_custom_call.1} parent=1 // loop_footer
      %s24 = sadd.s32 1, %s20
    $region7: #{tpu_custom_call.1} parent=1 // loop_footer_branch
      %19 = sbr.rel target = $region3
    $region8: #{tpu_custom_call.1} parent=1 // loop_exit
      _
    %4265 = vsyncpa [#allocation3], 1
    %s4266 = scalar_lea.sflag [#allocation3], 1
    %4267 = vsyncpa %s4266, 1
    %4268 = vsyncpa [#allocation6], 1
    %s4269 = scalar_lea.sflag [#allocation6], 1
    %4270 = vsyncpa %s4269, 1
    %4271 = vsyncpa [#allocation4], 1
    %s4272 = scalar_lea.sflag [#allocation4], 1
    %4273 = vsyncpa %s4272, 1

</llo_original>
